<compile_context>
chip_gen: v7x
topology: tpu7x:2x2x1
jax: 0.10.0
libtpu: 0.0.40
codegen_flags: <defaults>
</compile_context>

<pallas_src>
import functools
import math

import jax
import jax.numpy as jnp
from jax.experimental import pallas as pl
from jax.experimental.pallas import tpu as pltpu

# ---- small (lane-dense) BERT-like config ----
VOCAB = 128
HIDDEN = 128                      # multiple of 128 -> lane-dense activations
NUM_LAYERS = 2
NUM_HEADS = 2
HEAD_DIM = HIDDEN // NUM_HEADS    # 64
INTERMEDIATE = 256                # multiple of 128
MAX_POS = 64
LN_EPS = 1e-12


# ----------------------------- kernel helpers --------------------------------

def _gelu(x):
    c = math.sqrt(2.0 / math.pi)
    return 0.5 * x * (1.0 + jnp.tanh(c * (x + 0.044715 * x * x * x)))


def _layernorm(x, g, b):
    mu = jnp.mean(x, axis=-1, keepdims=True)
    var = jnp.mean(jnp.square(x - mu), axis=-1, keepdims=True)
    return (x - mu) * jax.lax.rsqrt(var + LN_EPS) * g + b


def _bf16(x):
    return x.astype(jnp.bfloat16)


# ----------------------------- kernels ----------------------------------------

def _embed_gather_ln_kernel(ids_ref, we_ref, pe_ref, te_ref, g_ref, b_ref,
                            o_ref, *, bt, s):
    """Token gather (one-hot MXU matmul) + pos + type embeddings + LayerNorm."""
    ids = ids_ref[...]                                            # (Bt*S, 1) i32
    iota = jax.lax.broadcasted_iota(jnp.int32, (bt * s, VOCAB), 1)
    onehot = (iota == ids).astype(jnp.float32)                    # exact gather
    x = jnp.dot(onehot, we_ref[...], preferred_element_type=jnp.float32)
    pos = jnp.concatenate([pe_ref[...]] * bt, axis=0)             # (Bt*S, H)
    x = x + pos + te_ref[...]
    o_ref[...] = _layernorm(x, g_ref[...], b_ref[...]).astype(o_ref.dtype)


def _fused_encoder_kernel(h_in_ref, bias_ref,
                          wqkv_ref, bqkv_ref, wo_ref, bo_ref,
                          ln1_g_ref, ln1_b_ref,
                          wi_ref, bi_ref, wo2_ref, bo2_ref,
                          ln2_g_ref, ln2_b_ref,
                          pool_w_ref, pool_b_ref,
                          seq_ref, pooled_ref,
                          h_sc, *, bt, s):
    """All transformer layers for one batch tile (Bt sequences of S rows).

    grid = (batch_tiles, L); L is innermost.  h is carried across L in a VMEM
    f32 scratch; outputs (seq + pooled CLS) are written only at l == L-1.
    """
    l = pl.program_id(1)
    num_l = pl.num_programs(1)

    @pl.when(l == 0)
    def _():
        h_sc[...] = h_in_ref[...].astype(jnp.float32)

    h = h_sc[...]                                                 # (Bt*S, H) f32

    # ---- fused QKV projection (scale already folded into Q columns) ----
    qkv = jnp.dot(_bf16(h), wqkv_ref[...],
                  preferred_element_type=jnp.float32) + bqkv_ref[...]  # (Bt*S, 3H)

    # ---- per-sequence, per-head attention; heads lane-concatenated ----
    ctx_rows = []
    for b in range(bt):
        r0 = b * s
        bias_b = bias_ref[b:b + 1, :]                             # (1, S)
        head_ctx = []
        for head in range(NUM_HEADS):
            lo = head * HEAD_DIM
            q = qkv[r0:r0 + s, lo:lo + HEAD_DIM]                           # (S, Dh)
            k = qkv[r0:r0 + s, HIDDEN + lo:HIDDEN + lo + HEAD_DIM]         # (S, Dh)
            v = qkv[r0:r0 + s, 2 * HIDDEN + lo:2 * HIDDEN + lo + HEAD_DIM]  # (S, Dh)

            sc = jax.lax.dot_general(
                _bf16(q), _bf16(k), (((1,), (1,)), ((), ())),
                preferred_element_type=jnp.float32) + bias_b               # (S, S)
            sc = sc - jnp.max(sc, axis=-1, keepdims=True)
            p = jnp.exp(sc)
            p = p * pl.reciprocal(jnp.sum(p, axis=-1, keepdims=True), approx=True)
            head_ctx.append(jnp.dot(_bf16(p), _bf16(v),
                                    preferred_element_type=jnp.float32))    # (S, Dh)
        ctx_rows.append(jnp.concatenate(head_ctx, axis=1))        # (S, H)
    ctx = jnp.concatenate(ctx_rows, axis=0)                       # (Bt*S, H)

    # ---- single full-K output projection ----
    attn_out = jnp.dot(_bf16(ctx), wo_ref[...],
                       preferred_element_type=jnp.float32) + bo_ref[...]

    # ---- residual + LayerNorm 1 ----
    h1 = _layernorm(h + attn_out, ln1_g_ref[...], ln1_b_ref[...])

    # ---- FFN + residual + LayerNorm 2 ----
    ffn = jnp.dot(_bf16(h1), wi_ref[...],
                  preferred_element_type=jnp.float32) + bi_ref[...]
    ffn = _gelu(ffn)
    ffn = jnp.dot(_bf16(ffn), wo2_ref[...],
                  preferred_element_type=jnp.float32) + bo2_ref[...]
    h2 = _layernorm(h1 + ffn, ln2_g_ref[...], ln2_b_ref[...])

    h_sc[...] = h2

    @pl.when(l == num_l - 1)
    def _():
        seq_ref[...] = h2.astype(seq_ref.dtype)
        # fused tanh pooler on the CLS rows of this batch tile
        cls = jnp.concatenate([h2[b * s:b * s + 1, :] for b in range(bt)], axis=0)
        pooled = jnp.dot(_bf16(cls), pool_w_ref[...],
                         preferred_element_type=jnp.float32) + pool_b_ref[...]
        pooled_ref[...] = jnp.tanh(pooled)


# --------------------------- pallas_call wrappers -----------------------------

def _batch_tile(B, S):
    """Sequences per grid step: aim for ~128 rows fed to the MXU."""
    bt = max(1, min(B, max(1, 128 // S)))
    while B % bt:
        bt -= 1
    return bt


def embed_layernorm(ids_flat, word_emb, pos_emb, type_vec, g, b, B, S, Bt):
    n_tiles = B // Bt
    const = lambda i: (0, 0)
    kernel = functools.partial(_embed_gather_ln_kernel, bt=Bt, s=S)
    return pl.pallas_call(
        kernel,
        out_shape=jax.ShapeDtypeStruct((B * S, HIDDEN), jnp.bfloat16),
        grid=(n_tiles,),
        in_specs=[pl.BlockSpec((Bt * S, 1), lambda i: (i, 0)),      # token ids
                  pl.BlockSpec((VOCAB, HIDDEN), const),             # word emb
                  pl.BlockSpec((S, HIDDEN), const),                 # pos emb
                  pl.BlockSpec((1, HIDDEN), const),                 # type emb
                  pl.BlockSpec((1, HIDDEN), const),                 # ln gamma
                  pl.BlockSpec((1, HIDDEN), const)],                # ln beta
        out_specs=pl.BlockSpec((Bt * S, HIDDEN), lambda i: (i, 0)),
        compiler_params=pltpu.CompilerParams(dimension_semantics=("parallel",)),
    )(ids_flat, word_emb, pos_emb, type_vec, g, b)


def encoder_stack(h, bias, enc, pool_w, pool_b, B, S, Bt):
    n_tiles = B // Bt
    L = enc["wqkv"].shape[0]
    kernel = functools.partial(_fused_encoder_kernel, bt=Bt, s=S)

    tile = lambda i, l: (i, 0)
    const = lambda i, l: (0, 0)
    w3 = lambda shp: pl.BlockSpec((None,) + shp, lambda i, l: (l, 0, 0))

    seq, pooled = pl.pallas_call(
        kernel,
        out_shape=(jax.ShapeDtypeStruct((B * S, HIDDEN), jnp.float32),
                   jax.ShapeDtypeStruct((B, HIDDEN), jnp.float32)),
        grid=(n_tiles, L),
        in_specs=[
            pl.BlockSpec((Bt * S, HIDDEN), tile),                   # h (bf16)
            pl.BlockSpec((Bt, S), tile),                            # mask bias
            w3((HIDDEN, 3 * HIDDEN)),                               # wqkv (bf16)
            w3((1, 3 * HIDDEN)),                                    # bqkv
            w3((HIDDEN, HIDDEN)),                                   # wo (bf16)
            w3((1, HIDDEN)),                                        # bo
            w3((1, HIDDEN)),                                        # ln1_g
            w3((1, HIDDEN)),                                        # ln1_b
            w3((HIDDEN, INTERMEDIATE)),                             # wi (bf16)
            w3((1, INTERMEDIATE)),                                  # bi
            w3((INTERMEDIATE, HIDDEN)),                             # wo2 (bf16)
            w3((1, HIDDEN)),                                        # bo2
            w3((1, HIDDEN)),                                        # ln2_g
            w3((1, HIDDEN)),                                        # ln2_b
            pl.BlockSpec((HIDDEN, HIDDEN), const),                  # pool_w (bf16)
            pl.BlockSpec((1, HIDDEN), const),                       # pool_b
        ],
        out_specs=(pl.BlockSpec((Bt * S, HIDDEN), tile),
                   pl.BlockSpec((Bt, HIDDEN), tile)),
        scratch_shapes=[pltpu.VMEM((Bt * S, HIDDEN), jnp.float32)],
        compiler_params=pltpu.CompilerParams(
            dimension_semantics=("parallel", "arbitrary")),
    )(h, bias, enc["wqkv"], enc["bqkv"], enc["wo"], enc["bo"],
      enc["ln1_g"], enc["ln1_b"], enc["wi"], enc["bi"],
      enc["wo2"], enc["bo2"], enc["ln2_g"], enc["ln2_b"],
      pool_w, pool_b)
    return seq, pooled


# --------------------------- model glue ---------------------------------------

def bert_forward(params, input_ids, bert_mask):
    B, S = input_ids.shape
    Bt = _batch_tile(B, S)

    ids_flat = input_ids.reshape(B * S, 1).astype(jnp.int32)
    pos = params["pos_emb"][:S]                                   # (S, H)
    type_vec = params["type_emb"][0:1]                            # type id == 0
    h = embed_layernorm(ids_flat, params["word_emb"], pos, type_vec,
                        params["emb_ln_g"], params["emb_ln_b"], B, S, Bt)

    # additive attention mask bias, (B, S)
    bias = (1.0 - bert_mask.astype(jnp.float32)) * -10000.0

    seq_flat, pooled_out = encoder_stack(h, bias, params["enc"],
                                         params["pool_w"], params["pool_b"],
                                         B, S, Bt)
    seq = seq_flat.reshape(B, S, HIDDEN)
    seq_out = seq[:, 1:, :]                                       # drop [CLS]
    return seq_out, pooled_out


# --------------------------- parameter init -----------------------------------

def init_params(key):
    keys = iter(jax.random.split(key, 64))

    def dense(shape):
        return jax.random.normal(next(keys), shape, jnp.float32) * 0.02

    def stack(shape):
        return jnp.stack([dense(shape) for _ in range(NUM_LAYERS)])

    # fold the softmax 1/sqrt(HEAD_DIM) scale into the Q columns (exact in bf16)
    scale = 1.0 / math.sqrt(HEAD_DIM)
    wqkv = stack((HIDDEN, 3 * HIDDEN))
    wqkv = wqkv.at[:, :, :HIDDEN].multiply(scale)
    # (Q biases are zero here; non-zero Q biases would need the same scaling.)

    params = {
        "word_emb": dense((VOCAB, HIDDEN)),
        "pos_emb": dense((MAX_POS, HIDDEN)),
        "type_emb": dense((2, HIDDEN)),
        "emb_ln_g": jnp.ones((1, HIDDEN), jnp.float32),
        "emb_ln_b": jnp.zeros((1, HIDDEN), jnp.float32),
        "pool_w": dense((HIDDEN, HIDDEN)).astype(jnp.bfloat16),
        "pool_b": jnp.zeros((1, HIDDEN), jnp.float32),
        "enc": {
            "wqkv": wqkv.astype(jnp.bfloat16),
            "bqkv": jnp.zeros((NUM_LAYERS, 1, 3 * HIDDEN), jnp.float32),
            "wo": stack((HIDDEN, HIDDEN)).astype(jnp.bfloat16),
            "bo": jnp.zeros((NUM_LAYERS, 1, HIDDEN), jnp.float32),
            "ln1_g": jnp.ones((NUM_LAYERS, 1, HIDDEN), jnp.float32),
            "ln1_b": jnp.zeros((NUM_LAYERS, 1, HIDDEN), jnp.float32),
            "wi": stack((HIDDEN, INTERMEDIATE)).astype(jnp.bfloat16),
            "bi": jnp.zeros((NUM_LAYERS, 1, INTERMEDIATE), jnp.float32),
            "wo2": stack((INTERMEDIATE, HIDDEN)).astype(jnp.bfloat16),
            "bo2": jnp.zeros((NUM_LAYERS, 1, HIDDEN), jnp.float32),
            "ln2_g": jnp.ones((NUM_LAYERS, 1, HIDDEN), jnp.float32),
            "ln2_b": jnp.zeros((NUM_LAYERS, 1, HIDDEN), jnp.float32),
        },
    }
    return params


# ------------------------------- main ------------------------------------------

if __name__ == "__main__":
    B, S = 2, 8
    key = jax.random.PRNGKey(0)
    k_param, k_ids = jax.random.split(key)
    params = init_params(k_param)

    input_ids = jax.random.randint(k_ids, (B, S), 0, VOCAB, dtype=jnp.int32)
    bert_mask = jnp.ones((B, S), jnp.int32).at[1, 6:].set(0)  # pad last 2 of row 1

    fwd = jax.jit(bert_forward)
    seq_out, pooled_out = fwd(params, input_ids, bert_mask)
    jax.block_until_ready((seq_out, pooled_out))

    assert seq_out.shape == (B, S - 1, HIDDEN), seq_out.shape
    assert pooled_out.shape == (B, HIDDEN), pooled_out.shape
    assert jnp.all(jnp.isfinite(seq_out)) and jnp.all(jnp.isfinite(pooled_out))
    print("KERNEL_OK")
</pallas_src>

<mosaic_0001>
module attributes {stable_mosaic.version = 11 : i64} {
  func.func @_embed_gather_ln_kernel(%arg0: i32, %arg1: memref<16x1xi32, #tpu.memory_space<vmem>>, %arg2: memref<128x128xf32, #tpu.memory_space<vmem>>, %arg3: memref<8x128xf32, #tpu.memory_space<vmem>>, %arg4: memref<1x128xf32, #tpu.memory_space<vmem>>, %arg5: memref<1x128xf32, #tpu.memory_space<vmem>>, %arg6: memref<1x128xf32, #tpu.memory_space<vmem>>, %arg7: memref<16x128xbf16, #tpu.memory_space<vmem>>) attributes {dimension_semantics = [#tpu.dimension_semantics<parallel>], iteration_bounds = array<i64: 1>, scalar_prefetch = 0 : i64, scratch_operands = 0 : i64, tpu.core_type = #tpu.core_type<tc>, window_params = [{transform_indices = @transform_0, window_bounds = array<i64: 16, 1>}, {pipeline_mode = #tpu.pipeline_mode<synchronous>, transform_indices = @transform_1, window_bounds = array<i64: 128, 128>}, {pipeline_mode = #tpu.pipeline_mode<synchronous>, transform_indices = @transform_2, window_bounds = array<i64: 8, 128>}, {pipeline_mode = #tpu.pipeline_mode<synchronous>, transform_indices = @transform_3, window_bounds = array<i64: 1, 128>}, {pipeline_mode = #tpu.pipeline_mode<synchronous>, transform_indices = @transform_4, window_bounds = array<i64: 1, 128>}, {pipeline_mode = #tpu.pipeline_mode<synchronous>, transform_indices = @transform_5, window_bounds = array<i64: 1, 128>}, {transform_indices = @transform_6, window_bounds = array<i64: 16, 128>}]} {
    %c0 = arith.constant 0 : index
    %c0_0 = arith.constant 0 : index
    %0 = vector.load %arg1[%c0, %c0_0] : memref<16x1xi32, #tpu.memory_space<vmem>>, vector<16x1xi32>
    %1 = tpu.iota {dimensions = array<i32: 1>} : vector<16x128xi32>
    %2 = vector.broadcast %0 : vector<16x1xi32> to vector<16x128xi32>
    %3 = arith.cmpi eq, %1, %2 : vector<16x128xi32>
    %4 = arith.extui %3 : vector<16x128xi1> to vector<16x128xi32>
    %5 = arith.sitofp %4 : vector<16x128xi32> to vector<16x128xf32>
    %c0_1 = arith.constant 0 : index
    %c0_2 = arith.constant 0 : index
    %6 = vector.load %arg2[%c0_1, %c0_2] : memref<128x128xf32, #tpu.memory_space<vmem>>, vector<128x128xf32>
    %cst = arith.constant dense<0.000000e+00> : vector<16x128xf32>
    %7 = tpu.matmul %5, %6, %cst {dimension_numbers = #tpu.dot_dimension_numbers<[1], [0], [0], [1], [0, 0, 1, 1], [], []>} : vector<16x128xf32>, vector<128x128xf32>, vector<16x128xf32> -> vector<16x128xf32>
    %c0_3 = arith.constant 0 : index
    %c0_4 = arith.constant 0 : index
    %8 = vector.load %arg3[%c0_3, %c0_4] : memref<8x128xf32, #tpu.memory_space<vmem>>, vector<8x128xf32>
    %9 = tpu.concatenate %8, %8 in 0 : vector<8x128xf32>, vector<8x128xf32> -> vector<16x128xf32>
    %10 = arith.addf %7, %9 : vector<16x128xf32>
    %c0_5 = arith.constant 0 : index
    %c0_6 = arith.constant 0 : index
    %11 = vector.load %arg4[%c0_5, %c0_6] : memref<1x128xf32, #tpu.memory_space<vmem>>, vector<1x128xf32>
    %12 = vector.broadcast %11 : vector<1x128xf32> to vector<16x128xf32>
    %13 = arith.addf %10, %12 : vector<16x128xf32>
    %c0_7 = arith.constant 0 : index
    %c0_8 = arith.constant 0 : index
    %14 = vector.load %arg5[%c0_7, %c0_8] : memref<1x128xf32, #tpu.memory_space<vmem>>, vector<1x128xf32>
    %c0_9 = arith.constant 0 : index
    %c0_10 = arith.constant 0 : index
    %15 = vector.load %arg6[%c0_9, %c0_10] : memref<1x128xf32, #tpu.memory_space<vmem>>, vector<1x128xf32>
    %cst_11 = arith.constant dense<0.000000e+00> : vector<16xf32>
    %16 = vector.multi_reduction <add>, %13, %cst_11 [1] : vector<16x128xf32> to vector<16xf32>
    %17 = vector.shape_cast %16 : vector<16xf32> to vector<16x1xf32>
    %cst_12 = arith.constant 1.280000e+02 : f32
    %18 = vector.broadcast %cst_12 : f32 to vector<16x1xf32>
    %19 = arith.divf %17, %18 : vector<16x1xf32>
    %20 = vector.broadcast %19 : vector<16x1xf32> to vector<16x128xf32>
    %21 = arith.subf %13, %20 : vector<16x128xf32>
    %22 = arith.mulf %21, %21 : vector<16x128xf32>
    %cst_13 = arith.constant dense<0.000000e+00> : vector<16xf32>
    %23 = vector.multi_reduction <add>, %22, %cst_13 [1] : vector<16x128xf32> to vector<16xf32>
    %24 = vector.shape_cast %23 : vector<16xf32> to vector<16x1xf32>
    %cst_14 = arith.constant 1.280000e+02 : f32
    %25 = vector.broadcast %cst_14 : f32 to vector<16x1xf32>
    %26 = arith.divf %24, %25 : vector<16x1xf32>
    %27 = vector.broadcast %19 : vector<16x1xf32> to vector<16x128xf32>
    %28 = arith.subf %13, %27 : vector<16x128xf32>
    %cst_15 = arith.constant 9.99999996E-13 : f32
    %29 = vector.broadcast %cst_15 : f32 to vector<16x1xf32>
    %30 = arith.addf %26, %29 : vector<16x1xf32>
    %31 = math.rsqrt %30 : vector<16x1xf32>
    %32 = vector.broadcast %31 : vector<16x1xf32> to vector<16x128xf32>
    %33 = arith.mulf %28, %32 : vector<16x128xf32>
    %34 = vector.broadcast %14 : vector<1x128xf32> to vector<16x128xf32>
    %35 = arith.mulf %33, %34 : vector<16x128xf32>
    %36 = vector.broadcast %15 : vector<1x128xf32> to vector<16x128xf32>
    %37 = arith.addf %35, %36 : vector<16x128xf32>
    %38 = arith.truncf %37 : vector<16x128xf32> to vector<16x128xbf16>
    %c0_16 = arith.constant 0 : index
    %c0_17 = arith.constant 0 : index
    %39 = vector.load %arg7[%c0_16, %c0_17] : memref<16x128xbf16, #tpu.memory_space<vmem>>, vector<16x128xbf16>
    tpu.vector_store %arg7[%c0_16, %c0_17], %38 {strides = array<i32>} : memref<16x128xbf16, #tpu.memory_space<vmem>>, vector<16x128xbf16>,
    return
  }
  func.func @transform_0(%arg0: i32) -> (i32, i32) {
    %c0_i32 = arith.constant 0 : i32
    %c0_i32_0 = arith.constant 0 : i32
    return %arg0, %c0_i32 : i32, i32
  }
  func.func @transform_1(%arg0: i32) -> (i32, i32) {
    %c0_i32 = arith.constant 0 : i32
    %c0_i32_0 = arith.constant 0 : i32
    %c0_i32_1 = arith.constant 0 : i32
    return %c0_i32, %c0_i32_0 : i32, i32
  }
  func.func @transform_2(%arg0: i32) -> (i32, i32) {
    %c0_i32 = arith.constant 0 : i32
    %c0_i32_0 = arith.constant 0 : i32
    %c0_i32_1 = arith.constant 0 : i32
    return %c0_i32, %c0_i32_0 : i32, i32
  }
  func.func @transform_3(%arg0: i32) -> (i32, i32) {
    %c0_i32 = arith.constant 0 : i32
    %c0_i32_0 = arith.constant 0 : i32
    %c0_i32_1 = arith.constant 0 : i32
    return %c0_i32, %c0_i32_0 : i32, i32
  }
  func.func @transform_4(%arg0: i32) -> (i32, i32) {
    %c0_i32 = arith.constant 0 : i32
    %c0_i32_0 = arith.constant 0 : i32
    %c0_i32_1 = arith.constant 0 : i32
    return %c0_i32, %c0_i32_0 : i32, i32
  }
  func.func @transform_5(%arg0: i32) -> (i32, i32) {
    %c0_i32 = arith.constant 0 : i32
    %c0_i32_0 = arith.constant 0 : i32
    %c0_i32_1 = arith.constant 0 : i32
    return %c0_i32, %c0_i32_0 : i32, i32
  }
  func.func @transform_6(%arg0: i32) -> (i32, i32) {
    %c0_i32 = arith.constant 0 : i32
    %c0_i32_0 = arith.constant 0 : i32
    return %arg0, %c0_i32 : i32, i32
  }
}

module attributes {stable_mosaic.version = 11 : i64} {
  func.func @_fused_encoder_kernel(%arg0: i32, %arg1: i32, %arg2: memref<16x128xbf16, #tpu.memory_space<vmem>>, %arg3: memref<2x8xf32, #tpu.memory_space<vmem>>, %arg4: memref<1x128x384xbf16, #tpu.memory_space<vmem>>, %arg5: memref<1x1x384xf32, #tpu.memory_space<vmem>>, %arg6: memref<1x128x128xbf16, #tpu.memory_space<vmem>>, %arg7: memref<1x1x128xf32, #tpu.memory_space<vmem>>, %arg8: memref<1x1x128xf32, #tpu.memory_space<vmem>>, %arg9: memref<1x1x128xf32, #tpu.memory_space<vmem>>, %arg10: memref<1x128x256xbf16, #tpu.memory_space<vmem>>, %arg11: memref<1x1x256xf32, #tpu.memory_space<vmem>>, %arg12: memref<1x256x128xbf16, #tpu.memory_space<vmem>>, %arg13: memref<1x1x128xf32, #tpu.memory_space<vmem>>, %arg14: memref<1x1x128xf32, #tpu.memory_space<vmem>>, %arg15: memref<1x1x128xf32, #tpu.memory_space<vmem>>, %arg16: memref<128x128xbf16, #tpu.memory_space<vmem>>, %arg17: memref<1x128xf32, #tpu.memory_space<vmem>>, %arg18: memref<16x128xf32, #tpu.memory_space<vmem>>, %arg19: memref<2x128xf32, #tpu.memory_space<vmem>>, %arg20: memref<16x128xf32, #tpu.memory_space<vmem>>) attributes {dimension_semantics = [#tpu.dimension_semantics<parallel>, #tpu.dimension_semantics<arbitrary>], iteration_bounds = array<i64: 1, 2>, scalar_prefetch = 0 : i64, scratch_operands = 1 : i64, tpu.core_type = #tpu.core_type<tc>, window_params = [{transform_indices = @transform_0, window_bounds = array<i64: 16, 128>}, {transform_indices = @transform_1, window_bounds = array<i64: 2, 8>}, {transform_indices = @transform_2, window_bounds = array<i64: 1, 128, 384>}, {transform_indices = @transform_3, window_bounds = array<i64: 1, 1, 384>}, {transform_indices = @transform_4, window_bounds = array<i64: 1, 128, 128>}, {transform_indices = @transform_5, window_bounds = array<i64: 1, 1, 128>}, {transform_indices = @transform_6, window_bounds = array<i64: 1, 1, 128>}, {transform_indices = @transform_7, window_bounds = array<i64: 1, 1, 128>}, {transform_indices = @transform_8, window_bounds = array<i64: 1, 128, 256>}, {transform_indices = @transform_9, window_bounds = array<i64: 1, 1, 256>}, {transform_indices = @transform_10, window_bounds = array<i64: 1, 256, 128>}, {transform_indices = @transform_11, window_bounds = array<i64: 1, 1, 128>}, {transform_indices = @transform_12, window_bounds = array<i64: 1, 1, 128>}, {transform_indices = @transform_13, window_bounds = array<i64: 1, 1, 128>}, {pipeline_mode = #tpu.pipeline_mode<synchronous>, transform_indices = @transform_14, window_bounds = array<i64: 128, 128>}, {pipeline_mode = #tpu.pipeline_mode<synchronous>, transform_indices = @transform_15, window_bounds = array<i64: 1, 128>}, {transform_indices = @transform_16, window_bounds = array<i64: 16, 128>}, {transform_indices = @transform_17, window_bounds = array<i64: 2, 128>}]} {
    %c0_i32 = arith.constant 0 : i32
    %0 = arith.cmpi eq, %arg1, %c0_i32 : i32
    %1 = arith.extui %0 : i1 to i32
    %c0_i32_0 = arith.constant 0 : i32
    %2 = arith.cmpi ne, %1, %c0_i32_0 : i32
    scf.if %2 {
      %c0_77 = arith.constant 0 : index
      %c0_78 = arith.constant 0 : index
      %196 = vector.load %arg2[%c0_77, %c0_78] : memref<16x128xbf16, #tpu.memory_space<vmem>>, vector<16x128xbf16>
      %197 = arith.extf %196 : vector<16x128xbf16> to vector<16x128xf32>
      %c0_79 = arith.constant 0 : index
      %c0_80 = arith.constant 0 : index
      %198 = vector.load %arg20[%c0_79, %c0_80] : memref<16x128xf32, #tpu.memory_space<vmem>>, vector<16x128xf32>
      tpu.vector_store %arg20[%c0_79, %c0_80], %197 {strides = array<i32>} : memref<16x128xf32, #tpu.memory_space<vmem>>, vector<16x128xf32>,
    } else {
    }
    %c0 = arith.constant 0 : index
    %c0_1 = arith.constant 0 : index
    %3 = vector.load %arg20[%c0, %c0_1] : memref<16x128xf32, #tpu.memory_space<vmem>>, vector<16x128xf32>
    %4 = arith.truncf %3 : vector<16x128xf32> to vector<16x128xbf16>
    %c0_2 = arith.constant 0 : index
    %c0_3 = arith.constant 0 : index
    %c0_4 = arith.constant 0 : index
    %5 = vector.load %arg4[%c0_2, %c0_3, %c0_4] : memref<1x128x384xbf16, #tpu.memory_space<vmem>>, vector<1x128x384xbf16>
    %6 = vector.shape_cast %5 : vector<1x128x384xbf16> to vector<128x384xbf16>
    %cst = arith.constant dense<0.000000e+00> : vector<16x384xf32>
    %7 = tpu.matmul %4, %6, %cst {dimension_numbers = #tpu.dot_dimension_numbers<[1], [0], [0], [1], [0, 0, 1, 1], [], []>} : vector<16x128xbf16>, vector<128x384xbf16>, vector<16x384xf32> -> vector<16x384xf32>
    %c0_5 = arith.constant 0 : index
    %c0_6 = arith.constant 0 : index
    %c0_7 = arith.constant 0 : index
    %8 = vector.load %arg5[%c0_5, %c0_6, %c0_7] : memref<1x1x384xf32, #tpu.memory_space<vmem>>, vector<1x1x384xf32>
    %9 = vector.shape_cast %8 : vector<1x1x384xf32> to vector<1x384xf32>
    %10 = vector.broadcast %9 : vector<1x384xf32> to vector<16x384xf32>
    %11 = arith.addf %7, %10 : vector<16x384xf32>
    %c0_8 = arith.constant 0 : index
    %c0_9 = arith.constant 0 : index
    %12 = vector.load %arg3[%c0_8, %c0_9] : memref<2x8xf32, #tpu.memory_space<vmem>>, vector<1x8xf32>
    %13 = vector.extract_strided_slice %11 {offsets = [0, 0], sizes = [8, 64], strides = [1, 1]} : vector<16x384xf32> to vector<8x64xf32>
    %14 = vector.extract_strided_slice %11 {offsets = [0, 128], sizes = [8, 64], strides = [1, 1]} : vector<16x384xf32> to vector<8x64xf32>
    %15 = vector.extract_strided_slice %11 {offsets = [0, 256], sizes = [8, 64], strides = [1, 1]} : vector<16x384xf32> to vector<8x64xf32>
    %16 = arith.truncf %13 : vector<8x64xf32> to vector<8x64xbf16>
    %17 = arith.truncf %14 : vector<8x64xf32> to vector<8x64xbf16>
    %cst_10 = arith.constant dense<0.000000e+00> : vector<8x8xf32>
    %18 = tpu.matmul %16, %17, %cst_10 {dimension_numbers = #tpu.dot_dimension_numbers<[1], [1], [0], [0], [0, 0, 1, 0], [], []>} : vector<8x64xbf16>, vector<8x64xbf16>, vector<8x8xf32> -> vector<8x8xf32>
    %19 = vector.broadcast %12 : vector<1x8xf32> to vector<8x8xf32>
    %20 = arith.addf %18, %19 : vector<8x8xf32>
    %cst_11 = arith.constant dense<0xFF800000> : vector<8xf32>
    %21 = vector.multi_reduction <maximumf>, %20, %cst_11 [1] : vector<8x8xf32> to vector<8xf32>
    %22 = vector.shape_cast %21 : vector<8xf32> to vector<8x1xf32>
    %23 = vector.broadcast %22 : vector<8x1xf32> to vector<8x8xf32>
    %24 = arith.subf %20, %23 : vector<8x8xf32>
    %25 = math.exp %24 : vector<8x8xf32>
    %cst_12 = arith.constant dense<0.000000e+00> : vector<8xf32>
    %26 = vector.multi_reduction <add>, %25, %cst_12 [1] : vector<8x8xf32> to vector<8xf32>
    %27 = vector.shape_cast %26 : vector<8xf32> to vector<8x1xf32>
    %28 = tpu.reciprocal %27 {approx = true} : vector<8x1xf32> -> vector<8x1xf32>
    %29 = vector.broadcast %28 : vector<8x1xf32> to vector<8x8xf32>
    %30 = arith.mulf %25, %29 : vector<8x8xf32>
    %31 = arith.truncf %30 : vector<8x8xf32> to vector<8x8xbf16>
    %32 = arith.truncf %15 : vector<8x64xf32> to vector<8x64xbf16>
    %cst_13 = arith.constant dense<0.000000e+00> : vector<8x64xf32>
    %33 = tpu.matmul %31, %32, %cst_13 {dimension_numbers = #tpu.dot_dimension_numbers<[1], [0], [0], [1], [0, 0, 1, 1], [], []>} : vector<8x8xbf16>, vector<8x64xbf16>, vector<8x64xf32> -> vector<8x64xf32>
    %34 = vector.extract_strided_slice %11 {offsets = [0, 64], sizes = [8, 64], strides = [1, 1]} : vector<16x384xf32> to vector<8x64xf32>
    %35 = vector.extract_strided_slice %11 {offsets = [0, 192], sizes = [8, 64], strides = [1, 1]} : vector<16x384xf32> to vector<8x64xf32>
    %36 = vector.extract_strided_slice %11 {offsets = [0, 320], sizes = [8, 64], strides = [1, 1]} : vector<16x384xf32> to vector<8x64xf32>
    %37 = arith.truncf %34 : vector<8x64xf32> to vector<8x64xbf16>
    %38 = arith.truncf %35 : vector<8x64xf32> to vector<8x64xbf16>
    %cst_14 = arith.constant dense<0.000000e+00> : vector<8x8xf32>
    %39 = tpu.matmul %37, %38, %cst_14 {dimension_numbers = #tpu.dot_dimension_numbers<[1], [1], [0], [0], [0, 0, 1, 0], [], []>} : vector<8x64xbf16>, vector<8x64xbf16>, vector<8x8xf32> -> vector<8x8xf32>
    %40 = vector.broadcast %12 : vector<1x8xf32> to vector<8x8xf32>
    %41 = arith.addf %39, %40 : vector<8x8xf32>
    %cst_15 = arith.constant dense<0xFF800000> : vector<8xf32>
    %42 = vector.multi_reduction <maximumf>, %41, %cst_15 [1] : vector<8x8xf32> to vector<8xf32>
    %43 = vector.shape_cast %42 : vector<8xf32> to vector<8x1xf32>
    %44 = vector.broadcast %43 : vector<8x1xf32> to vector<8x8xf32>
    %45 = arith.subf %41, %44 : vector<8x8xf32>
    %46 = math.exp %45 : vector<8x8xf32>
    %cst_16 = arith.constant dense<0.000000e+00> : vector<8xf32>
    %47 = vector.multi_reduction <add>, %46, %cst_16 [1] : vector<8x8xf32> to vector<8xf32>
    %48 = vector.shape_cast %47 : vector<8xf32> to vector<8x1xf32>
    %49 = tpu.reciprocal %48 {approx = true} : vector<8x1xf32> -> vector<8x1xf32>
    %50 = vector.broadcast %49 : vector<8x1xf32> to vector<8x8xf32>
    %51 = arith.mulf %46, %50 : vector<8x8xf32>
    %52 = arith.truncf %51 : vector<8x8xf32> to vector<8x8xbf16>
    %53 = arith.truncf %36 : vector<8x64xf32> to vector<8x64xbf16>
    %cst_17 = arith.constant dense<0.000000e+00> : vector<8x64xf32>
    %54 = tpu.matmul %52, %53, %cst_17 {dimension_numbers = #tpu.dot_dimension_numbers<[1], [0], [0], [1], [0, 0, 1, 1], [], []>} : vector<8x8xbf16>, vector<8x64xbf16>, vector<8x64xf32> -> vector<8x64xf32>
    %55 = tpu.concatenate %33, %54 in 1 : vector<8x64xf32>, vector<8x64xf32> -> vector<8x128xf32>
    %c1 = arith.constant 1 : index
    %c0_18 = arith.constant 0 : index
    %56 = vector.load %arg3[%c1, %c0_18] : memref<2x8xf32, #tpu.memory_space<vmem>>, vector<1x8xf32>
    %57 = vector.extract_strided_slice %11 {offsets = [8, 0], sizes = [8, 64], strides = [1, 1]} : vector<16x384xf32> to vector<8x64xf32>
    %58 = vector.extract_strided_slice %11 {offsets = [8, 128], sizes = [8, 64], strides = [1, 1]} : vector<16x384xf32> to vector<8x64xf32>
    %59 = vector.extract_strided_slice %11 {offsets = [8, 256], sizes = [8, 64], strides = [1, 1]} : vector<16x384xf32> to vector<8x64xf32>
    %60 = arith.truncf %57 : vector<8x64xf32> to vector<8x64xbf16>
    %61 = arith.truncf %58 : vector<8x64xf32> to vector<8x64xbf16>
    %cst_19 = arith.constant dense<0.000000e+00> : vector<8x8xf32>
    %62 = tpu.matmul %60, %61, %cst_19 {dimension_numbers = #tpu.dot_dimension_numbers<[1], [1], [0], [0], [0, 0, 1, 0], [], []>} : vector<8x64xbf16>, vector<8x64xbf16>, vector<8x8xf32> -> vector<8x8xf32>
    %63 = vector.broadcast %56 : vector<1x8xf32> to vector<8x8xf32>
    %64 = arith.addf %62, %63 : vector<8x8xf32>
    %cst_20 = arith.constant dense<0xFF800000> : vector<8xf32>
    %65 = vector.multi_reduction <maximumf>, %64, %cst_20 [1] : vector<8x8xf32> to vector<8xf32>
    %66 = vector.shape_cast %65 : vector<8xf32> to vector<8x1xf32>
    %67 = vector.broadcast %66 : vector<8x1xf32> to vector<8x8xf32>
    %68 = arith.subf %64, %67 : vector<8x8xf32>
    %69 = math.exp %68 : vector<8x8xf32>
    %cst_21 = arith.constant dense<0.000000e+00> : vector<8xf32>
    %70 = vector.multi_reduction <add>, %69, %cst_21 [1] : vector<8x8xf32> to vector<8xf32>
    %71 = vector.shape_cast %70 : vector<8xf32> to vector<8x1xf32>
    %72 = tpu.reciprocal %71 {approx = true} : vector<8x1xf32> -> vector<8x1xf32>
    %73 = vector.broadcast %72 : vector<8x1xf32> to vector<8x8xf32>
    %74 = arith.mulf %69, %73 : vector<8x8xf32>
    %75 = arith.truncf %74 : vector<8x8xf32> to vector<8x8xbf16>
    %76 = arith.truncf %59 : vector<8x64xf32> to vector<8x64xbf16>
    %cst_22 = arith.constant dense<0.000000e+00> : vector<8x64xf32>
    %77 = tpu.matmul %75, %76, %cst_22 {dimension_numbers = #tpu.dot_dimension_numbers<[1], [0], [0], [1], [0, 0, 1, 1], [], []>} : vector<8x8xbf16>, vector<8x64xbf16>, vector<8x64xf32> -> vector<8x64xf32>
    %78 = vector.extract_strided_slice %11 {offsets = [8, 64], sizes = [8, 64], strides = [1, 1]} : vector<16x384xf32> to vector<8x64xf32>
    %79 = vector.extract_strided_slice %11 {offsets = [8, 192], sizes = [8, 64], strides = [1, 1]} : vector<16x384xf32> to vector<8x64xf32>
    %80 = vector.extract_strided_slice %11 {offsets = [8, 320], sizes = [8, 64], strides = [1, 1]} : vector<16x384xf32> to vector<8x64xf32>
    %81 = arith.truncf %78 : vector<8x64xf32> to vector<8x64xbf16>
    %82 = arith.truncf %79 : vector<8x64xf32> to vector<8x64xbf16>
    %cst_23 = arith.constant dense<0.000000e+00> : vector<8x8xf32>
    %83 = tpu.matmul %81, %82, %cst_23 {dimension_numbers = #tpu.dot_dimension_numbers<[1], [1], [0], [0], [0, 0, 1, 0], [], []>} : vector<8x64xbf16>, vector<8x64xbf16>, vector<8x8xf32> -> vector<8x8xf32>
    %84 = vector.broadcast %56 : vector<1x8xf32> to vector<8x8xf32>
    %85 = arith.addf %83, %84 : vector<8x8xf32>
    %cst_24 = arith.constant dense<0xFF800000> : vector<8xf32>
    %86 = vector.multi_reduction <maximumf>, %85, %cst_24 [1] : vector<8x8xf32> to vector<8xf32>
    %87 = vector.shape_cast %86 : vector<8xf32> to vector<8x1xf32>
    %88 = vector.broadcast %87 : vector<8x1xf32> to vector<8x8xf32>
    %89 = arith.subf %85, %88 : vector<8x8xf32>
    %90 = math.exp %89 : vector<8x8xf32>
    %cst_25 = arith.constant dense<0.000000e+00> : vector<8xf32>
    %91 = vector.multi_reduction <add>, %90, %cst_25 [1] : vector<8x8xf32> to vector<8xf32>
    %92 = vector.shape_cast %91 : vector<8xf32> to vector<8x1xf32>
    %93 = tpu.reciprocal %92 {approx = true} : vector<8x1xf32> -> vector<8x1xf32>
    %94 = vector.broadcast %93 : vector<8x1xf32> to vector<8x8xf32>
    %95 = arith.mulf %90, %94 : vector<8x8xf32>
    %96 = arith.truncf %95 : vector<8x8xf32> to vector<8x8xbf16>
    %97 = arith.truncf %80 : vector<8x64xf32> to vector<8x64xbf16>
    %cst_26 = arith.constant dense<0.000000e+00> : vector<8x64xf32>
    %98 = tpu.matmul %96, %97, %cst_26 {dimension_numbers = #tpu.dot_dimension_numbers<[1], [0], [0], [1], [0, 0, 1, 1], [], []>} : vector<8x8xbf16>, vector<8x64xbf16>, vector<8x64xf32> -> vector<8x64xf32>
    %99 = tpu.concatenate %77, %98 in 1 : vector<8x64xf32>, vector<8x64xf32> -> vector<8x128xf32>
    %100 = tpu.concatenate %55, %99 in 0 : vector<8x128xf32>, vector<8x128xf32> -> vector<16x128xf32>
    %101 = arith.truncf %100 : vector<16x128xf32> to vector<16x128xbf16>
    %c0_27 = arith.constant 0 : index
    %c0_28 = arith.constant 0 : index
    %c0_29 = arith.constant 0 : index
    %102 = vector.load %arg6[%c0_27, %c0_28, %c0_29] : memref<1x128x128xbf16, #tpu.memory_space<vmem>>, vector<1x128x128xbf16>
    %103 = vector.shape_cast %102 : vector<1x128x128xbf16> to vector<128x128xbf16>
    %cst_30 = arith.constant dense<0.000000e+00> : vector<16x128xf32>
    %104 = tpu.matmul %101, %103, %cst_30 {dimension_numbers = #tpu.dot_dimension_numbers<[1], [0], [0], [1], [0, 0, 1, 1], [], []>} : vector<16x128xbf16>, vector<128x128xbf16>, vector<16x128xf32> -> vector<16x128xf32>
    %c0_31 = arith.constant 0 : index
    %c0_32 = arith.constant 0 : index
    %c0_33 = arith.constant 0 : index
    %105 = vector.load %arg7[%c0_31, %c0_32, %c0_33] : memref<1x1x128xf32, #tpu.memory_space<vmem>>, vector<1x1x128xf32>
    %106 = vector.shape_cast %105 : vector<1x1x128xf32> to vector<1x128xf32>
    %107 = vector.broadcast %106 : vector<1x128xf32> to vector<16x128xf32>
    %108 = arith.addf %104, %107 : vector<16x128xf32>
    %109 = arith.addf %3, %108 : vector<16x128xf32>
    %c0_34 = arith.constant 0 : index
    %c0_35 = arith.constant 0 : index
    %c0_36 = arith.constant 0 : index
    %110 = vector.load %arg8[%c0_34, %c0_35, %c0_36] : memref<1x1x128xf32, #tpu.memory_space<vmem>>, vector<1x1x128xf32>
    %111 = vector.shape_cast %110 : vector<1x1x128xf32> to vector<1x128xf32>
    %c0_37 = arith.constant 0 : index
    %c0_38 = arith.constant 0 : index
    %c0_39 = arith.constant 0 : index
    %112 = vector.load %arg9[%c0_37, %c0_38, %c0_39] : memref<1x1x128xf32, #tpu.memory_space<vmem>>, vector<1x1x128xf32>
    %113 = vector.shape_cast %112 : vector<1x1x128xf32> to vector<1x128xf32>
    %cst_40 = arith.constant dense<0.000000e+00> : vector<16xf32>
    %114 = vector.multi_reduction <add>, %109, %cst_40 [1] : vector<16x128xf32> to vector<16xf32>
    %115 = vector.shape_cast %114 : vector<16xf32> to vector<16x1xf32>
    %cst_41 = arith.constant 1.280000e+02 : f32
    %116 = vector.broadcast %cst_41 : f32 to vector<16x1xf32>
    %117 = arith.divf %115, %116 : vector<16x1xf32>
    %118 = vector.broadcast %117 : vector<16x1xf32> to vector<16x128xf32>
    %119 = arith.subf %109, %118 : vector<16x128xf32>
    %120 = arith.mulf %119, %119 : vector<16x128xf32>
    %cst_42 = arith.constant dense<0.000000e+00> : vector<16xf32>
    %121 = vector.multi_reduction <add>, %120, %cst_42 [1] : vector<16x128xf32> to vector<16xf32>
    %122 = vector.shape_cast %121 : vector<16xf32> to vector<16x1xf32>
    %cst_43 = arith.constant 1.280000e+02 : f32
    %123 = vector.broadcast %cst_43 : f32 to vector<16x1xf32>
    %124 = arith.divf %122, %123 : vector<16x1xf32>
    %125 = vector.broadcast %117 : vector<16x1xf32> to vector<16x128xf32>
    %126 = arith.subf %109, %125 : vector<16x128xf32>
    %cst_44 = arith.constant 9.99999996E-13 : f32
    %127 = vector.broadcast %cst_44 : f32 to vector<16x1xf32>
    %128 = arith.addf %124, %127 : vector<16x1xf32>
    %129 = math.rsqrt %128 : vector<16x1xf32>
    %130 = vector.broadcast %129 : vector<16x1xf32> to vector<16x128xf32>
    %131 = arith.mulf %126, %130 : vector<16x128xf32>
    %132 = vector.broadcast %111 : vector<1x128xf32> to vector<16x128xf32>
    %133 = arith.mulf %131, %132 : vector<16x128xf32>
    %134 = vector.broadcast %113 : vector<1x128xf32> to vector<16x128xf32>
    %135 = arith.addf %133, %134 : vector<16x128xf32>
    %136 = arith.truncf %135 : vector<16x128xf32> to vector<16x128xbf16>
    %c0_45 = arith.constant 0 : index
    %c0_46 = arith.constant 0 : index
    %c0_47 = arith.constant 0 : index
    %137 = vector.load %arg10[%c0_45, %c0_46, %c0_47] : memref<1x128x256xbf16, #tpu.memory_space<vmem>>, vector<1x128x256xbf16>
    %138 = vector.shape_cast %137 : vector<1x128x256xbf16> to vector<128x256xbf16>
    %cst_48 = arith.constant dense<0.000000e+00> : vector<16x256xf32>
    %139 = tpu.matmul %136, %138, %cst_48 {dimension_numbers = #tpu.dot_dimension_numbers<[1], [0], [0], [1], [0, 0, 1, 1], [], []>} : vector<16x128xbf16>, vector<128x256xbf16>, vector<16x256xf32> -> vector<16x256xf32>
    %c0_49 = arith.constant 0 : index
    %c0_50 = arith.constant 0 : index
    %c0_51 = arith.constant 0 : index
    %140 = vector.load %arg11[%c0_49, %c0_50, %c0_51] : memref<1x1x256xf32, #tpu.memory_space<vmem>>, vector<1x1x256xf32>
    %141 = vector.shape_cast %140 : vector<1x1x256xf32> to vector<1x256xf32>
    %142 = vector.broadcast %141 : vector<1x256xf32> to vector<16x256xf32>
    %143 = arith.addf %139, %142 : vector<16x256xf32>
    %cst_52 = arith.constant 5.000000e-01 : f32
    %144 = vector.broadcast %cst_52 : f32 to vector<16x256xf32>
    %145 = arith.mulf %144, %143 : vector<16x256xf32>
    %cst_53 = arith.constant 4.471500e-02 : f32
    %146 = vector.broadcast %cst_53 : f32 to vector<16x256xf32>
    %147 = arith.mulf %146, %143 : vector<16x256xf32>
    %148 = arith.mulf %147, %143 : vector<16x256xf32>
    %149 = arith.mulf %148, %143 : vector<16x256xf32>
    %150 = arith.addf %143, %149 : vector<16x256xf32>
    %cst_54 = arith.constant 0.797884583 : f32
    %151 = vector.broadcast %cst_54 : f32 to vector<16x256xf32>
    %152 = arith.mulf %151, %150 : vector<16x256xf32>
    %153 = math.tanh %152 : vector<16x256xf32>
    %cst_55 = arith.constant 1.000000e+00 : f32
    %154 = vector.broadcast %cst_55 : f32 to vector<16x256xf32>
    %155 = arith.addf %154, %153 : vector<16x256xf32>
    %156 = arith.mulf %145, %155 : vector<16x256xf32>
    %157 = arith.truncf %156 : vector<16x256xf32> to vector<16x256xbf16>
    %c0_56 = arith.constant 0 : index
    %c0_57 = arith.constant 0 : index
    %c0_58 = arith.constant 0 : index
    %158 = vector.load %arg12[%c0_56, %c0_57, %c0_58] : memref<1x256x128xbf16, #tpu.memory_space<vmem>>, vector<1x256x128xbf16>
    %159 = vector.shape_cast %158 : vector<1x256x128xbf16> to vector<256x128xbf16>
    %cst_59 = arith.constant dense<0.000000e+00> : vector<16x128xf32>
    %160 = tpu.matmul %157, %159, %cst_59 {dimension_numbers = #tpu.dot_dimension_numbers<[1], [0], [0], [1], [0, 0, 1, 1], [], []>} : vector<16x256xbf16>, vector<256x128xbf16>, vector<16x128xf32> -> vector<16x128xf32>
    %c0_60 = arith.constant 0 : index
    %c0_61 = arith.constant 0 : index
    %c0_62 = arith.constant 0 : index
    %161 = vector.load %arg13[%c0_60, %c0_61, %c0_62] : memref<1x1x128xf32, #tpu.memory_space<vmem>>, vector<1x1x128xf32>
    %162 = vector.shape_cast %161 : vector<1x1x128xf32> to vector<1x128xf32>
    %163 = vector.broadcast %162 : vector<1x128xf32> to vector<16x128xf32>
    %164 = arith.addf %160, %163 : vector<16x128xf32>
    %165 = arith.addf %135, %164 : vector<16x128xf32>
    %c0_63 = arith.constant 0 : index
    %c0_64 = arith.constant 0 : index
    %c0_65 = arith.constant 0 : index
    %166 = vector.load %arg14[%c0_63, %c0_64, %c0_65] : memref<1x1x128xf32, #tpu.memory_space<vmem>>, vector<1x1x128xf32>
    %167 = vector.shape_cast %166 : vector<1x1x128xf32> to vector<1x128xf32>
    %c0_66 = arith.constant 0 : index
    %c0_67 = arith.constant 0 : index
    %c0_68 = arith.constant 0 : index
    %168 = vector.load %arg15[%c0_66, %c0_67, %c0_68] : memref<1x1x128xf32, #tpu.memory_space<vmem>>, vector<1x1x128xf32>
    %169 = vector.shape_cast %168 : vector<1x1x128xf32> to vector<1x128xf32>
    %cst_69 = arith.constant dense<0.000000e+00> : vector<16xf32>
    %170 = vector.multi_reduction <add>, %165, %cst_69 [1] : vector<16x128xf32> to vector<16xf32>
    %171 = vector.shape_cast %170 : vector<16xf32> to vector<16x1xf32>
    %cst_70 = arith.constant 1.280000e+02 : f32
    %172 = vector.broadcast %cst_70 : f32 to vector<16x1xf32>
    %173 = arith.divf %171, %172 : vector<16x1xf32>
    %174 = vector.broadcast %173 : vector<16x1xf32> to vector<16x128xf32>
    %175 = arith.subf %165, %174 : vector<16x128xf32>
    %176 = arith.mulf %175, %175 : vector<16x128xf32>
    %cst_71 = arith.constant dense<0.000000e+00> : vector<16xf32>
    %177 = vector.multi_reduction <add>, %176, %cst_71 [1] : vector<16x128xf32> to vector<16xf32>
    %178 = vector.shape_cast %177 : vector<16xf32> to vector<16x1xf32>
    %cst_72 = arith.constant 1.280000e+02 : f32
    %179 = vector.broadcast %cst_72 : f32 to vector<16x1xf32>
    %180 = arith.divf %178, %179 : vector<16x1xf32>
    %181 = vector.broadcast %173 : vector<16x1xf32> to vector<16x128xf32>
    %182 = arith.subf %165, %181 : vector<16x128xf32>
    %cst_73 = arith.constant 9.99999996E-13 : f32
    %183 = vector.broadcast %cst_73 : f32 to vector<16x1xf32>
    %184 = arith.addf %180, %183 : vector<16x1xf32>
    %185 = math.rsqrt %184 : vector<16x1xf32>
    %186 = vector.broadcast %185 : vector<16x1xf32> to vector<16x128xf32>
    %187 = arith.mulf %182, %186 : vector<16x128xf32>
    %188 = vector.broadcast %167 : vector<1x128xf32> to vector<16x128xf32>
    %189 = arith.mulf %187, %188 : vector<16x128xf32>
    %190 = vector.broadcast %169 : vector<1x128xf32> to vector<16x128xf32>
    %191 = arith.addf %189, %190 : vector<16x128xf32>
    %c0_74 = arith.constant 0 : index
    %c0_75 = arith.constant 0 : index
    %192 = vector.load %arg20[%c0_74, %c0_75] : memref<16x128xf32, #tpu.memory_space<vmem>>, vector<16x128xf32>
    tpu.vector_store %arg20[%c0_74, %c0_75], %191 {strides = array<i32>} : memref<16x128xf32, #tpu.memory_space<vmem>>, vector<16x128xf32>,
    %c1_i32 = arith.constant 1 : i32
    %193 = arith.cmpi eq, %arg1, %c1_i32 : i32
    %194 = arith.extui %193 : i1 to i32
    %c0_i32_76 = arith.constant 0 : i32
    %195 = arith.cmpi ne, %194, %c0_i32_76 : i32
    scf.if %195 {
      %c0_77 = arith.constant 0 : index
      %c0_78 = arith.constant 0 : index
      %196 = vector.load %arg18[%c0_77, %c0_78] : memref<16x128xf32, #tpu.memory_space<vmem>>, vector<16x128xf32>
      tpu.vector_store %arg18[%c0_77, %c0_78], %191 {strides = array<i32>} : memref<16x128xf32, #tpu.memory_space<vmem>>, vector<16x128xf32>,
      %197 = vector.extract_strided_slice %191 {offsets = [0, 0], sizes = [1, 128], strides = [1, 1]} : vector<16x128xf32> to vector<1x128xf32>
      %198 = vector.extract_strided_slice %191 {offsets = [8, 0], sizes = [1, 128], strides = [1, 1]} : vector<16x128xf32> to vector<1x128xf32>
      %199 = tpu.concatenate %197, %198 in 0 : vector<1x128xf32>, vector<1x128xf32> -> vector<2x128xf32>
      %200 = arith.truncf %199 : vector<2x128xf32> to vector<2x128xbf16>
      %c0_79 = arith.constant 0 : index
      %c0_80 = arith.constant 0 : index
      %201 = vector.load %arg16[%c0_79, %c0_80] : memref<128x128xbf16, #tpu.memory_space<vmem>>, vector<128x128xbf16>
      %cst_81 = arith.constant dense<0.000000e+00> : vector<2x128xf32>
      %202 = tpu.matmul %200, %201, %cst_81 {dimension_numbers = #tpu.dot_dimension_numbers<[1], [0], [0], [1], [0, 0, 1, 1], [], []>} : vector<2x128xbf16>, vector<128x128xbf16>, vector<2x128xf32> -> vector<2x128xf32>
      %c0_82 = arith.constant 0 : index
      %c0_83 = arith.constant 0 : index
      %203 = vector.load %arg17[%c0_82, %c0_83] : memref<1x128xf32, #tpu.memory_space<vmem>>, vector<1x128xf32>
      %204 = vector.broadcast %203 : vector<1x128xf32> to vector<2x128xf32>
      %205 = arith.addf %202, %204 : vector<2x128xf32>
      %206 = math.tanh %205 : vector<2x128xf32>
      %c0_84 = arith.constant 0 : index
      %c0_85 = arith.constant 0 : index
      %207 = vector.load %arg19[%c0_84, %c0_85] : memref<2x128xf32, #tpu.memory_space<vmem>>, vector<2x128xf32>
      tpu.vector_store %arg19[%c0_84, %c0_85], %206 {strides = array<i32>} : memref<2x128xf32, #tpu.memory_space<vmem>>, vector<2x128xf32>,
    } else {
    }
    return
  }
  func.func @transform_0(%arg0: i32, %arg1: i32) -> (i32, i32) {
    %c0_i32 = arith.constant 0 : i32
    %c0_i32_0 = arith.constant 0 : i32
    return %arg0, %c0_i32 : i32, i32
  }
  func.func @transform_1(%arg0: i32, %arg1: i32) -> (i32, i32) {
    %c0_i32 = arith.constant 0 : i32
    %c0_i32_0 = arith.constant 0 : i32
    return %arg0, %c0_i32 : i32, i32
  }
  func.func @transform_2(%arg0: i32, %arg1: i32) -> (i32, i32, i32) {
    %c0_i32 = arith.constant 0 : i32
    %c0_i32_0 = arith.constant 0 : i32
    %c0_i32_1 = arith.constant 0 : i32
    return %arg1, %c0_i32, %c0_i32_0 : i32, i32, i32
  }
  func.func @transform_3(%arg0: i32, %arg1: i32) -> (i32, i32, i32) {
    %c0_i32 = arith.constant 0 : i32
    %c0_i32_0 = arith.constant 0 : i32
    %c0_i32_1 = arith.constant 0 : i32
    return %arg1, %c0_i32, %c0_i32_0 : i32, i32, i32
  }
  func.func @transform_4(%arg0: i32, %arg1: i32) -> (i32, i32, i32) {
    %c0_i32 = arith.constant 0 : i32
    %c0_i32_0 = arith.constant 0 : i32
    %c0_i32_1 = arith.constant 0 : i32
    return %arg1, %c0_i32, %c0_i32_0 : i32, i32, i32
  }
  func.func @transform_5(%arg0: i32, %arg1: i32) -> (i32, i32, i32) {
    %c0_i32 = arith.constant 0 : i32
    %c0_i32_0 = arith.constant 0 : i32
    %c0_i32_1 = arith.constant 0 : i32
    return %arg1, %c0_i32, %c0_i32_0 : i32, i32, i32
  }
  func.func @transform_6(%arg0: i32, %arg1: i32) -> (i32, i32, i32) {
    %c0_i32 = arith.constant 0 : i32
    %c0_i32_0 = arith.constant 0 : i32
    %c0_i32_1 = arith.constant 0 : i32
    return %arg1, %c0_i32, %c0_i32_0 : i32, i32, i32
  }
  func.func @transform_7(%arg0: i32, %arg1: i32) -> (i32, i32, i32) {
    %c0_i32 = arith.constant 0 : i32
    %c0_i32_0 = arith.constant 0 : i32
    %c0_i32_1 = arith.constant 0 : i32
    return %arg1, %c0_i32, %c0_i32_0 : i32, i32, i32
  }
  func.func @transform_8(%arg0: i32, %arg1: i32) -> (i32, i32, i32) {
    %c0_i32 = arith.constant 0 : i32
    %c0_i32_0 = arith.constant 0 : i32
    %c0_i32_1 = arith.constant 0 : i32
    return %arg1, %c0_i32, %c0_i32_0 : i32, i32, i32
  }
  func.func @transform_9(%arg0: i32, %arg1: i32) -> (i32, i32, i32) {
    %c0_i32 = arith.constant 0 : i32
    %c0_i32_0 = arith.constant 0 : i32
    %c0_i32_1 = arith.constant 0 : i32
    return %arg1, %c0_i32, %c0_i32_0 : i32, i32, i32
  }
  func.func @transform_10(%arg0: i32, %arg1: i32) -> (i32, i32, i32) {
    %c0_i32 = arith.constant 0 : i32
    %c0_i32_0 = arith.constant 0 : i32
    %c0_i32_1 = arith.constant 0 : i32
    return %arg1, %c0_i32, %c0_i32_0 : i32, i32, i32
  }
  func.func @transform_11(%arg0: i32, %arg1: i32) -> (i32, i32, i32) {
    %c0_i32 = arith.constant 0 : i32
    %c0_i32_0 = arith.constant 0 : i32
    %c0_i32_1 = arith.constant 0 : i32
    return %arg1, %c0_i32, %c0_i32_0 : i32, i32, i32
  }
  func.func @transform_12(%arg0: i32, %arg1: i32) -> (i32, i32, i32) {
    %c0_i32 = arith.constant 0 : i32
    %c0_i32_0 = arith.constant 0 : i32
    %c0_i32_1 = arith.constant 0 : i32
    return %arg1, %c0_i32, %c0_i32_0 : i32, i32, i32
  }
  func.func @transform_13(%arg0: i32, %arg1: i32) -> (i32, i32, i32) {
    %c0_i32 = arith.constant 0 : i32
    %c0_i32_0 = arith.constant 0 : i32
    %c0_i32_1 = arith.constant 0 : i32
    return %arg1, %c0_i32, %c0_i32_0 : i32, i32, i32
  }
  func.func @transform_14(%arg0: i32, %arg1: i32) -> (i32, i32) {
    %c0_i32 = arith.constant 0 : i32
    %c0_i32_0 = arith.constant 0 : i32
    %c0_i32_1 = arith.constant 0 : i32
    return %c0_i32, %c0_i32_0 : i32, i32
  }
  func.func @transform_15(%arg0: i32, %arg1: i32) -> (i32, i32) {
    %c0_i32 = arith.constant 0 : i32
    %c0_i32_0 = arith.constant 0 : i32
    %c0_i32_1 = arith.constant 0 : i32
    return %c0_i32, %c0_i32_0 : i32, i32
  }
  func.func @transform_16(%arg0: i32, %arg1: i32) -> (i32, i32) {
    %c0_i32 = arith.constant 0 : i32
    %c0_i32_0 = arith.constant 0 : i32
    return %arg0, %c0_i32 : i32, i32
  }
  func.func @transform_17(%arg0: i32, %arg1: i32) -> (i32, i32) {
    %c0_i32 = arith.constant 0 : i32
    %c0_i32_0 = arith.constant 0 : i32
    return %arg0, %c0_i32 : i32, i32
  }
}

</mosaic_0001>

<llo_original>
// kernel: bert_forward.2
$region0: #{bert_forward.2}
  #allocation0 [shape = 'u32[]', space=smem, size = 0x4, offset = 0x4, fixed_abs, tag = 'smem constant byte address 0x4 - core index']
  #allocation1 [shape = 'u32[144,128]{1,0:T(1,128)}', space=vmem, size = 0x12000, scoped, tag = 'internal scratch']
  %s0 = inlined_call_operand.vmem [shape: s32[16,1], index: 0, kind: input, shape index: {}]
  %s1 = inlined_call_operand.hbm [shape: f32[128,128], index: 1, kind: input, shape index: {}]
  %s2 = inlined_call_operand.vmem [shape: f32[8,128], index: 2, kind: input, shape index: {}]
  %s3 = inlined_call_operand.vmem [shape: f32[1,128], index: 3, kind: input, shape index: {}]
  %s4 = inlined_call_operand.vmem [shape: f32[1,128], index: 4, kind: input, shape index: {}]
  %s5 = inlined_call_operand.vmem [shape: f32[1,128], index: 5, kind: input, shape index: {}]
  %s6 = inlined_call_operand.vmem [shape: bf16[16,128], index: 6, kind: output, shape index: {}]
  %s7 = sld [smem:[#allocation0]]
  $region38: #{bert_forward.2} parent=0
    _
  %s9 = ssub.s32 1, %s7
  %s10 = scalar_select 0, %s9, %s7
  $region1: #{bert_forward.2} parent=0
    #allocation2 [shape = 'u8[65536]{0}', space=vmem, size = 0x10000, scoped, tag = 'input window, operand 1, single buffered']
    #allocation3 [shape = 's32[1]{0}', space=sflag, size = 0x4, scoped, tag = 'scoped memory for bert_forward.2']
    %11 = vsyncpa [#allocation3], 0
    // Predicated region
    $region2: #{bert_forward.2} parent=1 // pred_check
      _
    $region3: #{bert_forward.2} parent=1 // pred_check_branch
      %13 = sbr.rel (0) target = $region5
    $region4: #{bert_forward.2} parent=1 // pred_region
      _
    $region5: #{bert_forward.2} parent=1 // pred_fallthru
      _
    // Predicated region
    $region6: #{bert_forward.2} parent=1 // pred_check
      _
    $region7: #{bert_forward.2} parent=1 // pred_check_branch
      %15 = sbr.rel (0) target = $region9
    $region8: #{bert_forward.2} parent=1 // pred_region
      %s17 = ssub.s32 2048, 2048
      %18 = vsyncadd [#allocation3], %s17
      %s19 = sshll.u32 [#allocation2], 4
      %s20 = int_to_ptr.vmem [resolvable:$true] %s19
      %25 = dma.hbm_to_vmem [thread:$0]  %s1, 2048, %s20, [#allocation3], 128, 128, 8
    $region9: #{bert_forward.2} parent=1 // pred_fallthru
      _
    // Predicated region
    $region10: #{bert_forward.2} parent=1 // pred_check
      _
    $region11: #{bert_forward.2} parent=1 // pred_check_branch
      %27 = sbr.rel (0) target = $region13
    $region12: #{bert_forward.2} parent=1 // pred_region
      _
    $region13: #{bert_forward.2} parent=1 // pred_fallthru
      _
    // Predicated region
    $region14: #{bert_forward.2} parent=1 // pred_check
      _
    $region15: #{bert_forward.2} parent=1 // pred_check_branch
      %29 = sbr.rel (0) target = $region17
    $region16: #{bert_forward.2} parent=1 // pred_region
      _
    $region17: #{bert_forward.2} parent=1 // pred_fallthru
      _
    // Predicated region
    $region18: #{bert_forward.2} parent=1 // pred_check
      _
    $region19: #{bert_forward.2} parent=1 // pred_check_branch
      %31 = sbr.rel (0) target = $region21
    $region20: #{bert_forward.2} parent=1 // pred_region
      _
    $region21: #{bert_forward.2} parent=1 // pred_fallthru
      _
    // Predicated region
    $region22: #{bert_forward.2} parent=1 // pred_check
      _
    $region23: #{bert_forward.2} parent=1 // pred_check_branch
      %33 = sbr.rel (0) target = $region25
    $region24: #{bert_forward.2} parent=1 // pred_region
      _
    $region25: #{bert_forward.2} parent=1 // pred_fallthru
      _
    // Predicated region
    $region26: #{bert_forward.2} parent=1 // pred_check
      _
    $region27: #{bert_forward.2} parent=1 // pred_check_branch
      %35 = sbr.rel (0) target = $region29
    $region28: #{bert_forward.2} parent=1 // pred_region
      %36 = dma.done [#allocation3], 2048
    $region29: #{bert_forward.2} parent=1 // pred_fallthru
      _
    %v37 = vld [vmem:[%s0] sm:$0xff]
    %v38 = vld [vmem:[%s0 + $0x8] sm:$0xff]
    %v39 = vlaneseq
    %v40 = vand.u32 %v39, 127
    %41 = vset.pattern.permute.xlu0 0
    %42 = vperm.xlu0 %41, %v37
    %v43 = vpop.permute.xlu0 %42
    %44 = vset.pattern.permute.xlu0 0
    %45 = vperm.xlu0 %44, %v38
    %v46 = vpop.permute.xlu0 %45
    %vm47 = vcmp.eq.s32.totalorder %v40, %v43
    %vm48 = vcmp.eq.s32.totalorder %v40, %v46
    %v49 = vsel %vm47, 1, 0
    %v50 = vsel %vm48, 1, 0
    %v51 = vcvt.s32.f32 %v49
    %v52 = vcvt.s32.f32 %v50
    %v53 = vld [vmem:[#allocation2] sm:$0xff]
    %v54 = vld [vmem:[#allocation2 + $0x8] sm:$0xff]
    %v55 = vld [vmem:[#allocation2 + $0x10] sm:$0xff]
    %v56 = vld [vmem:[#allocation2 + $0x18] sm:$0xff]
    %v57 = vld [vmem:[#allocation2 + $0x20] sm:$0xff]
    %v58 = vld [vmem:[#allocation2 + $0x28] sm:$0xff]
    %v59 = vld [vmem:[#allocation2 + $0x30] sm:$0xff]
    %v60 = vld [vmem:[#allocation2 + $0x38] sm:$0xff]
    %v61 = vld [vmem:[#allocation2 + $0x40] sm:$0xff]
    %v62 = vld [vmem:[#allocation2 + $0x48] sm:$0xff]
    %v63 = vld [vmem:[#allocation2 + $0x50] sm:$0xff]
    %v64 = vld [vmem:[#allocation2 + $0x58] sm:$0xff]
    %v65 = vld [vmem:[#allocation2 + $0x60] sm:$0xff]
    %v66 = vld [vmem:[#allocation2 + $0x68] sm:$0xff]
    %v67 = vld [vmem:[#allocation2 + $0x70] sm:$0xff]
    %v68 = vld [vmem:[#allocation2 + $0x78] sm:$0xff]
    %v69 = vld [vmem:[%s2] sm:$0xff]
    %70 = vmatprep.subr.mxu0 0.0
    %71 = vmatpush1.msra.mxu0 %v53
    %72 = vmatprep.subr.mxu0 0.0
    %73 = vmatpush1.msra.mxu0 %v54
    %74 = vmatprep.subr.mxu0 0.0
    %75 = vmatpush1.msra.mxu0 %v55
    %76 = vmatprep.subr.mxu0 0.0
    %77 = vmatpush1.msra.mxu0 %v56
    %78 = vmatprep.subr.mxu0 0.0
    %79 = vmatpush1.msra.mxu0 %v57
    %80 = vmatprep.subr.mxu0 0.0
    %81 = vmatpush1.msra.mxu0 %v58
    %82 = vmatprep.subr.mxu0 0.0
    %83 = vmatpush1.msra.mxu0 %v59
    %84 = vmatprep.subr.mxu0 0.0
    %85 = vmatpush1.msra.mxu0 %v60
    %86 = vmatprep.subr.mxu0 0.0
    %87 = vmatpush1.msra.mxu0 %v61
    %88 = vmatprep.subr.mxu0 0.0
    %89 = vmatpush1.msra.mxu0 %v62
    %90 = vmatprep.subr.mxu0 0.0
    %91 = vmatpush1.msra.mxu0 %v63
    %92 = vmatprep.subr.mxu0 0.0
    %93 = vmatpush1.msra.mxu0 %v64
    %94 = vmatprep.subr.mxu0 0.0
    %95 = vmatpush1.msra.mxu0 %v65
    %96 = vmatprep.subr.mxu0 0.0
    %97 = vmatpush1.msra.mxu0 %v66
    %98 = vmatprep.subr.mxu0 0.0
    %99 = vmatpush1.msra.mxu0 %v67
    %100 = vmatprep.subr.mxu0 0.0
    %101 = vmatpush1.msra.mxu0 %v68
    %102 = vmatprep.subr.mxu0 0.0
    %103 = vmatpush1.msra.mxu0 0.0
    %104 = vmatprep.subr.mxu0 0.0
    %105 = vmatpush1.msra.mxu0 0.0
    %106 = vmatprep.subr.mxu0 0.0
    %107 = vmatpush1.msra.mxu0 0.0
    %108 = vmatprep.subr.mxu0 0.0
    %109 = vmatpush1.msra.mxu0 0.0
    %110 = vmatprep.subr.mxu0 0.0
    %111 = vmatpush1.msra.mxu0 0.0
    %112 = vmatprep.subr.mxu0 0.0
    %113 = vmatpush1.msra.mxu0 0.0
    %114 = vmatprep.subr.mxu0 0.0
    %115 = vmatpush1.msra.mxu0 0.0
    %116 = vmatprep.subr.mxu0 0.0
    %117 = vmatpush1.msra.mxu0 0.0
    %118 = vmatprep.subr.mxu0 0.0
    %119 = vmatpush1.msra.mxu0 0.0
    %120 = vmatprep.subr.mxu0 0.0
    %121 = vmatpush1.msra.mxu0 0.0
    %122 = vmatprep.subr.mxu0 0.0
    %123 = vmatpush1.msra.mxu0 0.0
    %124 = vmatprep.subr.mxu0 0.0
    %125 = vmatpush1.msra.mxu0 0.0
    %126 = vmatprep.subr.mxu0 0.0
    %127 = vmatpush1.msra.mxu0 0.0
    %128 = vmatprep.subr.mxu0 0.0
    %129 = vmatpush1.msra.mxu0 0.0
    %130 = vmatprep.subr.mxu0 0.0
    %131 = vmatpush1.msra.mxu0 0.0
    %132 = vmatprep.subr.mxu0 0.0
    %133 = vmatpush1.msra.mxu0 0.0
    %134 = vmatprep.mubr.f32.mxu0 0.0
    %135 = vmatmul.mubr.f32.gmra.mrb[0].mxu0 %v51
    %v136 = vpop.f32.mrb[0].mxu0
    %v137 = vadd.f32 %v69, %v136
    %v138 = vpop.f32.mrb[0].mxu0
    %139 = vmatprep.mubr.f32.mxu0 0.0
    %140 = vmatmul.mubr.f32.gmra.mrb[0].mxu0 %v52
    %v141 = vpop.f32.mrb[0].mxu0
    %v142 = vadd.f32 %v69, %v141
    %v143 = vpop.f32.mrb[0].mxu0
    %144 = vdwg.mxu0
    %v145 = vld [vmem:[%s3] sm:$0x1]
    %v147 = vlaneseq
    %v148 = vshrl.u32 %v147, 7
    %v149 = vsub.s32 0, %v148
    %v150 = vrot.slane %v145, %v149
    %v152 = vadd.f32 %v137, %v150
    %v153 = vadd.f32 %v142, %v150
    %v154 = vld [vmem:[%s4] sm:$0x1]
    %v155 = vld [vmem:[%s5] sm:$0x1]
    %156 = vadd.xlane.f32.xlu0 %v152
    %v157 = vpop.xlane.xlu0 %156
    %158 = vadd.xlane.f32.xlu0 %v153
    %v159 = vpop.xlane.xlu0 %158
    %v160 = vrcp.pop 128.0
    %v161 = vmul.f32 %v157, %v160
    %v162 = vmul.f32 %v159, %v160
    %v163 = vsub.f32 %v152, %v161
    %v164 = vsub.f32 %v153, %v162
    %v165 = vmul.f32 %v163, %v163
    %v166 = vmul.f32 %v164, %v164
    %167 = vadd.xlane.f32.xlu0 %v165
    %v168 = vpop.xlane.xlu0 %167
    %169 = vadd.xlane.f32.xlu0 %v166
    %v170 = vpop.xlane.xlu0 %169
    %v171 = vmul.f32 %v168, %v160
    %v172 = vmul.f32 %v170, %v160
    %v173 = vadd.f32 %v171, 1e-12
    %v174 = vadd.f32 %v172, 1e-12
    %v175 = vrsqrt.pop %v173
    %v176 = vrsqrt.pop %v174
    %v177 = vmul.f32 %v163, %v175
    %v178 = vmul.f32 %v164, %v176
    %v180 = vlaneseq
    %v181 = vshrl.u32 %v180, 7
    %v182 = vsub.s32 0, %v181
    %v183 = vrot.slane %v154, %v182
    %v185 = vmul.f32 %v177, %v183
    %v186 = vmul.f32 %v178, %v183
    %v188 = vlaneseq
    %v189 = vshrl.u32 %v188, 7
    %v190 = vsub.s32 0, %v189
    %v191 = vrot.slane %v155, %v190
    %v193 = vadd.f32 %v185, %v191
    %v194 = vadd.f32 %v186, %v191
    %v195 = vpack.c.bf16 %v194, %v193
    %v197 = vunpack.c.l.b16 %v195
    %v198 = vunpack.c.h.b16 %v195
    %v199 = vpack.c.b16 %v197, %v197
    %v200 = vpack.c.b16 %v198, %v198
    %203 = vst [vmem:[%s6] sm:$0xf] %v199
    %204 = vst [vmem:[%s6 + $0x4] sm:$0xf] %v200
    // Predicated region
    $region30: #{bert_forward.2} parent=1 // pred_check
      _
    $region31: #{bert_forward.2} parent=1 // pred_check_branch
      %206 = sbr.rel (0) target = $region33
    $region32: #{bert_forward.2} parent=1 // pred_region
      _
    $region33: #{bert_forward.2} parent=1 // pred_fallthru
      _
    // Predicated region
    $region34: #{bert_forward.2} parent=1 // pred_check
      _
    $region35: #{bert_forward.2} parent=1 // pred_check_branch
      %208 = sbr.rel (0) target = $region37
    $region36: #{bert_forward.2} parent=1 // pred_region
      _
    $region37: #{bert_forward.2} parent=1 // pred_fallthru
      _
    %209 = vsyncpa [#allocation3], 1

// kernel: bert_forward.3
$region0: #{bert_forward.3}
  #allocation0 [shape = 'u32[]', space=smem, size = 0x4, offset = 0x4, fixed_abs, tag = 'smem constant byte address 0x4 - core index']
  #allocation1 [shape = 'u32[144,128]{1,0:T(1,128)}', space=vmem, size = 0x12000, scoped, tag = 'internal scratch']
  #allocation2 [shape = 'f32[16,128]{1,0:T(8,128)}', space=vmem, size = 0x2000, scoped, tag = 'scratch operand']
  %s0 = inlined_call_operand.vmem [shape: bf16[16,128], index: 0, kind: input, shape index: {}]
  %s1 = inlined_call_operand.vmem [shape: f32[2,8], index: 1, kind: input, shape index: {}]
  %s2 = inlined_call_operand.hbm [shape: bf16[2,128,384], index: 2, kind: input, shape index: {}]
  %s3 = inlined_call_operand.vmem [shape: f32[2,1,384], index: 3, kind: input, shape index: {}]
  %s4 = inlined_call_operand.vmem [shape: bf16[2,128,128], index: 4, kind: input, shape index: {}]
  %s5 = inlined_call_operand.vmem [shape: f32[2,1,128], index: 5, kind: input, shape index: {}]
  %s6 = inlined_call_operand.vmem [shape: f32[2,1,128], index: 6, kind: input, shape index: {}]
  %s7 = inlined_call_operand.vmem [shape: f32[2,1,128], index: 7, kind: input, shape index: {}]
  %s8 = inlined_call_operand.hbm [shape: bf16[2,128,256], index: 8, kind: input, shape index: {}]
  %s9 = inlined_call_operand.vmem [shape: f32[2,1,256], index: 9, kind: input, shape index: {}]
  %s10 = inlined_call_operand.hbm [shape: bf16[2,256,128], index: 10, kind: input, shape index: {}]
  %s11 = inlined_call_operand.vmem [shape: f32[2,1,128], index: 11, kind: input, shape index: {}]
  %s12 = inlined_call_operand.vmem [shape: f32[2,1,128], index: 12, kind: input, shape index: {}]
  %s13 = inlined_call_operand.vmem [shape: f32[2,1,128], index: 13, kind: input, shape index: {}]
  %s14 = inlined_call_operand.vmem [shape: bf16[128,128], index: 14, kind: input, shape index: {}]
  %s15 = inlined_call_operand.hbm [shape: f32[1,128], index: 15, kind: input, shape index: {}]
  %s16 = inlined_call_operand.vmem [shape: f32[16,128], index: 16, kind: output, shape index: {0}]
  %s17 = inlined_call_operand.hbm [shape: f32[2,128], index: 17, kind: output, shape index: {1}]
  %18 = xla_tuple %s16, %s17
  %s19 = sld [smem:[#allocation0]]
  $region129: #{bert_forward.3} parent=0
    _
  %s21 = ssub.s32 1, %s19
  %s22 = scalar_select 0, %s21, %s19
  $region1: #{bert_forward.3} parent=0
    #allocation3 [shape = 'u8[196608]{0}', space=vmem, size = 0x30000, scoped, tag = 'input window, operand 2']
    #allocation4 [shape = 's32[2]{0}', space=sflag, size = 0x8, scoped, tag = 'scoped memory for bert_forward.3']
    #allocation5 [shape = 's32[2]{0}', space=sflag, size = 0x8, scoped, tag = 'scoped memory for bert_forward.3']
    #allocation6 [shape = 'u8[131072]{0}', space=vmem, size = 0x20000, scoped, tag = 'input window, operand 8']
    #allocation7 [shape = 's32[2]{0}', space=sflag, size = 0x8, scoped, tag = 'scoped memory for bert_forward.3']
    #allocation8 [shape = 'u8[131072]{0}', space=vmem, size = 0x20000, scoped, tag = 'input window, operand 10']
    #allocation9 [shape = 'u8[512]{0}', space=vmem, size = 0x400, scoped, tag = 'input window, operand 15, single buffered']
    #allocation10 [shape = 's32[1]{0}', space=sflag, size = 0x4, scoped, tag = 'scoped memory for bert_forward.3']
    #allocation11 [shape = 'u8[1024]{0}', space=vmem, size = 0x400, scoped, tag = 'output window, operand 1, single buffered']
    %23 = vsyncpa [#allocation4], 0
    %s24 = scalar_lea.sflag [#allocation4], 1
    %25 = vsyncpa %s24, 0
    %26 = vsyncpa [#allocation7], 0
    %s27 = scalar_lea.sflag [#allocation7], 1
    %28 = vsyncpa %s27, 0
    %29 = vsyncpa [#allocation10], 0
    %30 = vsyncpa [#allocation5], 0
    loop: start=0, step=1, limit=4
    $region2: #{bert_forward.3} parent=1 // loop_pre_header
      _
    $region3: #{bert_forward.3} parent=1 // loop_header
      %s32 = sphi 0, %s36
      %p33 = scmp.ge.s32.totalorder %s32, 4
      %s39 = sphi 0, %s51
      %s40 = sphi 0, %s47
      %s41 = sphi 0, %s39
      %s42 = sphi 0, %s40
      %s43 = sphi 0, %s41
      %s44 = sphi 0, %s42
      %s54 = sphi 0, %s56
      %s57 = sphi 0, %s54
      %s58 = sphi 0, %s57
      %s74 = sphi 0, %s58
      %s80 = sphi 0, %s82
      %s83 = sphi 0, %s80
      %s84 = sphi 0, %s83
      %s100 = sphi 0, %s84
      %s106 = sphi 0, %s108
      %s109 = sphi 0, %s106
      %s110 = sphi 0, %s109
      %s126 = sphi 0, %s110
      %s132 = sphi 0, %s134
      %s135 = sphi 0, %s132
      %s136 = sphi 0, %s135
      %s152 = sphi 0, %s136
      %s158 = sphi 0, %s160
      %s161 = sphi 0, %s158
      %s162 = sphi 0, %s161
      %s178 = sphi 0, %s162
      %s184 = sphi 0, %s186
      %s187 = sphi 0, %s184
      %s188 = sphi 0, %s187
      %s204 = sphi 0, %s188
      %s210 = sphi 0, %s212
      %s213 = sphi 0, %s210
      %s214 = sphi 0, %s213
      %s230 = sphi 0, %s214
      %s236 = sphi 0, %s238
      %s239 = sphi 0, %s236
      %s240 = sphi 0, %s239
      %s256 = sphi 0, %s240
      %s262 = sphi 0, %s264
      %s265 = sphi 0, %s262
      %s266 = sphi 0, %s265
      %s282 = sphi 0, %s266
      %s288 = sphi 0, %s290
      %s291 = sphi 0, %s288
      %s292 = sphi 0, %s291
      %s308 = sphi 0, %s292
      %s314 = sphi 0, %s316
      %s317 = sphi 0, %s314
      %s318 = sphi 0, %s317
      %s334 = sphi 0, %s318
      %s340 = sphi 0, %s342
      %s343 = sphi 0, %s340
      %s344 = sphi 0, %s343
      %s360 = sphi 0, %s344
      %s366 = sphi 0, %s368
      %s369 = sphi 0, %s366
      %s370 = sphi 0, %s369
      %s386 = sphi 0, %s370
      %s392 = sphi 0, %s394
      %s395 = sphi 0, %s392
      %s396 = sphi 0, %s395
      %s412 = sphi 0, %s396
      %s416 = sphi 0, %s416
      %s418 = sphi 0, %s416
      %s419 = sphi 0, %s418
      %s433 = sphi 0, %s419
      %s437 = sphi 0, %s437
      %s439 = sphi 0, %s437
      %s440 = sphi 0, %s439
      %s454 = sphi 0, %s440
      %s460 = sphi 0, %s462
      %s463 = sphi 0, %s460
      %s464 = sphi 0, %s463
      %s480 = sphi 0, %s464
      %s486 = sphi 0, %s488
      %s489 = sphi 0, %s486
      %s490 = sphi 0, %s489
      %s506 = sphi 0, %s490
    $region4: #{bert_forward.3} parent=1 // loop_header_branch
      %35 = sbr.rel (%p33) target = $region8
    $region5: #{bert_forward.3} parent=1 // loop_body
      %s37 = ssub.s32 %s32, 1
      %s38 = ssub.s32 %s32, 2
      %s45 = sadd.s32 1, %s40
      %p46 = scmp.ge.s32.totalorder %s45, 2
      %s47 = scalar_select %p46, 0, %s45
      %s48 = sadd.s32 1, %s39
      %s49 = scalar_select %p46, %s48, %s39
      %p50 = scmp.ge.s32.totalorder %s49, 1
      %s51 = scalar_select %p50, 0, %s49
      %s52 = ssub.s32 %s39, %s51
      %p53 = scmp.eq.s32.totalorder %s52, 0
      %s55 = sadd.s32 %s54, 1
      %s56 = scalar_select %p53, %s54, %s55
      %p59 = pneg %p53
      %p60 = scmp.eq.s32.totalorder %s32, 1
      %p61 = por %p59, %p60
      %p62 = scmp.ne.s32.totalorder %s54, %s57
      %p63 = scmp.eq.s32.totalorder %s32, 0
      %p64 = por %p62, %p63
      %p65 = scmp.ne.s32.totalorder %s54, %s57
      %p66 = scmp.eq.s32.totalorder %s37, 1
      %p67 = por %p65, %p66
      %p68 = scmp.ne.s32.totalorder %s57, %s58
      %p69 = scmp.eq.s32.totalorder %s37, 0
      %p70 = por %p68, %p69
      %p71 = scmp.ne.s32.totalorder %s57, %s58
      %p72 = scmp.eq.s32.totalorder %s38, 1
      %p73 = por %p71, %p72
      %p75 = scmp.ne.s32.totalorder %s58, %s74
      %p76 = scmp.eq.s32.totalorder %s38, 0
      %p77 = por %p75, %p76
      %s78 = ssub.s32 %s39, %s51
      %p79 = scmp.eq.s32.totalorder %s78, 0
      %s81 = sadd.s32 %s80, 1
      %s82 = scalar_select %p79, %s80, %s81
      %p85 = pneg %p79
      %p86 = scmp.eq.s32.totalorder %s32, 1
      %p87 = por %p85, %p86
      %p88 = scmp.ne.s32.totalorder %s80, %s83
      %p89 = scmp.eq.s32.totalorder %s32, 0
      %p90 = por %p88, %p89
      %p91 = scmp.ne.s32.totalorder %s80, %s83
      %p92 = scmp.eq.s32.totalorder %s37, 1
      %p93 = por %p91, %p92
      %p94 = scmp.ne.s32.totalorder %s83, %s84
      %p95 = scmp.eq.s32.totalorder %s37, 0
      %p96 = por %p94, %p95
      %p97 = scmp.ne.s32.totalorder %s83, %s84
      %p98 = scmp.eq.s32.totalorder %s38, 1
      %p99 = por %p97, %p98
      %p101 = scmp.ne.s32.totalorder %s84, %s100
      %p102 = scmp.eq.s32.totalorder %s38, 0
      %p103 = por %p101, %p102
      %s104 = ssub.s32 %s40, %s47
      %p105 = scmp.eq.s32.totalorder %s104, 0
      %s107 = sadd.s32 %s106, 1
      %s108 = scalar_select %p105, %s106, %s107
      %p111 = pneg %p105
      %p112 = scmp.eq.s32.totalorder %s32, 1
      %p113 = por %p111, %p112
      %p114 = scmp.ne.s32.totalorder %s106, %s109
      %p115 = scmp.eq.s32.totalorder %s32, 0
      %p116 = por %p114, %p115
      %p117 = scmp.ne.s32.totalorder %s106, %s109
      %p118 = scmp.eq.s32.totalorder %s37, 1
      %p119 = por %p117, %p118
      %p120 = scmp.ne.s32.totalorder %s109, %s110
      %p121 = scmp.eq.s32.totalorder %s37, 0
      %p122 = por %p120, %p121
      %p123 = scmp.ne.s32.totalorder %s109, %s110
      %p124 = scmp.eq.s32.totalorder %s38, 1
      %p125 = por %p123, %p124
      %p127 = scmp.ne.s32.totalorder %s110, %s126
      %p128 = scmp.eq.s32.totalorder %s38, 0
      %p129 = por %p127, %p128
      %s130 = ssub.s32 %s40, %s47
      %p131 = scmp.eq.s32.totalorder %s130, 0
      %s133 = sadd.s32 %s132, 1
      %s134 = scalar_select %p131, %s132, %s133
      %p137 = pneg %p131
      %p138 = scmp.eq.s32.totalorder %s32, 1
      %p139 = por %p137, %p138
      %p140 = scmp.ne.s32.totalorder %s132, %s135
      %p141 = scmp.eq.s32.totalorder %s32, 0
      %p142 = por %p140, %p141
      %p143 = scmp.ne.s32.totalorder %s132, %s135
      %p144 = scmp.eq.s32.totalorder %s37, 1
      %p145 = por %p143, %p144
      %p146 = scmp.ne.s32.totalorder %s135, %s136
      %p147 = scmp.eq.s32.totalorder %s37, 0
      %p148 = por %p146, %p147
      %p149 = scmp.ne.s32.totalorder %s135, %s136
      %p150 = scmp.eq.s32.totalorder %s38, 1
      %p151 = por %p149, %p150
      %p153 = scmp.ne.s32.totalorder %s136, %s152
      %p154 = scmp.eq.s32.totalorder %s38, 0
      %p155 = por %p153, %p154
      %s156 = ssub.s32 %s40, %s47
      %p157 = scmp.eq.s32.totalorder %s156, 0
      %s159 = sadd.s32 %s158, 1
      %s160 = scalar_select %p157, %s158, %s159
      %p163 = pneg %p157
      %p164 = scmp.eq.s32.totalorder %s32, 1
      %p165 = por %p163, %p164
      %p166 = scmp.ne.s32.totalorder %s158, %s161
      %p167 = scmp.eq.s32.totalorder %s32, 0
      %p168 = por %p166, %p167
      %p169 = scmp.ne.s32.totalorder %s158, %s161
      %p170 = scmp.eq.s32.totalorder %s37, 1
      %p171 = por %p169, %p170
      %p172 = scmp.ne.s32.totalorder %s161, %s162
      %p173 = scmp.eq.s32.totalorder %s37, 0
      %p174 = por %p172, %p173
      %p175 = scmp.ne.s32.totalorder %s161, %s162
      %p176 = scmp.eq.s32.totalorder %s38, 1
      %p177 = por %p175, %p176
      %p179 = scmp.ne.s32.totalorder %s162, %s178
      %p180 = scmp.eq.s32.totalorder %s38, 0
      %p181 = por %p179, %p180
      %s182 = ssub.s32 %s40, %s47
      %p183 = scmp.eq.s32.totalorder %s182, 0
      %s185 = sadd.s32 %s184, 1
      %s186 = scalar_select %p183, %s184, %s185
      %p189 = pneg %p183
      %p190 = scmp.eq.s32.totalorder %s32, 1
      %p191 = por %p189, %p190
      %p192 = scmp.ne.s32.totalorder %s184, %s187
      %p193 = scmp.eq.s32.totalorder %s32, 0
      %p194 = por %p192, %p193
      %p195 = scmp.ne.s32.totalorder %s184, %s187
      %p196 = scmp.eq.s32.totalorder %s37, 1
      %p197 = por %p195, %p196
      %p198 = scmp.ne.s32.totalorder %s187, %s188
      %p199 = scmp.eq.s32.totalorder %s37, 0
      %p200 = por %p198, %p199
      %p201 = scmp.ne.s32.totalorder %s187, %s188
      %p202 = scmp.eq.s32.totalorder %s38, 1
      %p203 = por %p201, %p202
      %p205 = scmp.ne.s32.totalorder %s188, %s204
      %p206 = scmp.eq.s32.totalorder %s38, 0
      %p207 = por %p205, %p206
      %s208 = ssub.s32 %s40, %s47
      %p209 = scmp.eq.s32.totalorder %s208, 0
      %s211 = sadd.s32 %s210, 1
      %s212 = scalar_select %p209, %s210, %s211
      %p215 = pneg %p209
      %p216 = scmp.eq.s32.totalorder %s32, 1
      %p217 = por %p215, %p216
      %p218 = scmp.ne.s32.totalorder %s210, %s213
      %p219 = scmp.eq.s32.totalorder %s32, 0
      %p220 = por %p218, %p219
      %p221 = scmp.ne.s32.totalorder %s210, %s213
      %p222 = scmp.eq.s32.totalorder %s37, 1
      %p223 = por %p221, %p222
      %p224 = scmp.ne.s32.totalorder %s213, %s214
      %p225 = scmp.eq.s32.totalorder %s37, 0
      %p226 = por %p224, %p225
      %p227 = scmp.ne.s32.totalorder %s213, %s214
      %p228 = scmp.eq.s32.totalorder %s38, 1
      %p229 = por %p227, %p228
      %p231 = scmp.ne.s32.totalorder %s214, %s230
      %p232 = scmp.eq.s32.totalorder %s38, 0
      %p233 = por %p231, %p232
      %s234 = ssub.s32 %s40, %s47
      %p235 = scmp.eq.s32.totalorder %s234, 0
      %s237 = sadd.s32 %s236, 1
      %s238 = scalar_select %p235, %s236, %s237
      %p241 = pneg %p235
      %p242 = scmp.eq.s32.totalorder %s32, 1
      %p243 = por %p241, %p242
      %p244 = scmp.ne.s32.totalorder %s236, %s239
      %p245 = scmp.eq.s32.totalorder %s32, 0
      %p246 = por %p244, %p245
      %p247 = scmp.ne.s32.totalorder %s236, %s239
      %p248 = scmp.eq.s32.totalorder %s37, 1
      %p249 = por %p247, %p248
      %p250 = scmp.ne.s32.totalorder %s239, %s240
      %p251 = scmp.eq.s32.totalorder %s37, 0
      %p252 = por %p250, %p251
      %p253 = scmp.ne.s32.totalorder %s239, %s240
      %p254 = scmp.eq.s32.totalorder %s38, 1
      %p255 = por %p253, %p254
      %p257 = scmp.ne.s32.totalorder %s240, %s256
      %p258 = scmp.eq.s32.totalorder %s38, 0
      %p259 = por %p257, %p258
      %s260 = ssub.s32 %s40, %s47
      %p261 = scmp.eq.s32.totalorder %s260, 0
      %s263 = sadd.s32 %s262, 1
      %s264 = scalar_select %p261, %s262, %s263
      %p267 = pneg %p261
      %p268 = scmp.eq.s32.totalorder %s32, 1
      %p269 = por %p267, %p268
      %p270 = scmp.ne.s32.totalorder %s262, %s265
      %p271 = scmp.eq.s32.totalorder %s32, 0
      %p272 = por %p270, %p271
      %p273 = scmp.ne.s32.totalorder %s262, %s265
      %p274 = scmp.eq.s32.totalorder %s37, 1
      %p275 = por %p273, %p274
      %p276 = scmp.ne.s32.totalorder %s265, %s266
      %p277 = scmp.eq.s32.totalorder %s37, 0
      %p278 = por %p276, %p277
      %p279 = scmp.ne.s32.totalorder %s265, %s266
      %p280 = scmp.eq.s32.totalorder %s38, 1
      %p281 = por %p279, %p280
      %p283 = scmp.ne.s32.totalorder %s266, %s282
      %p284 = scmp.eq.s32.totalorder %s38, 0
      %p285 = por %p283, %p284
      %s286 = ssub.s32 %s40, %s47
      %p287 = scmp.eq.s32.totalorder %s286, 0
      %s289 = sadd.s32 %s288, 1
      %s290 = scalar_select %p287, %s288, %s289
      %p293 = pneg %p287
      %p294 = scmp.eq.s32.totalorder %s32, 1
      %p295 = por %p293, %p294
      %p296 = scmp.ne.s32.totalorder %s288, %s291
      %p297 = scmp.eq.s32.totalorder %s32, 0
      %p298 = por %p296, %p297
      %p299 = scmp.ne.s32.totalorder %s288, %s291
      %p300 = scmp.eq.s32.totalorder %s37, 1
      %p301 = por %p299, %p300
      %p302 = scmp.ne.s32.totalorder %s291, %s292
      %p303 = scmp.eq.s32.totalorder %s37, 0
      %p304 = por %p302, %p303
      %p305 = scmp.ne.s32.totalorder %s291, %s292
      %p306 = scmp.eq.s32.totalorder %s38, 1
      %p307 = por %p305, %p306
      %p309 = scmp.ne.s32.totalorder %s292, %s308
      %p310 = scmp.eq.s32.totalorder %s38, 0
      %p311 = por %p309, %p310
      %s312 = ssub.s32 %s40, %s47
      %p313 = scmp.eq.s32.totalorder %s312, 0
      %s315 = sadd.s32 %s314, 1
      %s316 = scalar_select %p313, %s314, %s315
      %p319 = pneg %p313
      %p320 = scmp.eq.s32.totalorder %s32, 1
      %p321 = por %p319, %p320
      %p322 = scmp.ne.s32.totalorder %s314, %s317
      %p323 = scmp.eq.s32.totalorder %s32, 0
      %p324 = por %p322, %p323
      %p325 = scmp.ne.s32.totalorder %s314, %s317
      %p326 = scmp.eq.s32.totalorder %s37, 1
      %p327 = por %p325, %p326
      %p328 = scmp.ne.s32.totalorder %s317, %s318
      %p329 = scmp.eq.s32.totalorder %s37, 0
      %p330 = por %p328, %p329
      %p331 = scmp.ne.s32.totalorder %s317, %s318
      %p332 = scmp.eq.s32.totalorder %s38, 1
      %p333 = por %p331, %p332
      %p335 = scmp.ne.s32.totalorder %s318, %s334
      %p336 = scmp.eq.s32.totalorder %s38, 0
      %p337 = por %p335, %p336
      %s338 = ssub.s32 %s40, %s47
      %p339 = scmp.eq.s32.totalorder %s338, 0
      %s341 = sadd.s32 %s340, 1
      %s342 = scalar_select %p339, %s340, %s341
      %p345 = pneg %p339
      %p346 = scmp.eq.s32.totalorder %s32, 1
      %p347 = por %p345, %p346
      %p348 = scmp.ne.s32.totalorder %s340, %s343
      %p349 = scmp.eq.s32.totalorder %s32, 0
      %p350 = por %p348, %p349
      %p351 = scmp.ne.s32.totalorder %s340, %s343
      %p352 = scmp.eq.s32.totalorder %s37, 1
      %p353 = por %p351, %p352
      %p354 = scmp.ne.s32.totalorder %s343, %s344
      %p355 = scmp.eq.s32.totalorder %s37, 0
      %p356 = por %p354, %p355
      %p357 = scmp.ne.s32.totalorder %s343, %s344
      %p358 = scmp.eq.s32.totalorder %s38, 1
      %p359 = por %p357, %p358
      %p361 = scmp.ne.s32.totalorder %s344, %s360
      %p362 = scmp.eq.s32.totalorder %s38, 0
      %p363 = por %p361, %p362
      %s364 = ssub.s32 %s40, %s47
      %p365 = scmp.eq.s32.totalorder %s364, 0
      %s367 = sadd.s32 %s366, 1
      %s368 = scalar_select %p365, %s366, %s367
      %p371 = pneg %p365
      %p372 = scmp.eq.s32.totalorder %s32, 1
      %p373 = por %p371, %p372
      %p374 = scmp.ne.s32.totalorder %s366, %s369
      %p375 = scmp.eq.s32.totalorder %s32, 0
      %p376 = por %p374, %p375
      %p377 = scmp.ne.s32.totalorder %s366, %s369
      %p378 = scmp.eq.s32.totalorder %s37, 1
      %p379 = por %p377, %p378
      %p380 = scmp.ne.s32.totalorder %s369, %s370
      %p381 = scmp.eq.s32.totalorder %s37, 0
      %p382 = por %p380, %p381
      %p383 = scmp.ne.s32.totalorder %s369, %s370
      %p384 = scmp.eq.s32.totalorder %s38, 1
      %p385 = por %p383, %p384
      %p387 = scmp.ne.s32.totalorder %s370, %s386
      %p388 = scmp.eq.s32.totalorder %s38, 0
      %p389 = por %p387, %p388
      %s390 = ssub.s32 %s40, %s47
      %p391 = scmp.eq.s32.totalorder %s390, 0
      %s393 = sadd.s32 %s392, 1
      %s394 = scalar_select %p391, %s392, %s393
      %p397 = pneg %p391
      %p398 = scmp.eq.s32.totalorder %s32, 1
      %p399 = por %p397, %p398
      %p400 = scmp.ne.s32.totalorder %s392, %s395
      %p401 = scmp.eq.s32.totalorder %s32, 0
      %p402 = por %p400, %p401
      %p403 = scmp.ne.s32.totalorder %s392, %s395
      %p404 = scmp.eq.s32.totalorder %s37, 1
      %p405 = por %p403, %p404
      %p406 = scmp.ne.s32.totalorder %s395, %s396
      %p407 = scmp.eq.s32.totalorder %s37, 0
      %p408 = por %p406, %p407
      %p409 = scmp.ne.s32.totalorder %s395, %s396
      %p410 = scmp.eq.s32.totalorder %s38, 1
      %p411 = por %p409, %p410
      %p413 = scmp.ne.s32.totalorder %s396, %s412
      %p414 = scmp.eq.s32.totalorder %s38, 0
      %p415 = por %p413, %p414
      %s417 = sadd.s32 %s416, 1
      %p420 = scmp.eq.s32.totalorder %s32, 1
      %p421 = scmp.ne.s32.totalorder %s416, %s418
      %p422 = scmp.eq.s32.totalorder %s32, 0
      %p423 = por %p421, %p422
      %p424 = scmp.ne.s32.totalorder %s416, %s418
      %p425 = scmp.eq.s32.totalorder %s37, 1
      %p426 = por %p424, %p425
      %p427 = scmp.ne.s32.totalorder %s418, %s419
      %p428 = scmp.eq.s32.totalorder %s37, 0
      %p429 = por %p427, %p428
      %p430 = scmp.ne.s32.totalorder %s418, %s419
      %p431 = scmp.eq.s32.totalorder %s38, 1
      %p432 = por %p430, %p431
      %p434 = scmp.ne.s32.totalorder %s419, %s433
      %p435 = scmp.eq.s32.totalorder %s38, 0
      %p436 = por %p434, %p435
      %s438 = sadd.s32 %s437, 1
      %p441 = scmp.eq.s32.totalorder %s32, 1
      %p442 = scmp.ne.s32.totalorder %s437, %s439
      %p443 = scmp.eq.s32.totalorder %s32, 0
      %p444 = por %p442, %p443
      %p445 = scmp.ne.s32.totalorder %s437, %s439
      %p446 = scmp.eq.s32.totalorder %s37, 1
      %p447 = por %p445, %p446
      %p448 = scmp.ne.s32.totalorder %s439, %s440
      %p449 = scmp.eq.s32.totalorder %s37, 0
      %p450 = por %p448, %p449
      %p451 = scmp.ne.s32.totalorder %s439, %s440
      %p452 = scmp.eq.s32.totalorder %s38, 1
      %p453 = por %p451, %p452
      %p455 = scmp.ne.s32.totalorder %s440, %s454
      %p456 = scmp.eq.s32.totalorder %s38, 0
      %p457 = por %p455, %p456
      %s458 = ssub.s32 %s39, %s51
      %p459 = scmp.eq.s32.totalorder %s458, 0
      %s461 = sadd.s32 %s460, 1
      %s462 = scalar_select %p459, %s460, %s461
      %p465 = pneg %p459
      %p466 = scmp.eq.s32.totalorder %s32, 1
      %p467 = por %p465, %p466
      %p468 = scmp.ne.s32.totalorder %s460, %s463
      %p469 = scmp.eq.s32.totalorder %s32, 0
      %p470 = por %p468, %p469
      %p471 = scmp.ne.s32.totalorder %s460, %s463
      %p472 = scmp.eq.s32.totalorder %s37, 1
      %p473 = por %p471, %p472
      %p474 = scmp.ne.s32.totalorder %s463, %s464
      %p475 = scmp.eq.s32.totalorder %s37, 0
      %p476 = por %p474, %p475
      %p477 = scmp.ne.s32.totalorder %s463, %s464
      %p478 = scmp.eq.s32.totalorder %s38, 1
      %p479 = por %p477, %p478
      %p481 = scmp.ne.s32.totalorder %s464, %s480
      %p482 = scmp.eq.s32.totalorder %s38, 0
      %p483 = por %p481, %p482
      %s484 = ssub.s32 %s39, %s51
      %p485 = scmp.eq.s32.totalorder %s484, 0
      %s487 = sadd.s32 %s486, 1
      %s488 = scalar_select %p485, %s486, %s487
      %p491 = pneg %p485
      %p492 = scmp.eq.s32.totalorder %s32, 1
      %p493 = por %p491, %p492
      %p494 = scmp.ne.s32.totalorder %s486, %s489
      %p495 = scmp.eq.s32.totalorder %s32, 0
      %p496 = por %p494, %p495
      %p497 = scmp.ne.s32.totalorder %s486, %s489
      %p498 = scmp.eq.s32.totalorder %s37, 1
      %p499 = por %p497, %p498
      %p500 = scmp.ne.s32.totalorder %s489, %s490
      %p501 = scmp.eq.s32.totalorder %s37, 0
      %p502 = por %p500, %p501
      %p503 = scmp.ne.s32.totalorder %s489, %s490
      %p504 = scmp.eq.s32.totalorder %s38, 1
      %p505 = por %p503, %p504
      %p507 = scmp.ne.s32.totalorder %s490, %s506
      %p508 = scmp.eq.s32.totalorder %s38, 0
      %p509 = por %p507, %p508
      %p510 = scmp.le.s32.totalorder 1, %s32
      %p511 = scmp.lt.s32.totalorder %s32, 3
      %p512 = pnand %p510, %p511
      %p513 = pneg %p512
      // Predicated region
      $region9: #{bert_forward.3} parent=5 // pred_check
        _
      $region10: #{bert_forward.3} parent=5 // pred_check_branch
        %515 = sbr.rel (%p512) target = $region12
      $region11: #{bert_forward.3} parent=5 // pred_region
        %s516 = ssub.s32 %s32, 1
        // Predicated region
        $region13: #{bert_forward.3} parent=11 // pred_check
          %p517 = pneg %p70
        $region14: #{bert_forward.3} parent=11 // pred_check_branch
          %519 = sbr.rel (%p517) target = $region16
        $region15: #{bert_forward.3} parent=11 // pred_region
          %s520 = smul.u32 2, %s41
          %p521 = scmp.lt.s32.totalorder %s520, 1
          %s522 = scalar_select %p521, %s520, 1
          %s523 = smul.addr %s522, 4
          %s524 = scalar_lea.vmem %s0, %s523
          %s525 = smul.u32 2, %s41
        $region16: #{bert_forward.3} parent=11 // pred_fallthru
          _
        // Predicated region
        $region17: #{bert_forward.3} parent=11 // pred_check
          %p526 = pneg %p96
        $region18: #{bert_forward.3} parent=11 // pred_check_branch
          %528 = sbr.rel (%p526) target = $region20
        $region19: #{bert_forward.3} parent=11 // pred_region
          %p529 = scmp.lt.s32.totalorder %s41, 0
          %s530 = scalar_select %p529, %s41, 0
          %s531 = smul.addr %s530, 2
          %s532 = scalar_lea.vmem %s1, %s531
        $region20: #{bert_forward.3} parent=11 // pred_fallthru
          _
        // Predicated region
        $region21: #{bert_forward.3} parent=11 // pred_check
          %p533 = pneg %p429
        $region22: #{bert_forward.3} parent=11 // pred_check_branch
          %535 = sbr.rel (%p533) target = $region24
        $region23: #{bert_forward.3} parent=11 // pred_region
          _
        $region24: #{bert_forward.3} parent=11 // pred_fallthru
          _
        // Predicated region
        $region25: #{bert_forward.3} parent=11 // pred_check
          %p536 = pneg %p450
        $region26: #{bert_forward.3} parent=11 // pred_check_branch
          %538 = sbr.rel (%p536) target = $region28
        $region27: #{bert_forward.3} parent=11 // pred_region
          %s540 = ssub.s32 16, 16
          %541 = vsyncadd [#allocation10], %s540
          %s543 = sshll.u32 [#allocation9], 4
          %s544 = int_to_ptr.vmem [resolvable:$true] %s543
          %546 = dma.hbm_to_vmem [thread:$0]  %s15, 16, %s544, [#allocation10]
        $region28: #{bert_forward.3} parent=11 // pred_fallthru
          _
      $region12: #{bert_forward.3} parent=5 // pred_fallthru
        _
      %p547 = scmp.lt.s32.totalorder %s32, 2
      // Predicated region
      $region29: #{bert_forward.3} parent=5 // pred_check
        %p548 = pneg %p547
      $region30: #{bert_forward.3} parent=5 // pred_check_branch
        %550 = sbr.rel (%p548) target = $region32
      $region31: #{bert_forward.3} parent=5 // pred_region
        // Predicated region
        $region33: #{bert_forward.3} parent=31 // pred_check
          %p551 = pneg %p116
        $region34: #{bert_forward.3} parent=31 // pred_check_branch
          %553 = sbr.rel (%p551) target = $region36
        $region35: #{bert_forward.3} parent=31 // pred_region
          %s554 = sand.u32 %s106, 1
          %s555 = scalar_lea.sflag [#allocation4], %s554
          %s556 = sand.u32 %s106, 1
          %s557 = smul.addr %s556, 192
          %s558 = scalar_lea.vmem [#allocation3], %s557
          %s560 = ssub.s32 3072, 3072
          %561 = vsyncadd %s555, %s560
          %s562 = smul.addr %s40, 48
          %s563 = smul.addr %s562, 64
          %s564 = scalar_lea.hbm %s2, %s563
          %s565 = sshll.u32 %s558, 4
          %s566 = int_to_ptr.vmem [resolvable:$true] %s565
          %571 = dma.hbm_to_vmem [thread:$0]  %s564, 3072, %s566, %s555, 192, 192, 12
        $region36: #{bert_forward.3} parent=31 // pred_fallthru
          _
        // Predicated region
        $region37: #{bert_forward.3} parent=31 // pred_check
          %p572 = pneg %p142
        $region38: #{bert_forward.3} parent=31 // pred_check_branch
          %574 = sbr.rel (%p572) target = $region40
        $region39: #{bert_forward.3} parent=31 // pred_region
          %p575 = scmp.lt.s32.totalorder %s40, 1
          %s576 = scalar_select %p575, %s40, 1
          %s577 = smul.addr %s576, 3
          %s578 = scalar_lea.vmem %s3, %s577
        $region40: #{bert_forward.3} parent=31 // pred_fallthru
          _
        // Predicated region
        $region41: #{bert_forward.3} parent=31 // pred_check
          %p579 = pneg %p168
        $region42: #{bert_forward.3} parent=31 // pred_check_branch
          %581 = sbr.rel (%p579) target = $region44
        $region43: #{bert_forward.3} parent=31 // pred_region
          %p582 = scmp.lt.s32.totalorder %s40, 1
          %s583 = scalar_select %p582, %s40, 1
          %s584 = smul.addr %s583, 16
          %s585 = smul.addr %s584, 4
          %s586 = scalar_lea.vmem %s4, %s585
        $region44: #{bert_forward.3} parent=31 // pred_fallthru
          _
        // Predicated region
        $region45: #{bert_forward.3} parent=31 // pred_check
          %p587 = pneg %p194
        $region46: #{bert_forward.3} parent=31 // pred_check_branch
          %589 = sbr.rel (%p587) target = $region48
        $region47: #{bert_forward.3} parent=31 // pred_region
          %p590 = scmp.lt.s32.totalorder %s40, 1
          %s591 = scalar_select %p590, %s40, 1
          %s592 = scalar_lea.vmem %s5, %s591
        $region48: #{bert_forward.3} parent=31 // pred_fallthru
          _
        // Predicated region
        $region49: #{bert_forward.3} parent=31 // pred_check
          %p593 = pneg %p220
        $region50: #{bert_forward.3} parent=31 // pred_check_branch
          %595 = sbr.rel (%p593) target = $region52
        $region51: #{bert_forward.3} parent=31 // pred_region
          %p596 = scmp.lt.s32.totalorder %s40, 1
          %s597 = scalar_select %p596, %s40, 1
          %s598 = scalar_lea.vmem %s6, %s597
        $region52: #{bert_forward.3} parent=31 // pred_fallthru
          _
        // Predicated region
        $region53: #{bert_forward.3} parent=31 // pred_check
          %p599 = pneg %p246
        $region54: #{bert_forward.3} parent=31 // pred_check_branch
          %601 = sbr.rel (%p599) target = $region56
        $region55: #{bert_forward.3} parent=31 // pred_region
          %p602 = scmp.lt.s32.totalorder %s40, 1
          %s603 = scalar_select %p602, %s40, 1
          %s604 = scalar_lea.vmem %s7, %s603
        $region56: #{bert_forward.3} parent=31 // pred_fallthru
          _
        // Predicated region
        $region57: #{bert_forward.3} parent=31 // pred_check
          %p605 = pneg %p272
        $region58: #{bert_forward.3} parent=31 // pred_check_branch
          %607 = sbr.rel (%p605) target = $region60
        $region59: #{bert_forward.3} parent=31 // pred_region
          %s608 = sand.u32 %s32, 1
          %s609 = scalar_lea.sflag [#allocation7], %s608
          %s610 = sand.u32 %s262, 1
          %s611 = smul.addr %s610, 128
          %s612 = scalar_lea.vmem [#allocation6], %s611
          %s614 = ssub.s32 2048, 2048
          %615 = vsyncadd %s609, %s614
          %s616 = smul.addr %s40, 32
          %s617 = smul.addr %s616, 64
          %s618 = scalar_lea.hbm %s8, %s617
          %s619 = sshll.u32 %s612, 4
          %s620 = int_to_ptr.vmem [resolvable:$true] %s619
          %625 = dma.hbm_to_vmem [thread:$0]  %s618, 2048, %s620, %s609, 128, 128, 8
        $region60: #{bert_forward.3} parent=31 // pred_fallthru
          _
        // Predicated region
        $region61: #{bert_forward.3} parent=31 // pred_check
          %p626 = pneg %p298
        $region62: #{bert_forward.3} parent=31 // pred_check_branch
          %628 = sbr.rel (%p626) target = $region64
        $region63: #{bert_forward.3} parent=31 // pred_region
          %p629 = scmp.lt.s32.totalorder %s40, 1
          %s630 = scalar_select %p629, %s40, 1
          %s631 = smul.addr %s630, 2
          %s632 = scalar_lea.vmem %s9, %s631
        $region64: #{bert_forward.3} parent=31 // pred_fallthru
          _
        // Predicated region
        $region65: #{bert_forward.3} parent=31 // pred_check
          %p633 = pneg %p324
        $region66: #{bert_forward.3} parent=31 // pred_check_branch
          %635 = sbr.rel (%p633) target = $region68
        $region67: #{bert_forward.3} parent=31 // pred_region
          %s636 = sand.u32 %s32, 1
          %s637 = scalar_lea.sflag [#allocation7], %s636
          %s638 = sand.u32 %s314, 1
          %s639 = smul.addr %s638, 128
          %s640 = scalar_lea.vmem [#allocation8], %s639
          %s642 = ssub.s32 2048, 2048
          %643 = vsyncadd %s637, %s642
          %s644 = smul.addr %s40, 32
          %s645 = smul.addr %s644, 64
          %s646 = scalar_lea.hbm %s10, %s645
          %s647 = sshll.u32 %s640, 4
          %s648 = int_to_ptr.vmem [resolvable:$true] %s647
          %653 = dma.hbm_to_vmem [thread:$0]  %s646, 2048, %s648, %s637, 64, 64, 4
        $region68: #{bert_forward.3} parent=31 // pred_fallthru
          _
        // Predicated region
        $region69: #{bert_forward.3} parent=31 // pred_check
          %p654 = pneg %p350
        $region70: #{bert_forward.3} parent=31 // pred_check_branch
          %656 = sbr.rel (%p654) target = $region72
        $region71: #{bert_forward.3} parent=31 // pred_region
          %p657 = scmp.lt.s32.totalorder %s40, 1
          %s658 = scalar_select %p657, %s40, 1
          %s659 = scalar_lea.vmem %s11, %s658
        $region72: #{bert_forward.3} parent=31 // pred_fallthru
          _
        // Predicated region
        $region73: #{bert_forward.3} parent=31 // pred_check
          %p660 = pneg %p376
        $region74: #{bert_forward.3} parent=31 // pred_check_branch
          %662 = sbr.rel (%p660) target = $region76
        $region75: #{bert_forward.3} parent=31 // pred_region
          %p663 = scmp.lt.s32.totalorder %s40, 1
          %s664 = scalar_select %p663, %s40, 1
          %s665 = scalar_lea.vmem %s12, %s664
        $region76: #{bert_forward.3} parent=31 // pred_fallthru
          _
        // Predicated region
        $region77: #{bert_forward.3} parent=31 // pred_check
          %p666 = pneg %p402
        $region78: #{bert_forward.3} parent=31 // pred_check_branch
          %668 = sbr.rel (%p666) target = $region80
        $region79: #{bert_forward.3} parent=31 // pred_region
          %p669 = scmp.lt.s32.totalorder %s40, 1
          %s670 = scalar_select %p669, %s40, 1
          %s671 = scalar_lea.vmem %s13, %s670
        $region80: #{bert_forward.3} parent=31 // pred_fallthru
          _
      $region32: #{bert_forward.3} parent=5 // pred_fallthru
        _
      %p672 = scmp.le.s32.totalorder 1, %s32
      %p673 = scmp.lt.s32.totalorder %s32, 3
      %p674 = pnand %p672, %p673
      %p675 = pneg %p674
      // Predicated region
      $region81: #{bert_forward.3} parent=5 // pred_check
        _
      $region82: #{bert_forward.3} parent=5 // pred_check_branch
        %677 = sbr.rel (%p674) target = $region84
      $region83: #{bert_forward.3} parent=5 // pred_region
        %s678 = ssub.s32 %s32, 1
        %s679 = sand.u32 %s109, 1
        %s680 = scalar_lea.sflag [#allocation4], %s679
        %s681 = sand.u32 %s109, 1
        %s682 = smul.addr %s681, 192
        %s683 = scalar_lea.vmem [#allocation3], %s682
        // Predicated region
        $region85: #{bert_forward.3} parent=83 // pred_check
          %p684 = pneg %p122
        $region86: #{bert_forward.3} parent=83 // pred_check_branch
          %686 = sbr.rel (%p684) target = $region88
        $region87: #{bert_forward.3} parent=83 // pred_region
          %687 = dma.done %s680, 3072
        $region88: #{bert_forward.3} parent=83 // pred_fallthru
          _
        %s688 = sand.u32 %s37, 1
        %s689 = scalar_lea.sflag [#allocation7], %s688
        %s690 = sand.u32 %s265, 1
        %s691 = smul.addr %s690, 128
        %s692 = scalar_lea.vmem [#allocation6], %s691
        // Predicated region
        $region89: #{bert_forward.3} parent=83 // pred_check
          %p693 = pneg %p278
        $region90: #{bert_forward.3} parent=83 // pred_check_branch
          %695 = sbr.rel (%p693) target = $region92
        $region91: #{bert_forward.3} parent=83 // pred_region
          %696 = dma.done %s689, 2048
        $region92: #{bert_forward.3} parent=83 // pred_fallthru
          _
        %s697 = sand.u32 %s37, 1
        %s698 = scalar_lea.sflag [#allocation7], %s697
        %s699 = sand.u32 %s317, 1
        %s700 = smul.addr %s699, 128
        %s701 = scalar_lea.vmem [#allocation8], %s700
        // Predicated region
        $region93: #{bert_forward.3} parent=83 // pred_check
          %p702 = pneg %p330
        $region94: #{bert_forward.3} parent=83 // pred_check_branch
          %704 = sbr.rel (%p702) target = $region96
        $region95: #{bert_forward.3} parent=83 // pred_region
          %705 = dma.done %s698, 2048
        $region96: #{bert_forward.3} parent=83 // pred_fallthru
          _
        // Predicated region
        $region97: #{bert_forward.3} parent=83 // pred_check
          %p706 = pneg %p450
        $region98: #{bert_forward.3} parent=83 // pred_check_branch
          %708 = sbr.rel (%p706) target = $region100
        $region99: #{bert_forward.3} parent=83 // pred_region
          %709 = dma.done [#allocation10], 16
        $region100: #{bert_forward.3} parent=83 // pred_fallthru
          _
        %s710 = smul.u32 2, %s41
        %p711 = scmp.lt.s32.totalorder %s710, 1
        %s712 = scalar_select %p711, %s710, 1
        %s713 = smul.addr %s712, 4
        %s714 = scalar_lea.vmem %s0, %s713
        %p715 = pneg %p70
        %p716 = pneg %p67
        %p717 = scmp.lt.s32.totalorder %s41, 0
        %s718 = scalar_select %p717, %s41, 0
        %s719 = smul.addr %s718, 2
        %s720 = scalar_lea.vmem %s1, %s719
        %p721 = pneg %p96
        %p722 = pneg %p93
        %s723 = sand.u32 %s109, 1
        %s724 = scalar_lea.sflag [#allocation4], %s723
        %s725 = sand.u32 %s109, 1
        %s726 = smul.addr %s725, 192
        %s727 = scalar_lea.vmem [#allocation3], %s726
        %p728 = pneg %p122
        %p729 = pneg %p119
        %p730 = scmp.lt.s32.totalorder %s42, 1
        %s731 = scalar_select %p730, %s42, 1
        %s732 = smul.addr %s731, 3
        %s733 = scalar_lea.vmem %s3, %s732
        %p734 = pneg %p148
        %p735 = pneg %p145
        %p736 = scmp.lt.s32.totalorder %s42, 1
        %s737 = scalar_select %p736, %s42, 1
        %s738 = smul.addr %s737, 16
        %s739 = smul.addr %s738, 4
        %s740 = scalar_lea.vmem %s4, %s739
        %p741 = pneg %p174
        %p742 = pneg %p171
        %p743 = scmp.lt.s32.totalorder %s42, 1
        %s744 = scalar_select %p743, %s42, 1
        %s745 = scalar_lea.vmem %s5, %s744
        %p746 = pneg %p200
        %p747 = pneg %p197
        %p748 = scmp.lt.s32.totalorder %s42, 1
        %s749 = scalar_select %p748, %s42, 1
        %s750 = scalar_lea.vmem %s6, %s749
        %p751 = pneg %p226
        %p752 = pneg %p223
        %p753 = scmp.lt.s32.totalorder %s42, 1
        %s754 = scalar_select %p753, %s42, 1
        %s755 = scalar_lea.vmem %s7, %s754
        %p756 = pneg %p252
        %p757 = pneg %p249
        %s758 = sand.u32 %s37, 1
        %s759 = scalar_lea.sflag [#allocation7], %s758
        %s760 = sand.u32 %s265, 1
        %s761 = smul.addr %s760, 128
        %s762 = scalar_lea.vmem [#allocation6], %s761
        %p763 = pneg %p278
        %p764 = pneg %p275
        %p765 = scmp.lt.s32.totalorder %s42, 1
        %s766 = scalar_select %p765, %s42, 1
        %s767 = smul.addr %s766, 2
        %s768 = scalar_lea.vmem %s9, %s767
        %p769 = pneg %p304
        %p770 = pneg %p301
        %s771 = sand.u32 %s37, 1
        %s772 = scalar_lea.sflag [#allocation7], %s771
        %s773 = sand.u32 %s317, 1
        %s774 = smul.addr %s773, 128
        %s775 = scalar_lea.vmem [#allocation8], %s774
        %p776 = pneg %p330
        %p777 = pneg %p327
        %p778 = scmp.lt.s32.totalorder %s42, 1
        %s779 = scalar_select %p778, %s42, 1
        %s780 = scalar_lea.vmem %s11, %s779
        %p781 = pneg %p356
        %p782 = pneg %p353
        %p783 = scmp.lt.s32.totalorder %s42, 1
        %s784 = scalar_select %p783, %s42, 1
        %s785 = scalar_lea.vmem %s12, %s784
        %p786 = pneg %p382
        %p787 = pneg %p379
        %p788 = scmp.lt.s32.totalorder %s42, 1
        %s789 = scalar_select %p788, %s42, 1
        %s790 = scalar_lea.vmem %s13, %s789
        %p791 = pneg %p408
        %p792 = pneg %p405
        %p793 = pneg %p429
        %p794 = pneg %p426
        %p795 = pneg %p450
        %p796 = pneg %p447
        %p797 = pneg %p476
        %p798 = pneg %p473
        %s799 = smul.u32 2, %s41
        %p800 = scmp.lt.s32.totalorder %s799, 1
        %s801 = scalar_select %p800, %s799, 1
        %s802 = smul.addr %s801, 8
        %s803 = scalar_lea.vmem %s16, %s802
        %p804 = pneg %p502
        %p805 = pneg %p499
        %s806 = smul.u32 2, %s41
        %p807 = scmp.lt.s32.totalorder %s806, 1
        %s808 = scalar_select %p807, %s806, 1
        %s809 = smul.addr %s808, 4
        %s810 = scalar_lea.vmem %s0, %s809
        %s811 = smul.u32 2, %s41
        %p812 = scmp.lt.s32.totalorder %s41, 0
        %s813 = scalar_select %p812, %s41, 0
        %s814 = smul.addr %s813, 2
        %s815 = scalar_lea.vmem %s1, %s814
        %p816 = scmp.lt.s32.totalorder %s42, 1
        %s817 = scalar_select %p816, %s42, 1
        %s818 = smul.addr %s817, 3
        %s819 = scalar_lea.vmem %s3, %s818
        %p820 = scmp.lt.s32.totalorder %s42, 1
        %s821 = scalar_select %p820, %s42, 1
        %s822 = smul.addr %s821, 16
        %s823 = smul.addr %s822, 4
        %s824 = scalar_lea.vmem %s4, %s823
        %p825 = scmp.lt.s32.totalorder %s42, 1
        %s826 = scalar_select %p825, %s42, 1
        %s827 = scalar_lea.vmem %s5, %s826
        %p828 = scmp.lt.s32.totalorder %s42, 1
        %s829 = scalar_select %p828, %s42, 1
        %s830 = scalar_lea.vmem %s6, %s829
        %p831 = scmp.lt.s32.totalorder %s42, 1
        %s832 = scalar_select %p831, %s42, 1
        %s833 = scalar_lea.vmem %s7, %s832
        %p834 = scmp.lt.s32.totalorder %s42, 1
        %s835 = scalar_select %p834, %s42, 1
        %s836 = smul.addr %s835, 2
        %s837 = scalar_lea.vmem %s9, %s836
        %p838 = scmp.lt.s32.totalorder %s42, 1
        %s839 = scalar_select %p838, %s42, 1
        %s840 = scalar_lea.vmem %s11, %s839
        %p841 = scmp.lt.s32.totalorder %s42, 1
        %s842 = scalar_select %p841, %s42, 1
        %s843 = scalar_lea.vmem %s12, %s842
        %p844 = scmp.lt.s32.totalorder %s42, 1
        %s845 = scalar_select %p844, %s42, 1
        %s846 = scalar_lea.vmem %s13, %s845
        %s847 = smul.u32 2, %s41
        %p848 = scmp.lt.s32.totalorder %s847, 1
        %s849 = scalar_select %p848, %s847, 1
        %s850 = smul.addr %s849, 8
        %s851 = scalar_lea.vmem %s16, %s850
        %s852 = smul.u32 2, %s41
        %p854 = scmp.eq.s32.totalorder %s42, 0
        // Predicated region
        $region101: #{bert_forward.3} parent=83 // pred_check
          %p855 = pneg %p854
        $region102: #{bert_forward.3} parent=83 // pred_check_branch
          %857 = sbr.rel (%p855) target = $region104
        $region103: #{bert_forward.3} parent=83 // pred_region
          %v858 = vld [vmem:[%s810] sm:$0xf]
          %v859 = vld [vmem:[%s810 + $0x4] sm:$0xf]
          %v860 = vunpack.c.l.bf16 %v858
          %v861 = vunpack.c.l.bf16 %v859
          %862 = vst [vmem:[#allocation2] sm:$0xff] %v860
          %863 = vst [vmem:[#allocation2 + $0x8] sm:$0xff] %v861
        $region104: #{bert_forward.3} parent=83 // pred_fallthru
          _
        %v864 = vld [vmem:[#allocation2] sm:$0xff]
        %v865 = vld [vmem:[#allocation2 + $0x8] sm:$0xff]
        %v866 = vpack.c.bf16 %v865, %v864
        %v867 = vld [vmem:[%s683] sm:$0xff]
        %v868 = vld [vmem:[%s683 + $0x8] sm:$0xf]
        %v869 = vld [vmem:[%s683 + $0xc] sm:$0xff]
        %v870 = vld [vmem:[%s683 + $0x14] sm:$0xf]
        %v871 = vld [vmem:[%s683 + $0x18] sm:$0xff]
        %v872 = vld [vmem:[%s683 + $0x20] sm:$0xf]
        %v873 = vld [vmem:[%s683 + $0x24] sm:$0xff]
        %v874 = vld [vmem:[%s683 + $0x2c] sm:$0xf]
        %v875 = vld [vmem:[%s683 + $0x30] sm:$0xff]
        %v876 = vld [vmem:[%s683 + $0x38] sm:$0xf]
        %v877 = vld [vmem:[%s683 + $0x3c] sm:$0xff]
        %v878 = vld [vmem:[%s683 + $0x44] sm:$0xf]
        %v879 = vld [vmem:[%s683 + $0x48] sm:$0xff]
        %v880 = vld [vmem:[%s683 + $0x50] sm:$0xf]
        %v881 = vld [vmem:[%s683 + $0x54] sm:$0xff]
        %v882 = vld [vmem:[%s683 + $0x5c] sm:$0xf]
        %v883 = vld [vmem:[%s683 + $0x60] sm:$0xff]
        %v884 = vld [vmem:[%s683 + $0x68] sm:$0xf]
        %v885 = vld [vmem:[%s683 + $0x6c] sm:$0xff]
        %v886 = vld [vmem:[%s683 + $0x74] sm:$0xf]
        %v887 = vld [vmem:[%s683 + $0x78] sm:$0xff]
        %v888 = vld [vmem:[%s683 + $0x80] sm:$0xf]
        %v889 = vld [vmem:[%s683 + $0x84] sm:$0xff]
        %v890 = vld [vmem:[%s683 + $0x8c] sm:$0xf]
        %v891 = vld [vmem:[%s683 + $0x90] sm:$0xff]
        %v892 = vld [vmem:[%s683 + $0x98] sm:$0xf]
        %v893 = vld [vmem:[%s683 + $0x9c] sm:$0xff]
        %v894 = vld [vmem:[%s683 + $0xa4] sm:$0xf]
        %v895 = vld [vmem:[%s683 + $0xa8] sm:$0xff]
        %v896 = vld [vmem:[%s683 + $0xb0] sm:$0xf]
        %v897 = vld [vmem:[%s683 + $0xb4] sm:$0xff]
        %v898 = vld [vmem:[%s683 + $0xbc] sm:$0xf]
        %v899 = vld [vmem:[%s819] sm:$0x7]
        %v901 = vlaneseq
        %v902 = vshrl.u32 %v901, 7
        %v903 = vsub.s32 0, %v902
        %v904 = vrot.slane %v899, %v903
        %v905 = vlaneseq
        %v906 = vshrl.u32 %v905, 7
        %v907 = vsub.s32 1, %v906
        %v908 = vrot.slane %v899, %v907
        %v909 = vlaneseq
        %v910 = vshrl.u32 %v909, 7
        %v911 = vsub.s32 2, %v910
        %v912 = vrot.slane %v899, %v911
        %v948 = vunpack.c.l.b16 %v867
        %v949 = vunpack.c.h.b16 %v867
        %v950 = vunpack.c.l.b16 %v868
        %v951 = vunpack.c.l.b16 %v869
        %v952 = vunpack.c.h.b16 %v869
        %v953 = vunpack.c.l.b16 %v870
        %v954 = vunpack.c.l.b16 %v871
        %v955 = vunpack.c.h.b16 %v871
        %v956 = vunpack.c.l.b16 %v872
        %v957 = vunpack.c.l.b16 %v873
        %v958 = vunpack.c.h.b16 %v873
        %v959 = vunpack.c.l.b16 %v874
        %v960 = vunpack.c.l.b16 %v875
        %v961 = vunpack.c.h.b16 %v875
        %v962 = vunpack.c.l.b16 %v876
        %v963 = vunpack.c.l.b16 %v877
        %v964 = vunpack.c.h.b16 %v877
        %v965 = vunpack.c.l.b16 %v878
        %v966 = vunpack.c.l.b16 %v879
        %v967 = vunpack.c.h.b16 %v879
        %v968 = vunpack.c.l.b16 %v880
        %v969 = vunpack.c.l.b16 %v881
        %v970 = vunpack.c.h.b16 %v881
        %v971 = vunpack.c.l.b16 %v882
        %v972 = vunpack.c.l.b16 %v883
        %v973 = vunpack.c.h.b16 %v883
        %v974 = vunpack.c.l.b16 %v884
        %v975 = vunpack.c.l.b16 %v885
        %v976 = vunpack.c.h.b16 %v885
        %v977 = vunpack.c.l.b16 %v886
        %v978 = vunpack.c.l.b16 %v887
        %v979 = vunpack.c.h.b16 %v887
        %v980 = vunpack.c.l.b16 %v888
        %v981 = vunpack.c.l.b16 %v889
        %v982 = vunpack.c.h.b16 %v889
        %v983 = vunpack.c.l.b16 %v890
        %v984 = vunpack.c.l.b16 %v891
        %v985 = vunpack.c.h.b16 %v891
        %v986 = vunpack.c.l.b16 %v892
        %v987 = vunpack.c.l.b16 %v893
        %v988 = vunpack.c.h.b16 %v893
        %v989 = vunpack.c.l.b16 %v894
        %v990 = vunpack.c.l.b16 %v895
        %v991 = vunpack.c.h.b16 %v895
        %v992 = vunpack.c.l.b16 %v896
        %v993 = vunpack.c.l.b16 %v897
        %v994 = vunpack.c.h.b16 %v897
        %v995 = vunpack.c.l.b16 %v898
        %v996 = vpack.c.b16 %v951, %v948
        %v997 = vpack.c.b16 %v952, %v949
        %v998 = vpack.c.b16 %v953, %v950
        %v999 = vpack.c.b16 %v957, %v954
        %v1000 = vpack.c.b16 %v958, %v955
        %v1001 = vpack.c.b16 %v959, %v956
        %v1002 = vpack.c.b16 %v963, %v960
        %v1003 = vpack.c.b16 %v964, %v961
        %v1004 = vpack.c.b16 %v965, %v962
        %v1005 = vpack.c.b16 %v969, %v966
        %v1006 = vpack.c.b16 %v970, %v967
        %v1007 = vpack.c.b16 %v971, %v968
        %v1008 = vpack.c.b16 %v975, %v972
        %v1009 = vpack.c.b16 %v976, %v973
        %v1010 = vpack.c.b16 %v977, %v974
        %v1011 = vpack.c.b16 %v981, %v978
        %v1012 = vpack.c.b16 %v982, %v979
        %v1013 = vpack.c.b16 %v983, %v980
        %v1014 = vpack.c.b16 %v987, %v984
        %v1015 = vpack.c.b16 %v988, %v985
        %v1016 = vpack.c.b16 %v989, %v986
        %v1017 = vpack.c.b16 %v993, %v990
        %v1018 = vpack.c.b16 %v994, %v991
        %v1019 = vpack.c.b16 %v995, %v992
        %1044 = vmatprep.subr.bf16.mxu0 %v997
        %1045 = vmatpush1.bf16.msra.mxu0 %v996
        %1046 = vmatprep.subr.bf16.mxu0 %v1000
        %1047 = vmatpush1.bf16.msra.mxu0 %v999
        %1048 = vmatprep.subr.bf16.mxu0 %v1003
        %1049 = vmatpush1.bf16.msra.mxu0 %v1002
        %1050 = vmatprep.subr.bf16.mxu0 %v1006
        %1051 = vmatpush1.bf16.msra.mxu0 %v1005
        %1052 = vmatprep.subr.bf16.mxu0 %v1009
        %1053 = vmatpush1.bf16.msra.mxu0 %v1008
        %1054 = vmatprep.subr.bf16.mxu0 %v1012
        %1055 = vmatpush1.bf16.msra.mxu0 %v1011
        %1056 = vmatprep.subr.bf16.mxu0 %v1015
        %1057 = vmatpush1.bf16.msra.mxu0 %v1014
        %1058 = vmatprep.subr.bf16.mxu0 %v1018
        %1059 = vmatpush1.bf16.msra.mxu0 %v1017
        %1060 = vmatprep.subr.bf16.mxu0 0
        %1061 = vmatpush1.bf16.msra.mxu0 0
        %1062 = vmatprep.subr.bf16.mxu0 0
        %1063 = vmatpush1.bf16.msra.mxu0 0
        %1064 = vmatprep.subr.bf16.mxu0 0
        %1065 = vmatpush1.bf16.msra.mxu0 0
        %1066 = vmatprep.subr.bf16.mxu0 0
        %1067 = vmatpush1.bf16.msra.mxu0 0
        %1068 = vmatprep.subr.bf16.mxu0 0
        %1069 = vmatpush1.bf16.msra.mxu0 0
        %1070 = vmatprep.subr.bf16.mxu0 0
        %1071 = vmatpush1.bf16.msra.mxu0 0
        %1072 = vmatprep.subr.bf16.mxu0 0
        %1073 = vmatpush1.bf16.msra.mxu0 0
        %1074 = vmatprep.subr.bf16.mxu0 0
        %1075 = vmatpush1.bf16.msra.mxu0 0
        %1076 = vmatprep.mubr.bf16.mxu0 0
        %1077 = vmatmul.mubr.bf16.gmra.mrb[0].mxu0 %v866
        %v1078 = vpop.f32.mrb[0].mxu0
        %v1079 = vadd.f32 %v904, %v1078
        %v1080 = vpop.f32.mrb[0].mxu0
        %v1081 = vadd.f32 %v908, %v1080
        %v1082 = vpop.f32.mrb[0].mxu0
        %v1083 = vadd.f32 %v904, %v1082
        %v1084 = vpop.f32.mrb[0].mxu0
        %v1085 = vadd.f32 %v908, %v1084
        %1086 = vdwg.mxu0
        %1087 = vmatprep.subr.bf16.mxu0 0
        %1088 = vmatpush1.bf16.msra.mxu0 %v998
        %1089 = vmatprep.subr.bf16.mxu0 0
        %1090 = vmatpush1.bf16.msra.mxu0 %v1001
        %1091 = vmatprep.subr.bf16.mxu0 0
        %1092 = vmatpush1.bf16.msra.mxu0 %v1004
        %1093 = vmatprep.subr.bf16.mxu0 0
        %1094 = vmatpush1.bf16.msra.mxu0 %v1007
        %1095 = vmatprep.subr.bf16.mxu0 0
        %1096 = vmatpush1.bf16.msra.mxu0 %v1010
        %1097 = vmatprep.subr.bf16.mxu0 0
        %1098 = vmatpush1.bf16.msra.mxu0 %v1013
        %1099 = vmatprep.subr.bf16.mxu0 0
        %1100 = vmatpush1.bf16.msra.mxu0 %v1016
        %1101 = vmatprep.subr.bf16.mxu0 0
        %1102 = vmatpush1.bf16.msra.mxu0 %v1019
        %1103 = vmatprep.subr.bf16.mxu0 0
        %1104 = vmatpush1.bf16.msra.mxu0 0
        %1105 = vmatprep.subr.bf16.mxu0 0
        %1106 = vmatpush1.bf16.msra.mxu0 0
        %1107 = vmatprep.subr.bf16.mxu0 0
        %1108 = vmatpush1.bf16.msra.mxu0 0
        %1109 = vmatprep.subr.bf16.mxu0 0
        %1110 = vmatpush1.bf16.msra.mxu0 0
        %1111 = vmatprep.subr.bf16.mxu0 0
        %1112 = vmatpush1.bf16.msra.mxu0 0
        %1113 = vmatprep.subr.bf16.mxu0 0
        %1114 = vmatpush1.bf16.msra.mxu0 0
        %1115 = vmatprep.subr.bf16.mxu0 0
        %1116 = vmatpush1.bf16.msra.mxu0 0
        %1117 = vmatprep.subr.bf16.mxu0 0
        %1118 = vmatpush1.bf16.msra.mxu0 0
        %1119 = vmatprep.mubr.bf16.mxu0 0
        %1120 = vmatmul.mubr.bf16.gmra.mrb[0].mxu0 %v866
        %v1121 = vpop.f32.mrb[0].mxu0
        %v1122 = vadd.f32 %v912, %v1121
        %v1123 = vpop.f32.mrb[0].mxu0
        %v1124 = vpop.f32.mrb[0].mxu0
        %v1125 = vadd.f32 %v912, %v1124
        %v1126 = vpop.f32.mrb[0].mxu0
        %1127 = vdwg.mxu0
        %v1128 = vld [vmem:[%s815] sm:$0x1]
        %v1129 = vpack.c.bf16 %v1079, %v1079
        %v1130 = vpack.c.bf16 %v1081, %v1081
        %v1131 = vlaneseq
        %v1132 = vshrl.u32 %v1131, 7
        %v1133 = vsub.s32 0, %v1132
        %v1134 = vrot.slane %v1128, %v1133
        %vm1135 = vcmask 523264
        %v1137 = vsel %vm1135, %v1129, 0
        %v1140 = vsel %vm1135, %v1130, 0
        %1142 = vmatprep.subr.bf16.mxu0 0
        %1143 = vmatpush1.bf16.xpose.msra.mxu0 %v1140
        %1144 = vmatprep.subr.bf16.mxu0 0
        %1145 = vmatpush1.bf16.xpose.msra.mxu0 0
        %1146 = vmatprep.subr.bf16.mxu0 0
        %1147 = vmatpush1.bf16.xpose.msra.mxu0 0
        %1148 = vmatprep.subr.bf16.mxu0 0
        %1149 = vmatpush1.bf16.xpose.msra.mxu0 0
        %1150 = vmatprep.subr.bf16.mxu0 0
        %1151 = vmatpush1.bf16.xpose.msra.mxu0 0
        %1152 = vmatprep.subr.bf16.mxu0 0
        %1153 = vmatpush1.bf16.xpose.msra.mxu0 0
        %1154 = vmatprep.subr.bf16.mxu0 0
        %1155 = vmatpush1.bf16.xpose.msra.mxu0 0
        %1156 = vmatprep.subr.bf16.mxu0 0
        %1157 = vmatpush1.bf16.xpose.msra.mxu0 0
        %1158 = vmatprep.subr.bf16.mxu0 0
        %1159 = vmatpush1.bf16.xpose.msra.mxu0 0
        %1160 = vmatprep.subr.bf16.mxu0 0
        %1161 = vmatpush1.bf16.xpose.msra.mxu0 0
        %1162 = vmatprep.subr.bf16.mxu0 0
        %1163 = vmatpush1.bf16.xpose.msra.mxu0 0
        %1164 = vmatprep.subr.bf16.mxu0 0
        %1165 = vmatpush1.bf16.xpose.msra.mxu0 0
        %1166 = vmatprep.subr.bf16.mxu0 0
        %1167 = vmatpush1.bf16.xpose.msra.mxu0 0
        %1168 = vmatprep.subr.bf16.mxu0 0
        %1169 = vmatpush1.bf16.xpose.msra.mxu0 0
        %1170 = vmatprep.subr.bf16.mxu0 0
        %1171 = vmatpush1.bf16.xpose.msra.mxu0 0
        %1172 = vmatprep.subr.bf16.mxu0 0
        %1173 = vmatpush1.bf16.xpose.msra.mxu0 0
        %1174 = vmatprep.mubr.bf16.mxu0 0
        %1175 = vmatmul.mubr.bf16.gmra.mrb[0].mxu0 %v1137
        %v1176 = vpop.f32.mrb[0].mxu0
        %v1177 = vadd.f32 %v1134, %v1176
        %v1178 = vpop.f32.mrb[0].mxu0
        %v1179 = vpop.f32.mrb[0].mxu0
        %v1180 = vpop.f32.mrb[0].mxu0
        %1181 = vdwg.mxu0
        %vm1182 = vcmask 64512
        %v1183 = vsel %vm1182, %v1177, -inf
        %1184 = vmax.xlane.f32.xlu0 %v1183
        %v1185 = vpop.xlane.xlu0 %1184
        %v1186 = vsub.f32 %v1177, %v1185
        %v1187 = vmul.f32 %v1186, 1.442695
        %v1188 = vpow.pop %v1187
        %v1189 = vsel %vm1182, %v1188, 0.0
        %1190 = vadd.xlane.f32.xlu0 %v1189
        %v1191 = vpop.xlane.xlu0 %1190
        %v1192 = vrcp.pop %v1191
        %v1193 = vmul.f32 %v1188, %v1192
        %v1194 = vpack.c.bf16 %v1193, %v1193
        %v1195 = vpack.c.bf16 %v1122, %v1122
        %v1197 = vsel %vm1182, %v1194, 0
        %vm1199 = vcmask 1043456
        %v1201 = vsel %vm1199, %v1195, 0
        %1203 = vmatprep.subr.bf16.mxu0 0
        %1204 = vmatpush1.bf16.msra.mxu0 %v1201
        %1205 = vmatprep.subr.bf16.mxu0 0
        %1206 = vmatpush1.bf16.msra.mxu0 0
        %1207 = vmatprep.subr.bf16.mxu0 0
        %1208 = vmatpush1.bf16.msra.mxu0 0
        %1209 = vmatprep.subr.bf16.mxu0 0
        %1210 = vmatpush1.bf16.msra.mxu0 0
        %1211 = vmatprep.subr.bf16.mxu0 0
        %1212 = vmatpush1.bf16.msra.mxu0 0
        %1213 = vmatprep.subr.bf16.mxu0 0
        %1214 = vmatpush1.bf16.msra.mxu0 0
        %1215 = vmatprep.subr.bf16.mxu0 0
        %1216 = vmatpush1.bf16.msra.mxu0 0
        %1217 = vmatprep.subr.bf16.mxu0 0
        %1218 = vmatpush1.bf16.msra.mxu0 0
        %1219 = vmatprep.subr.bf16.mxu0 0
        %1220 = vmatpush1.bf16.msra.mxu0 0
        %1221 = vmatprep.subr.bf16.mxu0 0
        %1222 = vmatpush1.bf16.msra.mxu0 0
        %1223 = vmatprep.subr.bf16.mxu0 0
        %1224 = vmatpush1.bf16.msra.mxu0 0
        %1225 = vmatprep.subr.bf16.mxu0 0
        %1226 = vmatpush1.bf16.msra.mxu0 0
        %1227 = vmatprep.subr.bf16.mxu0 0
        %1228 = vmatpush1.bf16.msra.mxu0 0
        %1229 = vmatprep.subr.bf16.mxu0 0
        %1230 = vmatpush1.bf16.msra.mxu0 0
        %1231 = vmatprep.subr.bf16.mxu0 0
        %1232 = vmatpush1.bf16.msra.mxu0 0
        %1233 = vmatprep.subr.bf16.mxu0 0
        %1234 = vmatpush1.bf16.msra.mxu0 0
        %1235 = vmatprep.mubr.bf16.mxu0 0
        %1236 = vmatmul.mubr.bf16.gmra.mrb[0].mxu0 %v1197
        %v1237 = vpop.f32.mrb[0].mxu0
        %v1238 = vadd.f32 0.0, %v1237
        %v1239 = vpop.f32.mrb[0].mxu0
        %v1240 = vpop.f32.mrb[0].mxu0
        %v1241 = vpop.f32.mrb[0].mxu0
        %1242 = vdwg.mxu0
        %1244 = vrot.lane.b32.xlu0 %v1129, 64
        %v1245 = vpop.permute.xlu0 %1244
        %1247 = vrot.lane.b32.xlu0 %v1130, 64
        %v1248 = vpop.permute.xlu0 %1247
        %v1250 = vsel %vm1135, %v1245, 0
        %v1253 = vsel %vm1135, %v1248, 0
        %1255 = vmatprep.subr.bf16.mxu0 0
        %1256 = vmatpush1.bf16.xpose.msra.mxu0 %v1253
        %1257 = vmatprep.subr.bf16.mxu0 0
        %1258 = vmatpush1.bf16.xpose.msra.mxu0 0
        %1259 = vmatprep.subr.bf16.mxu0 0
        %1260 = vmatpush1.bf16.xpose.msra.mxu0 0
        %1261 = vmatprep.subr.bf16.mxu0 0
        %1262 = vmatpush1.bf16.xpose.msra.mxu0 0
        %1263 = vmatprep.subr.bf16.mxu0 0
        %1264 = vmatpush1.bf16.xpose.msra.mxu0 0
        %1265 = vmatprep.subr.bf16.mxu0 0
        %1266 = vmatpush1.bf16.xpose.msra.mxu0 0
        %1267 = vmatprep.subr.bf16.mxu0 0
        %1268 = vmatpush1.bf16.xpose.msra.mxu0 0
        %1269 = vmatprep.subr.bf16.mxu0 0
        %1270 = vmatpush1.bf16.xpose.msra.mxu0 0
        %1271 = vmatprep.subr.bf16.mxu0 0
        %1272 = vmatpush1.bf16.xpose.msra.mxu0 0
        %1273 = vmatprep.subr.bf16.mxu0 0
        %1274 = vmatpush1.bf16.xpose.msra.mxu0 0
        %1275 = vmatprep.subr.bf16.mxu0 0
        %1276 = vmatpush1.bf16.xpose.msra.mxu0 0
        %1277 = vmatprep.subr.bf16.mxu0 0
        %1278 = vmatpush1.bf16.xpose.msra.mxu0 0
        %1279 = vmatprep.subr.bf16.mxu0 0
        %1280 = vmatpush1.bf16.xpose.msra.mxu0 0
        %1281 = vmatprep.subr.bf16.mxu0 0
        %1282 = vmatpush1.bf16.xpose.msra.mxu0 0
        %1283 = vmatprep.subr.bf16.mxu0 0
        %1284 = vmatpush1.bf16.xpose.msra.mxu0 0
        %1285 = vmatprep.subr.bf16.mxu0 0
        %1286 = vmatpush1.bf16.xpose.msra.mxu0 0
        %1287 = vmatprep.mubr.bf16.mxu0 0
        %1288 = vmatmul.mubr.bf16.gmra.mrb[0].mxu0 %v1250
        %v1289 = vpop.f32.mrb[0].mxu0
        %v1290 = vadd.f32 %v1134, %v1289
        %v1291 = vpop.f32.mrb[0].mxu0
        %v1292 = vpop.f32.mrb[0].mxu0
        %v1293 = vpop.f32.mrb[0].mxu0
        %1294 = vdwg.mxu0
        %v1295 = vsel %vm1182, %v1290, -inf
        %1296 = vmax.xlane.f32.xlu0 %v1295
        %v1297 = vpop.xlane.xlu0 %1296
        %v1298 = vsub.f32 %v1290, %v1297
        %v1299 = vmul.f32 %v1298, 1.442695
        %v1300 = vpow.pop %v1299
        %v1301 = vsel %vm1182, %v1300, 0.0
        %1302 = vadd.xlane.f32.xlu0 %v1301
        %v1303 = vpop.xlane.xlu0 %1302
        %v1304 = vrcp.pop %v1303
        %v1305 = vmul.f32 %v1300, %v1304
        %v1306 = vpack.c.bf16 %v1305, %v1305
        %1308 = vrot.lane.b32.xlu0 %v1195, 64
        %v1309 = vpop.permute.xlu0 %1308
        %v1311 = vsel %vm1182, %v1306, 0
        %v1314 = vsel %vm1199, %v1309, 0
        %1316 = vmatprep.subr.bf16.mxu0 0
        %1317 = vmatpush1.bf16.msra.mxu0 %v1314
        %1318 = vmatprep.subr.bf16.mxu0 0
        %1319 = vmatpush1.bf16.msra.mxu0 0
        %1320 = vmatprep.subr.bf16.mxu0 0
        %1321 = vmatpush1.bf16.msra.mxu0 0
        %1322 = vmatprep.subr.bf16.mxu0 0
        %1323 = vmatpush1.bf16.msra.mxu0 0
        %1324 = vmatprep.subr.bf16.mxu0 0
        %1325 = vmatpush1.bf16.msra.mxu0 0
        %1326 = vmatprep.subr.bf16.mxu0 0
        %1327 = vmatpush1.bf16.msra.mxu0 0
        %1328 = vmatprep.subr.bf16.mxu0 0
        %1329 = vmatpush1.bf16.msra.mxu0 0
        %1330 = vmatprep.subr.bf16.mxu0 0
        %1331 = vmatpush1.bf16.msra.mxu0 0
        %1332 = vmatprep.subr.bf16.mxu0 0
        %1333 = vmatpush1.bf16.msra.mxu0 0
        %1334 = vmatprep.subr.bf16.mxu0 0
        %1335 = vmatpush1.bf16.msra.mxu0 0
        %1336 = vmatprep.subr.bf16.mxu0 0
        %1337 = vmatpush1.bf16.msra.mxu0 0
        %1338 = vmatprep.subr.bf16.mxu0 0
        %1339 = vmatpush1.bf16.msra.mxu0 0
        %1340 = vmatprep.subr.bf16.mxu0 0
        %1341 = vmatpush1.bf16.msra.mxu0 0
        %1342 = vmatprep.subr.bf16.mxu0 0
        %1343 = vmatpush1.bf16.msra.mxu0 0
        %1344 = vmatprep.subr.bf16.mxu0 0
        %1345 = vmatpush1.bf16.msra.mxu0 0
        %1346 = vmatprep.subr.bf16.mxu0 0
        %1347 = vmatpush1.bf16.msra.mxu0 0
        %1348 = vmatprep.mubr.bf16.mxu0 0
        %1349 = vmatmul.mubr.bf16.gmra.mrb[0].mxu0 %v1311
        %v1350 = vpop.f32.mrb[0].mxu0
        %v1351 = vadd.f32 0.0, %v1350
        %v1352 = vpop.f32.mrb[0].mxu0
        %v1353 = vpop.f32.mrb[0].mxu0
        %v1354 = vpop.f32.mrb[0].mxu0
        %1355 = vdwg.mxu0
        %1357 = vrot.lane.b32.xlu0 %v1351, 64
        %v1358 = vpop.permute.xlu0 %1357
        %v1360 = vsel %vm1135, %v1238, %v1358
        %v1361 = vld [vmem:[%s815 + $0x1] sm:$0x1]
        %v1362 = vpack.c.bf16 %v1083, %v1083
        %v1363 = vpack.c.bf16 %v1085, %v1085
        %v1364 = vlaneseq
        %v1365 = vshrl.u32 %v1364, 7
        %v1366 = vsub.s32 0, %v1365
        %v1367 = vrot.slane %v1361, %v1366
        %v1369 = vsel %vm1135, %v1362, 0
        %v1372 = vsel %vm1135, %v1363, 0
        %1374 = vmatprep.subr.bf16.mxu0 0
        %1375 = vmatpush1.bf16.xpose.msra.mxu0 %v1372
        %1376 = vmatprep.subr.bf16.mxu0 0
        %1377 = vmatpush1.bf16.xpose.msra.mxu0 0
        %1378 = vmatprep.subr.bf16.mxu0 0
        %1379 = vmatpush1.bf16.xpose.msra.mxu0 0
        %1380 = vmatprep.subr.bf16.mxu0 0
        %1381 = vmatpush1.bf16.xpose.msra.mxu0 0
        %1382 = vmatprep.subr.bf16.mxu0 0
        %1383 = vmatpush1.bf16.xpose.msra.mxu0 0
        %1384 = vmatprep.subr.bf16.mxu0 0
        %1385 = vmatpush1.bf16.xpose.msra.mxu0 0
        %1386 = vmatprep.subr.bf16.mxu0 0
        %1387 = vmatpush1.bf16.xpose.msra.mxu0 0
        %1388 = vmatprep.subr.bf16.mxu0 0
        %1389 = vmatpush1.bf16.xpose.msra.mxu0 0
        %1390 = vmatprep.subr.bf16.mxu0 0
        %1391 = vmatpush1.bf16.xpose.msra.mxu0 0
        %1392 = vmatprep.subr.bf16.mxu0 0
        %1393 = vmatpush1.bf16.xpose.msra.mxu0 0
        %1394 = vmatprep.subr.bf16.mxu0 0
        %1395 = vmatpush1.bf16.xpose.msra.mxu0 0
        %1396 = vmatprep.subr.bf16.mxu0 0
        %1397 = vmatpush1.bf16.xpose.msra.mxu0 0
        %1398 = vmatprep.subr.bf16.mxu0 0
        %1399 = vmatpush1.bf16.xpose.msra.mxu0 0
        %1400 = vmatprep.subr.bf16.mxu0 0
        %1401 = vmatpush1.bf16.xpose.msra.mxu0 0
        %1402 = vmatprep.subr.bf16.mxu0 0
        %1403 = vmatpush1.bf16.xpose.msra.mxu0 0
        %1404 = vmatprep.subr.bf16.mxu0 0
        %1405 = vmatpush1.bf16.xpose.msra.mxu0 0
        %1406 = vmatprep.mubr.bf16.mxu0 0
        %1407 = vmatmul.mubr.bf16.gmra.mrb[0].mxu0 %v1369
        %v1408 = vpop.f32.mrb[0].mxu0
        %v1409 = vadd.f32 %v1367, %v1408
        %v1410 = vpop.f32.mrb[0].mxu0
        %v1411 = vpop.f32.mrb[0].mxu0
        %v1412 = vpop.f32.mrb[0].mxu0
        %1413 = vdwg.mxu0
        %v1414 = vsel %vm1182, %v1409, -inf
        %1415 = vmax.xlane.f32.xlu0 %v1414
        %v1416 = vpop.xlane.xlu0 %1415
        %v1417 = vsub.f32 %v1409, %v1416
        %v1418 = vmul.f32 %v1417, 1.442695
        %v1419 = vpow.pop %v1418
        %v1420 = vsel %vm1182, %v1419, 0.0
        %1421 = vadd.xlane.f32.xlu0 %v1420
        %v1422 = vpop.xlane.xlu0 %1421
        %v1423 = vrcp.pop %v1422
        %v1424 = vmul.f32 %v1419, %v1423
        %v1425 = vpack.c.bf16 %v1424, %v1424
        %v1426 = vpack.c.bf16 %v1125, %v1125
        %v1428 = vsel %vm1182, %v1425, 0
        %v1431 = vsel %vm1199, %v1426, 0
        %1433 = vmatprep.subr.bf16.mxu0 0
        %1434 = vmatpush1.bf16.msra.mxu0 %v1431
        %1435 = vmatprep.subr.bf16.mxu0 0
        %1436 = vmatpush1.bf16.msra.mxu0 0
        %1437 = vmatprep.subr.bf16.mxu0 0
        %1438 = vmatpush1.bf16.msra.mxu0 0
        %1439 = vmatprep.subr.bf16.mxu0 0
        %1440 = vmatpush1.bf16.msra.mxu0 0
        %1441 = vmatprep.subr.bf16.mxu0 0
        %1442 = vmatpush1.bf16.msra.mxu0 0
        %1443 = vmatprep.subr.bf16.mxu0 0
        %1444 = vmatpush1.bf16.msra.mxu0 0
        %1445 = vmatprep.subr.bf16.mxu0 0
        %1446 = vmatpush1.bf16.msra.mxu0 0
        %1447 = vmatprep.subr.bf16.mxu0 0
        %1448 = vmatpush1.bf16.msra.mxu0 0
        %1449 = vmatprep.subr.bf16.mxu0 0
        %1450 = vmatpush1.bf16.msra.mxu0 0
        %1451 = vmatprep.subr.bf16.mxu0 0
        %1452 = vmatpush1.bf16.msra.mxu0 0
        %1453 = vmatprep.subr.bf16.mxu0 0
        %1454 = vmatpush1.bf16.msra.mxu0 0
        %1455 = vmatprep.subr.bf16.mxu0 0
        %1456 = vmatpush1.bf16.msra.mxu0 0
        %1457 = vmatprep.subr.bf16.mxu0 0
        %1458 = vmatpush1.bf16.msra.mxu0 0
        %1459 = vmatprep.subr.bf16.mxu0 0
        %1460 = vmatpush1.bf16.msra.mxu0 0
        %1461 = vmatprep.subr.bf16.mxu0 0
        %1462 = vmatpush1.bf16.msra.mxu0 0
        %1463 = vmatprep.subr.bf16.mxu0 0
        %1464 = vmatpush1.bf16.msra.mxu0 0
        %1465 = vmatprep.mubr.bf16.mxu0 0
        %1466 = vmatmul.mubr.bf16.gmra.mrb[0].mxu0 %v1428
        %v1467 = vpop.f32.mrb[0].mxu0
        %v1468 = vadd.f32 0.0, %v1467
        %v1469 = vpop.f32.mrb[0].mxu0
        %v1470 = vpop.f32.mrb[0].mxu0
        %v1471 = vpop.f32.mrb[0].mxu0
        %1472 = vdwg.mxu0
        %1474 = vrot.lane.b32.xlu0 %v1362, 64
        %v1475 = vpop.permute.xlu0 %1474
        %1477 = vrot.lane.b32.xlu0 %v1363, 64
        %v1478 = vpop.permute.xlu0 %1477
        %v1480 = vsel %vm1135, %v1475, 0
        %v1483 = vsel %vm1135, %v1478, 0
        %1485 = vmatprep.subr.bf16.mxu0 0
        %1486 = vmatpush1.bf16.xpose.msra.mxu0 %v1483
        %1487 = vmatprep.subr.bf16.mxu0 0
        %1488 = vmatpush1.bf16.xpose.msra.mxu0 0
        %1489 = vmatprep.subr.bf16.mxu0 0
        %1490 = vmatpush1.bf16.xpose.msra.mxu0 0
        %1491 = vmatprep.subr.bf16.mxu0 0
        %1492 = vmatpush1.bf16.xpose.msra.mxu0 0
        %1493 = vmatprep.subr.bf16.mxu0 0
        %1494 = vmatpush1.bf16.xpose.msra.mxu0 0
        %1495 = vmatprep.subr.bf16.mxu0 0
        %1496 = vmatpush1.bf16.xpose.msra.mxu0 0
        %1497 = vmatprep.subr.bf16.mxu0 0
        %1498 = vmatpush1.bf16.xpose.msra.mxu0 0
        %1499 = vmatprep.subr.bf16.mxu0 0
        %1500 = vmatpush1.bf16.xpose.msra.mxu0 0
        %1501 = vmatprep.subr.bf16.mxu0 0
        %1502 = vmatpush1.bf16.xpose.msra.mxu0 0
        %1503 = vmatprep.subr.bf16.mxu0 0
        %1504 = vmatpush1.bf16.xpose.msra.mxu0 0
        %1505 = vmatprep.subr.bf16.mxu0 0
        %1506 = vmatpush1.bf16.xpose.msra.mxu0 0
        %1507 = vmatprep.subr.bf16.mxu0 0
        %1508 = vmatpush1.bf16.xpose.msra.mxu0 0
        %1509 = vmatprep.subr.bf16.mxu0 0
        %1510 = vmatpush1.bf16.xpose.msra.mxu0 0
        %1511 = vmatprep.subr.bf16.mxu0 0
        %1512 = vmatpush1.bf16.xpose.msra.mxu0 0
        %1513 = vmatprep.subr.bf16.mxu0 0
        %1514 = vmatpush1.bf16.xpose.msra.mxu0 0
        %1515 = vmatprep.subr.bf16.mxu0 0
        %1516 = vmatpush1.bf16.xpose.msra.mxu0 0
        %1517 = vmatprep.mubr.bf16.mxu0 0
        %1518 = vmatmul.mubr.bf16.gmra.mrb[0].mxu0 %v1480
        %v1519 = vpop.f32.mrb[0].mxu0
        %v1520 = vadd.f32 %v1367, %v1519
        %v1521 = vpop.f32.mrb[0].mxu0
        %v1522 = vpop.f32.mrb[0].mxu0
        %v1523 = vpop.f32.mrb[0].mxu0
        %1524 = vdwg.mxu0
        %v1525 = vsel %vm1182, %v1520, -inf
        %1526 = vmax.xlane.f32.xlu0 %v1525
        %v1527 = vpop.xlane.xlu0 %1526
        %v1528 = vsub.f32 %v1520, %v1527
        %v1529 = vmul.f32 %v1528, 1.442695
        %v1530 = vpow.pop %v1529
        %v1531 = vsel %vm1182, %v1530, 0.0
        %1532 = vadd.xlane.f32.xlu0 %v1531
        %v1533 = vpop.xlane.xlu0 %1532
        %v1534 = vrcp.pop %v1533
        %v1535 = vmul.f32 %v1530, %v1534
        %v1536 = vpack.c.bf16 %v1535, %v1535
        %1538 = vrot.lane.b32.xlu0 %v1426, 64
        %v1539 = vpop.permute.xlu0 %1538
        %v1541 = vsel %vm1182, %v1536, 0
        %v1544 = vsel %vm1199, %v1539, 0
        %1546 = vmatprep.subr.bf16.mxu0 0
        %1547 = vmatpush1.bf16.msra.mxu0 %v1544
        %1548 = vmatprep.subr.bf16.mxu0 0
        %1549 = vmatpush1.bf16.msra.mxu0 0
        %1550 = vmatprep.subr.bf16.mxu0 0
        %1551 = vmatpush1.bf16.msra.mxu0 0
        %1552 = vmatprep.subr.bf16.mxu0 0
        %1553 = vmatpush1.bf16.msra.mxu0 0
        %1554 = vmatprep.subr.bf16.mxu0 0
        %1555 = vmatpush1.bf16.msra.mxu0 0
        %1556 = vmatprep.subr.bf16.mxu0 0
        %1557 = vmatpush1.bf16.msra.mxu0 0
        %1558 = vmatprep.subr.bf16.mxu0 0
        %1559 = vmatpush1.bf16.msra.mxu0 0
        %1560 = vmatprep.subr.bf16.mxu0 0
        %1561 = vmatpush1.bf16.msra.mxu0 0
        %1562 = vmatprep.subr.bf16.mxu0 0
        %1563 = vmatpush1.bf16.msra.mxu0 0
        %1564 = vmatprep.subr.bf16.mxu0 0
        %1565 = vmatpush1.bf16.msra.mxu0 0
        %1566 = vmatprep.subr.bf16.mxu0 0
        %1567 = vmatpush1.bf16.msra.mxu0 0
        %1568 = vmatprep.subr.bf16.mxu0 0
        %1569 = vmatpush1.bf16.msra.mxu0 0
        %1570 = vmatprep.subr.bf16.mxu0 0
        %1571 = vmatpush1.bf16.msra.mxu0 0
        %1572 = vmatprep.subr.bf16.mxu0 0
        %1573 = vmatpush1.bf16.msra.mxu0 0
        %1574 = vmatprep.subr.bf16.mxu0 0
        %1575 = vmatpush1.bf16.msra.mxu0 0
        %1576 = vmatprep.subr.bf16.mxu0 0
        %1577 = vmatpush1.bf16.msra.mxu0 0
        %1578 = vmatprep.mubr.bf16.mxu0 0
        %1579 = vmatmul.mubr.bf16.gmra.mrb[0].mxu0 %v1541
        %v1580 = vpop.f32.mrb[0].mxu0
        %v1581 = vadd.f32 0.0, %v1580
        %v1582 = vpop.f32.mrb[0].mxu0
        %v1583 = vpop.f32.mrb[0].mxu0
        %v1584 = vpop.f32.mrb[0].mxu0
        %1585 = vdwg.mxu0
        %1587 = vrot.lane.b32.xlu0 %v1581, 64
        %v1588 = vpop.permute.xlu0 %1587
        %v1590 = vsel %vm1135, %v1468, %v1588
        %v1591 = vpack.c.bf16 %v1590, %v1360
        %v1592 = vld [vmem:[%s824] sm:$0xf]
        %v1593 = vld [vmem:[%s824 + $0x4] sm:$0xf]
        %v1594 = vld [vmem:[%s824 + $0x8] sm:$0xf]
        %v1595 = vld [vmem:[%s824 + $0xc] sm:$0xf]
        %v1596 = vld [vmem:[%s824 + $0x10] sm:$0xf]
        %v1597 = vld [vmem:[%s824 + $0x14] sm:$0xf]
        %v1598 = vld [vmem:[%s824 + $0x18] sm:$0xf]
        %v1599 = vld [vmem:[%s824 + $0x1c] sm:$0xf]
        %v1600 = vld [vmem:[%s824 + $0x20] sm:$0xf]
        %v1601 = vld [vmem:[%s824 + $0x24] sm:$0xf]
        %v1602 = vld [vmem:[%s824 + $0x28] sm:$0xf]
        %v1603 = vld [vmem:[%s824 + $0x2c] sm:$0xf]
        %v1604 = vld [vmem:[%s824 + $0x30] sm:$0xf]
        %v1605 = vld [vmem:[%s824 + $0x34] sm:$0xf]
        %v1606 = vld [vmem:[%s824 + $0x38] sm:$0xf]
        %v1607 = vld [vmem:[%s824 + $0x3c] sm:$0xf]
        %v1608 = vld [vmem:[%s827] sm:$0x1]
        %v1610 = vlaneseq
        %v1611 = vshrl.u32 %v1610, 7
        %v1612 = vsub.s32 0, %v1611
        %v1613 = vrot.slane %v1608, %v1612
        %v1631 = vunpack.c.l.b16 %v1592
        %v1632 = vunpack.c.l.b16 %v1593
        %v1633 = vunpack.c.l.b16 %v1594
        %v1634 = vunpack.c.l.b16 %v1595
        %v1635 = vunpack.c.l.b16 %v1596
        %v1636 = vunpack.c.l.b16 %v1597
        %v1637 = vunpack.c.l.b16 %v1598
        %v1638 = vunpack.c.l.b16 %v1599
        %v1639 = vunpack.c.l.b16 %v1600
        %v1640 = vunpack.c.l.b16 %v1601
        %v1641 = vunpack.c.l.b16 %v1602
        %v1642 = vunpack.c.l.b16 %v1603
        %v1643 = vunpack.c.l.b16 %v1604
        %v1644 = vunpack.c.l.b16 %v1605
        %v1645 = vunpack.c.l.b16 %v1606
        %v1646 = vunpack.c.l.b16 %v1607
        %v1647 = vpack.c.b16 %v1632, %v1631
        %v1648 = vpack.c.b16 %v1634, %v1633
        %v1649 = vpack.c.b16 %v1636, %v1635
        %v1650 = vpack.c.b16 %v1638, %v1637
        %v1651 = vpack.c.b16 %v1640, %v1639
        %v1652 = vpack.c.b16 %v1642, %v1641
        %v1653 = vpack.c.b16 %v1644, %v1643
        %v1654 = vpack.c.b16 %v1646, %v1645
        %1663 = vmatprep.subr.bf16.mxu0 0
        %1664 = vmatpush1.bf16.msra.mxu0 %v1647
        %1665 = vmatprep.subr.bf16.mxu0 0
        %1666 = vmatpush1.bf16.msra.mxu0 %v1648
        %1667 = vmatprep.subr.bf16.mxu0 0
        %1668 = vmatpush1.bf16.msra.mxu0 %v1649
        %1669 = vmatprep.subr.bf16.mxu0 0
        %1670 = vmatpush1.bf16.msra.mxu0 %v1650
        %1671 = vmatprep.subr.bf16.mxu0 0
        %1672 = vmatpush1.bf16.msra.mxu0 %v1651
        %1673 = vmatprep.subr.bf16.mxu0 0
        %1674 = vmatpush1.bf16.msra.mxu0 %v1652
        %1675 = vmatprep.subr.bf16.mxu0 0
        %1676 = vmatpush1.bf16.msra.mxu0 %v1653
        %1677 = vmatprep.subr.bf16.mxu0 0
        %1678 = vmatpush1.bf16.msra.mxu0 %v1654
        %1679 = vmatprep.subr.bf16.mxu0 0
        %1680 = vmatpush1.bf16.msra.mxu0 0
        %1681 = vmatprep.subr.bf16.mxu0 0
        %1682 = vmatpush1.bf16.msra.mxu0 0
        %1683 = vmatprep.subr.bf16.mxu0 0
        %1684 = vmatpush1.bf16.msra.mxu0 0
        %1685 = vmatprep.subr.bf16.mxu0 0
        %1686 = vmatpush1.bf16.msra.mxu0 0
        %1687 = vmatprep.subr.bf16.mxu0 0
        %1688 = vmatpush1.bf16.msra.mxu0 0
        %1689 = vmatprep.subr.bf16.mxu0 0
        %1690 = vmatpush1.bf16.msra.mxu0 0
        %1691 = vmatprep.subr.bf16.mxu0 0
        %1692 = vmatpush1.bf16.msra.mxu0 0
        %1693 = vmatprep.subr.bf16.mxu0 0
        %1694 = vmatpush1.bf16.msra.mxu0 0
        %1695 = vmatprep.mubr.bf16.mxu0 0
        %1696 = vmatmul.mubr.bf16.gmra.mrb[0].mxu0 %v1591
        %v1697 = vpop.f32.mrb[0].mxu0
        %v1698 = vadd.f32 %v1613, %v1697
        %v1699 = vpop.f32.mrb[0].mxu0
        %v1700 = vpop.f32.mrb[0].mxu0
        %v1701 = vadd.f32 %v1613, %v1700
        %v1702 = vpop.f32.mrb[0].mxu0
        %1703 = vdwg.mxu0
        %v1704 = vadd.f32 %v864, %v1698
        %v1705 = vadd.f32 %v865, %v1701
        %v1706 = vld [vmem:[%s830] sm:$0x1]
        %v1707 = vld [vmem:[%s833] sm:$0x1]
        %1708 = vadd.xlane.f32.xlu0 %v1704
        %v1709 = vpop.xlane.xlu0 %1708
        %1710 = vadd.xlane.f32.xlu0 %v1705
        %v1711 = vpop.xlane.xlu0 %1710
        %v1712 = vrcp.pop 128.0
        %v1713 = vmul.f32 %v1709, %v1712
        %v1714 = vmul.f32 %v1711, %v1712
        %v1715 = vsub.f32 %v1704, %v1713
        %v1716 = vsub.f32 %v1705, %v1714
        %v1717 = vmul.f32 %v1715, %v1715
        %v1718 = vmul.f32 %v1716, %v1716
        %1719 = vadd.xlane.f32.xlu0 %v1717
        %v1720 = vpop.xlane.xlu0 %1719
        %1721 = vadd.xlane.f32.xlu0 %v1718
        %v1722 = vpop.xlane.xlu0 %1721
        %v1723 = vmul.f32 %v1720, %v1712
        %v1724 = vmul.f32 %v1722, %v1712
        %v1725 = vadd.f32 %v1723, 1e-12
        %v1726 = vadd.f32 %v1724, 1e-12
        %v1727 = vrsqrt.pop %v1725
        %v1728 = vrsqrt.pop %v1726
        %v1729 = vmul.f32 %v1715, %v1727
        %v1730 = vmul.f32 %v1716, %v1728
        %v1732 = vlaneseq
        %v1733 = vshrl.u32 %v1732, 7
        %v1734 = vsub.s32 0, %v1733
        %v1735 = vrot.slane %v1706, %v1734
        %v1737 = vmul.f32 %v1729, %v1735
        %v1738 = vmul.f32 %v1730, %v1735
        %v1740 = vlaneseq
        %v1741 = vshrl.u32 %v1740, 7
        %v1742 = vsub.s32 0, %v1741
        %v1743 = vrot.slane %v1707, %v1742
        %v1745 = vadd.f32 %v1737, %v1743
        %v1746 = vadd.f32 %v1738, %v1743
        %v1747 = vpack.c.bf16 %v1746, %v1745
        %v1748 = vld [vmem:[%s692] sm:$0xff]
        %v1749 = vld [vmem:[%s692 + $0x8] sm:$0xff]
        %v1750 = vld [vmem:[%s692 + $0x10] sm:$0xff]
        %v1751 = vld [vmem:[%s692 + $0x18] sm:$0xff]
        %v1752 = vld [vmem:[%s692 + $0x20] sm:$0xff]
        %v1753 = vld [vmem:[%s692 + $0x28] sm:$0xff]
        %v1754 = vld [vmem:[%s692 + $0x30] sm:$0xff]
        %v1755 = vld [vmem:[%s692 + $0x38] sm:$0xff]
        %v1756 = vld [vmem:[%s692 + $0x40] sm:$0xff]
        %v1757 = vld [vmem:[%s692 + $0x48] sm:$0xff]
        %v1758 = vld [vmem:[%s692 + $0x50] sm:$0xff]
        %v1759 = vld [vmem:[%s692 + $0x58] sm:$0xff]
        %v1760 = vld [vmem:[%s692 + $0x60] sm:$0xff]
        %v1761 = vld [vmem:[%s692 + $0x68] sm:$0xff]
        %v1762 = vld [vmem:[%s692 + $0x70] sm:$0xff]
        %v1763 = vld [vmem:[%s692 + $0x78] sm:$0xff]
        %v1764 = vld [vmem:[%s837] sm:$0x3]
        %v1766 = vlaneseq
        %v1767 = vshrl.u32 %v1766, 7
        %v1768 = vsub.s32 0, %v1767
        %v1769 = vrot.slane %v1764, %v1768
        %v1770 = vlaneseq
        %v1771 = vshrl.u32 %v1770, 7
        %v1772 = vsub.s32 1, %v1771
        %v1773 = vrot.slane %v1764, %v1772
        %v1792 = vunpack.c.l.b16 %v1748
        %v1793 = vunpack.c.h.b16 %v1748
        %v1794 = vunpack.c.l.b16 %v1749
        %v1795 = vunpack.c.h.b16 %v1749
        %v1796 = vunpack.c.l.b16 %v1750
        %v1797 = vunpack.c.h.b16 %v1750
        %v1798 = vunpack.c.l.b16 %v1751
        %v1799 = vunpack.c.h.b16 %v1751
        %v1800 = vunpack.c.l.b16 %v1752
        %v1801 = vunpack.c.h.b16 %v1752
        %v1802 = vunpack.c.l.b16 %v1753
        %v1803 = vunpack.c.h.b16 %v1753
        %v1804 = vunpack.c.l.b16 %v1754
        %v1805 = vunpack.c.h.b16 %v1754
        %v1806 = vunpack.c.l.b16 %v1755
        %v1807 = vunpack.c.h.b16 %v1755
        %v1808 = vunpack.c.l.b16 %v1756
        %v1809 = vunpack.c.h.b16 %v1756
        %v1810 = vunpack.c.l.b16 %v1757
        %v1811 = vunpack.c.h.b16 %v1757
        %v1812 = vunpack.c.l.b16 %v1758
        %v1813 = vunpack.c.h.b16 %v1758
        %v1814 = vunpack.c.l.b16 %v1759
        %v1815 = vunpack.c.h.b16 %v1759
        %v1816 = vunpack.c.l.b16 %v1760
        %v1817 = vunpack.c.h.b16 %v1760
        %v1818 = vunpack.c.l.b16 %v1761
        %v1819 = vunpack.c.h.b16 %v1761
        %v1820 = vunpack.c.l.b16 %v1762
        %v1821 = vunpack.c.h.b16 %v1762
        %v1822 = vunpack.c.l.b16 %v1763
        %v1823 = vunpack.c.h.b16 %v1763
        %v1824 = vpack.c.b16 %v1794, %v1792
        %v1825 = vpack.c.b16 %v1795, %v1793
        %v1826 = vpack.c.b16 %v1798, %v1796
        %v1827 = vpack.c.b16 %v1799, %v1797
        %v1828 = vpack.c.b16 %v1802, %v1800
        %v1829 = vpack.c.b16 %v1803, %v1801
        %v1830 = vpack.c.b16 %v1806, %v1804
        %v1831 = vpack.c.b16 %v1807, %v1805
        %v1832 = vpack.c.b16 %v1810, %v1808
        %v1833 = vpack.c.b16 %v1811, %v1809
        %v1834 = vpack.c.b16 %v1814, %v1812
        %v1835 = vpack.c.b16 %v1815, %v1813
        %v1836 = vpack.c.b16 %v1818, %v1816
        %v1837 = vpack.c.b16 %v1819, %v1817
        %v1838 = vpack.c.b16 %v1822, %v1820
        %v1839 = vpack.c.b16 %v1823, %v1821
        %1856 = vmatprep.subr.bf16.mxu0 %v1825
        %1857 = vmatpush1.bf16.msra.mxu0 %v1824
        %1858 = vmatprep.subr.bf16.mxu0 %v1827
        %1859 = vmatpush1.bf16.msra.mxu0 %v1826
        %1860 = vmatprep.subr.bf16.mxu0 %v1829
        %1861 = vmatpush1.bf16.msra.mxu0 %v1828
        %1862 = vmatprep.subr.bf16.mxu0 %v1831
        %1863 = vmatpush1.bf16.msra.mxu0 %v1830
        %1864 = vmatprep.subr.bf16.mxu0 %v1833
        %1865 = vmatpush1.bf16.msra.mxu0 %v1832
        %1866 = vmatprep.subr.bf16.mxu0 %v1835
        %1867 = vmatpush1.bf16.msra.mxu0 %v1834
        %1868 = vmatprep.subr.bf16.mxu0 %v1837
        %1869 = vmatpush1.bf16.msra.mxu0 %v1836
        %1870 = vmatprep.subr.bf16.mxu0 %v1839
        %1871 = vmatpush1.bf16.msra.mxu0 %v1838
        %1872 = vmatprep.subr.bf16.mxu0 0
        %1873 = vmatpush1.bf16.msra.mxu0 0
        %1874 = vmatprep.subr.bf16.mxu0 0
        %1875 = vmatpush1.bf16.msra.mxu0 0
        %1876 = vmatprep.subr.bf16.mxu0 0
        %1877 = vmatpush1.bf16.msra.mxu0 0
        %1878 = vmatprep.subr.bf16.mxu0 0
        %1879 = vmatpush1.bf16.msra.mxu0 0
        %1880 = vmatprep.subr.bf16.mxu0 0
        %1881 = vmatpush1.bf16.msra.mxu0 0
        %1882 = vmatprep.subr.bf16.mxu0 0
        %1883 = vmatpush1.bf16.msra.mxu0 0
        %1884 = vmatprep.subr.bf16.mxu0 0
        %1885 = vmatpush1.bf16.msra.mxu0 0
        %1886 = vmatprep.subr.bf16.mxu0 0
        %1887 = vmatpush1.bf16.msra.mxu0 0
        %1888 = vmatprep.mubr.bf16.mxu0 0
        %1889 = vmatmul.mubr.bf16.gmra.mrb[0].mxu0 %v1747
        %v1890 = vpop.f32.mrb[0].mxu0
        %v1891 = vadd.f32 %v1769, %v1890
        %v1892 = vpop.f32.mrb[0].mxu0
        %v1893 = vadd.f32 %v1773, %v1892
        %v1894 = vpop.f32.mrb[0].mxu0
        %v1895 = vadd.f32 %v1769, %v1894
        %v1896 = vpop.f32.mrb[0].mxu0
        %v1897 = vadd.f32 %v1773, %v1896
        %1898 = vdwg.mxu0
        %v1899 = vmul.f32 %v1891, 0.5
        %v1900 = vmul.f32 %v1893, 0.5
        %v1901 = vmul.f32 %v1895, 0.5
        %v1902 = vmul.f32 %v1897, 0.5
        %v1903 = vmul.f32 %v1891, 0.044715
        %v1904 = vmul.f32 %v1893, 0.044715
        %v1905 = vmul.f32 %v1895, 0.044715
        %v1906 = vmul.f32 %v1897, 0.044715
        %v1907 = vmul.f32 %v1903, %v1891
        %v1908 = vmul.f32 %v1904, %v1893
        %v1909 = vmul.f32 %v1905, %v1895
        %v1910 = vmul.f32 %v1906, %v1897
        %v1911 = vmul.f32 %v1907, %v1891
        %v1912 = vmul.f32 %v1908, %v1893
        %v1913 = vmul.f32 %v1909, %v1895
        %v1914 = vmul.f32 %v1910, %v1897
        %v1915 = vadd.f32 %v1891, %v1911
        %v1916 = vadd.f32 %v1893, %v1912
        %v1917 = vadd.f32 %v1895, %v1913
        %v1918 = vadd.f32 %v1897, %v1914
        %v1919 = vmul.f32 %v1915, 0.7978846
        %v1920 = vmul.f32 %v1916, 0.7978846
        %v1921 = vmul.f32 %v1917, 0.7978846
        %v1922 = vmul.f32 %v1918, 0.7978846
        %v1923 = vtanh.pop %v1919
        %v1924 = vtanh.pop %v1920
        %v1925 = vtanh.pop %v1921
        %v1926 = vtanh.pop %v1922
        %v1927 = vadd.f32 %v1923, 1.0
        %v1928 = vadd.f32 %v1924, 1.0
        %v1929 = vadd.f32 %v1925, 1.0
        %v1930 = vadd.f32 %v1926, 1.0
        %v1931 = vmul.f32 %v1899, %v1927
        %v1932 = vmul.f32 %v1900, %v1928
        %v1933 = vmul.f32 %v1901, %v1929
        %v1934 = vmul.f32 %v1902, %v1930
        %v1935 = vpack.c.bf16 %v1933, %v1931
        %v1936 = vpack.c.bf16 %v1934, %v1932
        %v1937 = vld [vmem:[%s701] sm:$0xf]
        %v1938 = vld [vmem:[%s701 + $0x4] sm:$0xf]
        %v1939 = vld [vmem:[%s701 + $0x8] sm:$0xf]
        %v1940 = vld [vmem:[%s701 + $0xc] sm:$0xf]
        %v1941 = vld [vmem:[%s701 + $0x10] sm:$0xf]
        %v1942 = vld [vmem:[%s701 + $0x14] sm:$0xf]
        %v1943 = vld [vmem:[%s701 + $0x18] sm:$0xf]
        %v1944 = vld [vmem:[%s701 + $0x1c] sm:$0xf]
        %v1945 = vld [vmem:[%s701 + $0x20] sm:$0xf]
        %v1946 = vld [vmem:[%s701 + $0x24] sm:$0xf]
        %v1947 = vld [vmem:[%s701 + $0x28] sm:$0xf]
        %v1948 = vld [vmem:[%s701 + $0x2c] sm:$0xf]
        %v1949 = vld [vmem:[%s701 + $0x30] sm:$0xf]
        %v1950 = vld [vmem:[%s701 + $0x34] sm:$0xf]
        %v1951 = vld [vmem:[%s701 + $0x38] sm:$0xf]
        %v1952 = vld [vmem:[%s701 + $0x3c] sm:$0xf]
        %v1953 = vld [vmem:[%s701 + $0x40] sm:$0xf]
        %v1954 = vld [vmem:[%s701 + $0x44] sm:$0xf]
        %v1955 = vld [vmem:[%s701 + $0x48] sm:$0xf]
        %v1956 = vld [vmem:[%s701 + $0x4c] sm:$0xf]
        %v1957 = vld [vmem:[%s701 + $0x50] sm:$0xf]
        %v1958 = vld [vmem:[%s701 + $0x54] sm:$0xf]
        %v1959 = vld [vmem:[%s701 + $0x58] sm:$0xf]
        %v1960 = vld [vmem:[%s701 + $0x5c] sm:$0xf]
        %v1961 = vld [vmem:[%s701 + $0x60] sm:$0xf]
        %v1962 = vld [vmem:[%s701 + $0x64] sm:$0xf]
        %v1963 = vld [vmem:[%s701 + $0x68] sm:$0xf]
        %v1964 = vld [vmem:[%s701 + $0x6c] sm:$0xf]
        %v1965 = vld [vmem:[%s701 + $0x70] sm:$0xf]
        %v1966 = vld [vmem:[%s701 + $0x74] sm:$0xf]
        %v1967 = vld [vmem:[%s701 + $0x78] sm:$0xf]
        %v1968 = vld [vmem:[%s701 + $0x7c] sm:$0xf]
        %v1969 = vld [vmem:[%s840] sm:$0x1]
        %v1971 = vlaneseq
        %v1972 = vshrl.u32 %v1971, 7
        %v1973 = vsub.s32 0, %v1972
        %v1974 = vrot.slane %v1969, %v1973
        %v2008 = vunpack.c.l.b16 %v1937
        %v2009 = vunpack.c.l.b16 %v1938
        %v2010 = vunpack.c.l.b16 %v1939
        %v2011 = vunpack.c.l.b16 %v1940
        %v2012 = vunpack.c.l.b16 %v1941
        %v2013 = vunpack.c.l.b16 %v1942
        %v2014 = vunpack.c.l.b16 %v1943
        %v2015 = vunpack.c.l.b16 %v1944
        %v2016 = vunpack.c.l.b16 %v1945
        %v2017 = vunpack.c.l.b16 %v1946
        %v2018 = vunpack.c.l.b16 %v1947
        %v2019 = vunpack.c.l.b16 %v1948
        %v2020 = vunpack.c.l.b16 %v1949
        %v2021 = vunpack.c.l.b16 %v1950
        %v2022 = vunpack.c.l.b16 %v1951
        %v2023 = vunpack.c.l.b16 %v1952
        %v2024 = vunpack.c.l.b16 %v1953
        %v2025 = vunpack.c.l.b16 %v1954
        %v2026 = vunpack.c.l.b16 %v1955
        %v2027 = vunpack.c.l.b16 %v1956
        %v2028 = vunpack.c.l.b16 %v1957
        %v2029 = vunpack.c.l.b16 %v1958
        %v2030 = vunpack.c.l.b16 %v1959
        %v2031 = vunpack.c.l.b16 %v1960
        %v2032 = vunpack.c.l.b16 %v1961
        %v2033 = vunpack.c.l.b16 %v1962
        %v2034 = vunpack.c.l.b16 %v1963
        %v2035 = vunpack.c.l.b16 %v1964
        %v2036 = vunpack.c.l.b16 %v1965
        %v2037 = vunpack.c.l.b16 %v1966
        %v2038 = vunpack.c.l.b16 %v1967
        %v2039 = vunpack.c.l.b16 %v1968
        %v2040 = vpack.c.b16 %v2009, %v2008
        %v2041 = vpack.c.b16 %v2011, %v2010
        %v2042 = vpack.c.b16 %v2013, %v2012
        %v2043 = vpack.c.b16 %v2015, %v2014
        %v2044 = vpack.c.b16 %v2017, %v2016
        %v2045 = vpack.c.b16 %v2019, %v2018
        %v2046 = vpack.c.b16 %v2021, %v2020
        %v2047 = vpack.c.b16 %v2023, %v2022
        %v2048 = vpack.c.b16 %v2025, %v2024
        %v2049 = vpack.c.b16 %v2027, %v2026
        %v2050 = vpack.c.b16 %v2029, %v2028
        %v2051 = vpack.c.b16 %v2031, %v2030
        %v2052 = vpack.c.b16 %v2033, %v2032
        %v2053 = vpack.c.b16 %v2035, %v2034
        %v2054 = vpack.c.b16 %v2037, %v2036
        %v2055 = vpack.c.b16 %v2039, %v2038
        %2072 = vmatprep.subr.bf16.mxu0 0
        %2073 = vmatpush1.bf16.msra.mxu0 %v2040
        %2074 = vmatprep.subr.bf16.mxu0 0
        %2075 = vmatpush1.bf16.msra.mxu0 %v2041
        %2076 = vmatprep.subr.bf16.mxu0 0
        %2077 = vmatpush1.bf16.msra.mxu0 %v2042
        %2078 = vmatprep.subr.bf16.mxu0 0
        %2079 = vmatpush1.bf16.msra.mxu0 %v2043
        %2080 = vmatprep.subr.bf16.mxu0 0
        %2081 = vmatpush1.bf16.msra.mxu0 %v2044
        %2082 = vmatprep.subr.bf16.mxu0 0
        %2083 = vmatpush1.bf16.msra.mxu0 %v2045
        %2084 = vmatprep.subr.bf16.mxu0 0
        %2085 = vmatpush1.bf16.msra.mxu0 %v2046
        %2086 = vmatprep.subr.bf16.mxu0 0
        %2087 = vmatpush1.bf16.msra.mxu0 %v2047
        %2088 = vmatprep.subr.bf16.mxu0 0
        %2089 = vmatpush1.bf16.msra.mxu0 %v2048
        %2090 = vmatprep.subr.bf16.mxu0 0
        %2091 = vmatpush1.bf16.msra.mxu0 %v2049
        %2092 = vmatprep.subr.bf16.mxu0 0
        %2093 = vmatpush1.bf16.msra.mxu0 %v2050
        %2094 = vmatprep.subr.bf16.mxu0 0
        %2095 = vmatpush1.bf16.msra.mxu0 %v2051
        %2096 = vmatprep.subr.bf16.mxu0 0
        %2097 = vmatpush1.bf16.msra.mxu0 %v2052
        %2098 = vmatprep.subr.bf16.mxu0 0
        %2099 = vmatpush1.bf16.msra.mxu0 %v2053
        %2100 = vmatprep.subr.bf16.mxu0 0
        %2101 = vmatpush1.bf16.msra.mxu0 %v2054
        %2102 = vmatprep.subr.bf16.mxu0 0
        %2103 = vmatpush1.bf16.msra.mxu0 %v2055
        %2104 = vmatprep.mubr.bf16.mxu0 %v1936
        %2105 = vmatmul.mubr.bf16.gmra.mrb[0].mxu0 %v1935
        %v2106 = vpop.f32.mrb[0].mxu0
        %v2107 = vadd.f32 %v1974, %v2106
        %v2108 = vpop.f32.mrb[0].mxu0
        %v2109 = vpop.f32.mrb[0].mxu0
        %v2110 = vadd.f32 %v1974, %v2109
        %v2111 = vpop.f32.mrb[0].mxu0
        %2112 = vdwg.mxu0
        %v2113 = vadd.f32 %v1745, %v2107
        %v2114 = vadd.f32 %v1746, %v2110
        %v2115 = vld [vmem:[%s843] sm:$0x1]
        %v2116 = vld [vmem:[%s846] sm:$0x1]
        %2117 = vadd.xlane.f32.xlu0 %v2113
        %v2118 = vpop.xlane.xlu0 %2117
        %2119 = vadd.xlane.f32.xlu0 %v2114
        %v2120 = vpop.xlane.xlu0 %2119
        %v2121 = vmul.f32 %v2118, %v1712
        %v2122 = vmul.f32 %v2120, %v1712
        %v2123 = vsub.f32 %v2113, %v2121
        %v2124 = vsub.f32 %v2114, %v2122
        %v2125 = vmul.f32 %v2123, %v2123
        %v2126 = vmul.f32 %v2124, %v2124
        %2127 = vadd.xlane.f32.xlu0 %v2125
        %v2128 = vpop.xlane.xlu0 %2127
        %2129 = vadd.xlane.f32.xlu0 %v2126
        %v2130 = vpop.xlane.xlu0 %2129
        %v2131 = vmul.f32 %v2128, %v1712
        %v2132 = vmul.f32 %v2130, %v1712
        %v2133 = vadd.f32 %v2131, 1e-12
        %v2134 = vadd.f32 %v2132, 1e-12
        %v2135 = vrsqrt.pop %v2133
        %v2136 = vrsqrt.pop %v2134
        %v2137 = vmul.f32 %v2123, %v2135
        %v2138 = vmul.f32 %v2124, %v2136
        %v2140 = vlaneseq
        %v2141 = vshrl.u32 %v2140, 7
        %v2142 = vsub.s32 0, %v2141
        %v2143 = vrot.slane %v2115, %v2142
        %v2145 = vmul.f32 %v2137, %v2143
        %v2146 = vmul.f32 %v2138, %v2143
        %v2148 = vlaneseq
        %v2149 = vshrl.u32 %v2148, 7
        %v2150 = vsub.s32 0, %v2149
        %v2151 = vrot.slane %v2116, %v2150
        %v2153 = vadd.f32 %v2145, %v2151
        %v2154 = vadd.f32 %v2146, %v2151
        %2155 = vst [vmem:[#allocation2] sm:$0xff] %v2153
        %2156 = vst [vmem:[#allocation2 + $0x8] sm:$0xff] %v2154
        %p2157 = scmp.eq.s32.totalorder %s42, 1
        // Predicated region
        $region105: #{bert_forward.3} parent=83 // pred_check
          %p2158 = pneg %p2157
        $region106: #{bert_forward.3} parent=83 // pred_check_branch
          %2160 = sbr.rel (%p2158) target = $region108
        $region107: #{bert_forward.3} parent=83 // pred_region
          %2161 = vst [vmem:[%s851] sm:$0xff] %v2153
          %2162 = vst [vmem:[%s851 + $0x8] sm:$0xff] %v2154
          %v2164 = vrot.slane %v2154, 7
          %vm2166 = vcmask 1040384
          %v2167 = vsel %vm2166, %v2153, %v2164
          %v2168 = vpack.c.bf16 %v2167, %v2167
          %v2169 = vld [vmem:[%s14] sm:$0xf]
          %v2170 = vld [vmem:[%s14 + $0x4] sm:$0xf]
          %v2171 = vld [vmem:[%s14 + $0x8] sm:$0xf]
          %v2172 = vld [vmem:[%s14 + $0xc] sm:$0xf]
          %v2173 = vld [vmem:[%s14 + $0x10] sm:$0xf]
          %v2174 = vld [vmem:[%s14 + $0x14] sm:$0xf]
          %v2175 = vld [vmem:[%s14 + $0x18] sm:$0xf]
          %v2176 = vld [vmem:[%s14 + $0x1c] sm:$0xf]
          %v2177 = vld [vmem:[%s14 + $0x20] sm:$0xf]
          %v2178 = vld [vmem:[%s14 + $0x24] sm:$0xf]
          %v2179 = vld [vmem:[%s14 + $0x28] sm:$0xf]
          %v2180 = vld [vmem:[%s14 + $0x2c] sm:$0xf]
          %v2181 = vld [vmem:[%s14 + $0x30] sm:$0xf]
          %v2182 = vld [vmem:[%s14 + $0x34] sm:$0xf]
          %v2183 = vld [vmem:[%s14 + $0x38] sm:$0xf]
          %v2184 = vld [vmem:[%s14 + $0x3c] sm:$0xf]
          %v2185 = vld [vmem:[#allocation9] sm:$0x1]
          %v2187 = vlaneseq
          %v2188 = vshrl.u32 %v2187, 7
          %v2189 = vsub.s32 0, %v2188
          %v2190 = vrot.slane %v2185, %v2189
          %v2208 = vunpack.c.l.b16 %v2169
          %v2209 = vunpack.c.l.b16 %v2170
          %v2210 = vunpack.c.l.b16 %v2171
          %v2211 = vunpack.c.l.b16 %v2172
          %v2212 = vunpack.c.l.b16 %v2173
          %v2213 = vunpack.c.l.b16 %v2174
          %v2214 = vunpack.c.l.b16 %v2175
          %v2215 = vunpack.c.l.b16 %v2176
          %v2216 = vunpack.c.l.b16 %v2177
          %v2217 = vunpack.c.l.b16 %v2178
          %v2218 = vunpack.c.l.b16 %v2179
          %v2219 = vunpack.c.l.b16 %v2180
          %v2220 = vunpack.c.l.b16 %v2181
          %v2221 = vunpack.c.l.b16 %v2182
          %v2222 = vunpack.c.l.b16 %v2183
          %v2223 = vunpack.c.l.b16 %v2184
          %v2224 = vpack.c.b16 %v2209, %v2208
          %v2225 = vpack.c.b16 %v2211, %v2210
          %v2226 = vpack.c.b16 %v2213, %v2212
          %v2227 = vpack.c.b16 %v2215, %v2214
          %v2228 = vpack.c.b16 %v2217, %v2216
          %v2229 = vpack.c.b16 %v2219, %v2218
          %v2230 = vpack.c.b16 %v2221, %v2220
          %v2231 = vpack.c.b16 %v2223, %v2222
          %2240 = vmatprep.subr.bf16.mxu0 0
          %2241 = vmatpush1.bf16.msra.mxu0 %v2224
          %2242 = vmatprep.subr.bf16.mxu0 0
          %2243 = vmatpush1.bf16.msra.mxu0 %v2225
          %2244 = vmatprep.subr.bf16.mxu0 0
          %2245 = vmatpush1.bf16.msra.mxu0 %v2226
          %2246 = vmatprep.subr.bf16.mxu0 0
          %2247 = vmatpush1.bf16.msra.mxu0 %v2227
          %2248 = vmatprep.subr.bf16.mxu0 0
          %2249 = vmatpush1.bf16.msra.mxu0 %v2228
          %2250 = vmatprep.subr.bf16.mxu0 0
          %2251 = vmatpush1.bf16.msra.mxu0 %v2229
          %2252 = vmatprep.subr.bf16.mxu0 0
          %2253 = vmatpush1.bf16.msra.mxu0 %v2230
          %2254 = vmatprep.subr.bf16.mxu0 0
          %2255 = vmatpush1.bf16.msra.mxu0 %v2231
          %2256 = vmatprep.subr.bf16.mxu0 0
          %2257 = vmatpush1.bf16.msra.mxu0 0
          %2258 = vmatprep.subr.bf16.mxu0 0
          %2259 = vmatpush1.bf16.msra.mxu0 0
          %2260 = vmatprep.subr.bf16.mxu0 0
          %2261 = vmatpush1.bf16.msra.mxu0 0
          %2262 = vmatprep.subr.bf16.mxu0 0
          %2263 = vmatpush1.bf16.msra.mxu0 0
          %2264 = vmatprep.subr.bf16.mxu0 0
          %2265 = vmatpush1.bf16.msra.mxu0 0
          %2266 = vmatprep.subr.bf16.mxu0 0
          %2267 = vmatpush1.bf16.msra.mxu0 0
          %2268 = vmatprep.subr.bf16.mxu0 0
          %2269 = vmatpush1.bf16.msra.mxu0 0
          %2270 = vmatprep.subr.bf16.mxu0 0
          %2271 = vmatpush1.bf16.msra.mxu0 0
          %2272 = vmatprep.mubr.bf16.mxu0 0
          %2273 = vmatmul.mubr.bf16.gmra.mrb[0].mxu0 %v2168
          %v2274 = vpop.f32.mrb[0].mxu0
          %v2275 = vadd.f32 %v2190, %v2274
          %v2276 = vpop.f32.mrb[0].mxu0
          %v2277 = vpop.f32.mrb[0].mxu0
          %v2278 = vpop.f32.mrb[0].mxu0
          %2279 = vdwg.mxu0
          %v2280 = vtanh.pop %v2275
          %2281 = vst [vmem:[#allocation11] sm:$0x3] %v2280
        $region108: #{bert_forward.3} parent=83 // pred_fallthru
          _
        %s2282 = smul.u32 2, %s41
        %p2283 = scmp.lt.s32.totalorder %s2282, 1
        %s2284 = scalar_select %p2283, %s2282, 1
        %s2285 = smul.addr %s2284, 8
        %s2286 = scalar_lea.vmem %s16, %s2285
        // Predicated region
        $region109: #{bert_forward.3} parent=83 // pred_check
          %p2287 = pneg %p473
        $region110: #{bert_forward.3} parent=83 // pred_check_branch
          %2289 = sbr.rel (%p2287) target = $region112
        $region111: #{bert_forward.3} parent=83 // pred_region
          %s2290 = smul.u32 2, %s41
        $region112: #{bert_forward.3} parent=83 // pred_fallthru
          _
        // Predicated region
        $region113: #{bert_forward.3} parent=83 // pred_check
          %p2291 = pneg %p499
        $region114: #{bert_forward.3} parent=83 // pred_check_branch
          %2293 = sbr.rel (%p2291) target = $region116
        $region115: #{bert_forward.3} parent=83 // pred_region
          %s2295 = ssub.s32 32, 32
          %2296 = vsyncadd [#allocation5], %s2295
          %s2297 = smul.addr %s41, 32
          %s2298 = scalar_lea.hbm %s17, %s2297
          %s2300 = sshll.u32 [#allocation11], 4
          %s2301 = int_to_ptr.vmem [resolvable:$true] %s2300
          %2303 = dma.vmem_to_hbm [thread:$0]  %s2301, 32, %s2298, [#allocation5]
        $region116: #{bert_forward.3} parent=83 // pred_fallthru
          _
        // Predicated region
        $region117: #{bert_forward.3} parent=83 // pred_check
          %p2304 = pneg %p473
        $region118: #{bert_forward.3} parent=83 // pred_check_branch
          %2306 = sbr.rel (%p2304) target = $region120
        $region119: #{bert_forward.3} parent=83 // pred_region
          %s2307 = smul.u32 2, %s41
          %p2308 = scmp.lt.s32.totalorder %s2307, 1
          %s2309 = scalar_select %p2308, %s2307, 1
          %s2310 = smul.addr %s2309, 8
          %s2311 = scalar_lea.vmem %s16, %s2310
        $region120: #{bert_forward.3} parent=83 // pred_fallthru
          _
        // Predicated region
        $region121: #{bert_forward.3} parent=83 // pred_check
          %p2312 = pneg %p499
        $region122: #{bert_forward.3} parent=83 // pred_check_branch
          %2314 = sbr.rel (%p2312) target = $region124
        $region123: #{bert_forward.3} parent=83 // pred_region
          %2315 = dma.done [#allocation5], 32
        $region124: #{bert_forward.3} parent=83 // pred_fallthru
          _
      $region84: #{bert_forward.3} parent=5 // pred_fallthru
        _
      %p2316 = scmp.le.s32.totalorder 2, %s32
      // Predicated region
      $region125: #{bert_forward.3} parent=5 // pred_check
        %p2317 = pneg %p2316
      $region126: #{bert_forward.3} parent=5 // pred_check_branch
        %2319 = sbr.rel (%p2317) target = $region128
      $region127: #{bert_forward.3} parent=5 // pred_region
        %s2320 = ssub.s32 %s32, 2
      $region128: #{bert_forward.3} parent=5 // pred_fallthru
        _
    $region6: #{bert_forward.3} parent=1 // loop_footer
      %s36 = sadd.s32 1, %s32
    $region7: #{bert_forward.3} parent=1 // loop_footer_branch
      %31 = sbr.rel target = $region3
    $region8: #{bert_forward.3} parent=1 // loop_exit
      _
    %2321 = vsyncpa [#allocation4], 1
    %s2322 = scalar_lea.sflag [#allocation4], 1
    %2323 = vsyncpa %s2322, 1
    %2324 = vsyncpa [#allocation7], 1
    %s2325 = scalar_lea.sflag [#allocation7], 1
    %2326 = vsyncpa %s2325, 1
    %2327 = vsyncpa [#allocation10], 1
    %2328 = vsyncpa [#allocation5], 1
    %s2329 = scalar_lea.sflag [#allocation5], 1
    %2330 = vsyncpa %s2329, 1

</llo_original>
